<compile_context>
chip_gen: v7x
topology: tpu7x:2x2x1
jax: 0.10.0
libtpu: 0.0.40
codegen_flags: <defaults>
</compile_context>

<pallas_src>
import math

import jax
import jax.numpy as jnp
from jax.experimental import pallas as pl
from jax.experimental.pallas import tpu as pltpu

EPS = 1e-5

# Row indices into the f32 small-parameter slab (one (1, W) row per parameter;
# D-wide params live in lanes [0:D], F-wide params in lanes [0:F]).
(ROW_E_BQ, ROW_E_BK, ROW_E_BV, ROW_E_BO, ROW_E_B2,
 ROW_E_G0, ROW_E_BE0, ROW_E_G1, ROW_E_BE1, ROW_E_B1,
 ROW_S_BQ, ROW_S_BK, ROW_S_BV, ROW_S_BO,
 ROW_C_BQ, ROW_C_BK, ROW_C_BV, ROW_C_BO, ROW_D_B2,
 ROW_D_G0, ROW_D_BE0, ROW_D_G1, ROW_D_BE1, ROW_D_G2, ROW_D_BE2,
 ROW_D_B1) = range(26)
N_SMALL_ROWS = 26


# ---------------------------------------------------------------------------
# fused encoder+decoder kernel (single grid step; everything resident in VMEM)
# ---------------------------------------------------------------------------
def _encoder_decoder_kernel(enc_in_ref, dec_in_ref,
                            we_ref, we2_ref, wd_ref, wd2_ref, sp_ref,
                            out_ref):
    B, S, D = enc_in_ref.shape
    T = dec_in_ref.shape[1]
    F = we2_ref.shape[0]
    scale = 1.0 / math.sqrt(D)

    def rowd(i):          # (1, D) f32 parameter row (128-aligned lane slice)
        return sp_ref[i:i + 1, :D]

    def rowf(i):          # (1, F) f32 parameter row
        return sp_ref[i:i + 1, :F]

    def mm(x2, w):        # bf16 MXU matmul, f32 accumulation
        return jnp.dot(x2.astype(jnp.bfloat16), w,
                       preferred_element_type=jnp.float32)

    def layer_norm(x2, g, b):     # x2: (M, D); g/b: (1, D)
        mean = jnp.mean(x2, axis=-1, keepdims=True)
        xc = x2 - mean
        var = jnp.mean(xc * xc, axis=-1, keepdims=True)
        return xc * jax.lax.rsqrt(var + EPS) * g + b

    def attn(q2, k2, v2, nq, nk):
        # q2: (B*nq, D), k2/v2: (B*nk, D)  -> context (B*nq, D)
        q3 = q2.reshape(B, nq, D)
        k3 = k2.reshape(B, nk, D)
        v3 = v2.reshape(B, nk, D)
        s = jnp.einsum("bqd,bkd->bqk", q3, k3,
                       preferred_element_type=jnp.float32) * scale
        s = s - jnp.max(s, axis=-1, keepdims=True)
        p = jnp.exp(s)
        p = p * pl.reciprocal(jnp.sum(p, axis=-1, keepdims=True), approx=True)
        ctx = jnp.einsum("bqk,bkd->bqd", p, v3,
                         preferred_element_type=jnp.float32)
        return ctx.reshape(B * nq, D)

    # ---------------- encoder layer ----------------
    x = enc_in_ref[...].reshape(B * S, D).astype(jnp.float32)
    qkv = mm(x, we_ref[:, 0:3 * D])                        # fused QKV projection
    q = qkv[:, 0:D] + rowd(ROW_E_BQ)
    k = qkv[:, D:2 * D] + rowd(ROW_E_BK)
    v = qkv[:, 2 * D:3 * D] + rowd(ROW_E_BV)
    a = mm(attn(q, k, v, S, S), we_ref[:, 3 * D:4 * D]) + rowd(ROW_E_BO)
    x = layer_norm(x + a, rowd(ROW_E_G0), rowd(ROW_E_BE0))
    h = jnp.maximum(mm(x, we_ref[:, 4 * D:4 * D + F]) + rowf(ROW_E_B1), 0.0)
    f = mm(h, we2_ref[...]) + rowd(ROW_E_B2)
    enc_out = layer_norm(x + f, rowd(ROW_E_G1), rowd(ROW_E_BE1))   # stays in VMEM/vregs

    # ---------------- decoder layer ----------------
    # TODO(synk): no causal mask in decoder self-attention (matches the provided reference).
    y = dec_in_ref[...].reshape(B * T, D).astype(jnp.float32)
    qkv = mm(y, wd_ref[:, 0:3 * D])                        # fused self-attn QKV
    q = qkv[:, 0:D] + rowd(ROW_S_BQ)
    k = qkv[:, D:2 * D] + rowd(ROW_S_BK)
    v = qkv[:, 2 * D:3 * D] + rowd(ROW_S_BV)
    a = mm(attn(q, k, v, T, T), wd_ref[:, 3 * D:4 * D]) + rowd(ROW_S_BO)
    y = layer_norm(y + a, rowd(ROW_D_G0), rowd(ROW_D_BE0))

    q = mm(y, wd_ref[:, 4 * D:5 * D]) + rowd(ROW_C_BQ)     # cross-attn: Q from decoder
    kv = mm(enc_out, wd_ref[:, 5 * D:7 * D])               # fused K/V from encoder output
    k = kv[:, 0:D] + rowd(ROW_C_BK)
    v = kv[:, D:2 * D] + rowd(ROW_C_BV)
    c = mm(attn(q, k, v, T, S), wd_ref[:, 7 * D:8 * D]) + rowd(ROW_C_BO)
    y = layer_norm(y + c, rowd(ROW_D_G1), rowd(ROW_D_BE1))

    h = jnp.maximum(mm(y, wd_ref[:, 8 * D:8 * D + F]) + rowf(ROW_D_B1), 0.0)
    f = mm(h, wd2_ref[...]) + rowd(ROW_D_B2)
    out = layer_norm(y + f, rowd(ROW_D_G2), rowd(ROW_D_BE2))
    out_ref[...] = out.reshape(B, T, D).astype(out_ref.dtype)


# ---------------------------------------------------------------------------
# one-time parameter packing (call ONCE at init, outside the per-call jit)
# ---------------------------------------------------------------------------
def pack_params(enc_params, dec_params):
    """Build the bf16 weight slabs + f32 small-parameter slab the kernel consumes."""
    D = enc_params["wq"].shape[0]
    F = enc_params["w1"].shape[1]
    assert D % 128 == 0 and F % 128 == 0, "lane-dense dims (multiples of 128) required"
    W = max(D, F)

    def row(v):
        v = jnp.asarray(v, jnp.float32).reshape(1, -1)
        return jnp.pad(v, ((0, 0), (0, W - v.shape[1])))

    w_enc = jnp.concatenate(
        [enc_params["wq"], enc_params["wk"], enc_params["wv"],
         enc_params["wo"], enc_params["w1"]], axis=1).astype(jnp.bfloat16)
    w_dec = jnp.concatenate(
        [dec_params["self_wq"], dec_params["self_wk"], dec_params["self_wv"],
         dec_params["self_wo"],
         dec_params["cross_wq"], dec_params["cross_wk"], dec_params["cross_wv"],
         dec_params["cross_wo"], dec_params["w1"]], axis=1).astype(jnp.bfloat16)

    small = jnp.concatenate([
        row(enc_params["bq"]), row(enc_params["bk"]), row(enc_params["bv"]),
        row(enc_params["bo"]), row(enc_params["b2"]),
        row(enc_params["ln_g"][0]), row(enc_params["ln_b"][0]),
        row(enc_params["ln_g"][1]), row(enc_params["ln_b"][1]),
        row(enc_params["b1"]),
        row(dec_params["self_bq"]), row(dec_params["self_bk"]),
        row(dec_params["self_bv"]), row(dec_params["self_bo"]),
        row(dec_params["cross_bq"]), row(dec_params["cross_bk"]),
        row(dec_params["cross_bv"]), row(dec_params["cross_bo"]),
        row(dec_params["b2"]),
        row(dec_params["ln_g"][0]), row(dec_params["ln_b"][0]),
        row(dec_params["ln_g"][1]), row(dec_params["ln_b"][1]),
        row(dec_params["ln_g"][2]), row(dec_params["ln_b"][2]),
        row(dec_params["b1"]),
    ], axis=0)
    assert small.shape == (N_SMALL_ROWS, W)

    return {
        "w_enc": w_enc,                                     # (D, 3D+D+F) bf16
        "w2_enc": enc_params["w2"].astype(jnp.bfloat16),    # (F, D)      bf16
        "w_dec": w_dec,                                     # (D, 8D+F)   bf16
        "w2_dec": dec_params["w2"].astype(jnp.bfloat16),    # (F, D)      bf16
        "small": small,                                     # (26, W)     f32
    }


# ---------------------------------------------------------------------------
# jitted per-call wrapper (no repacking here — just the pallas_call)
# ---------------------------------------------------------------------------
@jax.jit
def encoder_decoder_model(enc_input, dec_input, packed):
    # forward(enc_input, dec_input): enc_output = encoder(enc_input)
    #                                return decoder(dec_input, enc_output)
    B, S, D = enc_input.shape
    T = dec_input.shape[1]
    F = packed["w2_enc"].shape[0]

    args = (enc_input, dec_input, packed["w_enc"], packed["w2_enc"],
            packed["w_dec"], packed["w2_dec"], packed["small"])

    def _full(a):
        nd = a.ndim
        return pl.BlockSpec(a.shape, lambda i, _nd=nd: (0,) * _nd)

    # Advisory cost estimate (matmul flops + softmax transcendentals + bytes moved).
    enc_flops = 2 * B * S * D * (3 * D + D + 2 * F) + 4 * B * S * S * D
    dec_flops = (2 * B * T * D * (3 * D + D + D + D + 2 * F)
                 + 2 * B * S * D * 2 * D
                 + 4 * B * T * T * D + 4 * B * T * S * D)
    transcendentals = B * (S * S + T * T + T * S)
    bytes_accessed = (sum(int(a.size) * a.dtype.itemsize for a in args)
                      + B * T * D * 4)

    # NOTE: grid=(1,) -> single step; the few-hundred-KiB operands are double-buffered
    # by default which is harmless here (<2 MiB total).  If B*S grows, switch to a
    # leading "parallel" batch grid axis (v7x megacore) and tile the reduction dims.
    return pl.pallas_call(
        _encoder_decoder_kernel,
        out_shape=jax.ShapeDtypeStruct((B, T, D), jnp.float32),
        grid=(1,),
        in_specs=[_full(a) for a in args],
        out_specs=pl.BlockSpec((B, T, D), lambda i: (0, 0, 0)),
        compiler_params=pltpu.CompilerParams(
            dimension_semantics=("arbitrary",),
            vmem_limit_bytes=32 * 1024 * 1024),
        cost_estimate=pl.CostEstimate(
            flops=int(enc_flops + dec_flops),
            transcendentals=int(transcendentals),
            bytes_accessed=int(bytes_accessed)),
    )(*args)


# ---------------------------------------------------------------------------
# pure-JAX f32 reference (mirrors the PyTorch semantics)
# ---------------------------------------------------------------------------
def _ref_attn(xq, xkv, wq, bq, wk, bk, wv, bv, wo, bo):
    d = xq.shape[-1]
    q = xq @ wq + bq
    k = xkv @ wk + bk
    v = xkv @ wv + bv
    p = jax.nn.softmax((q @ k.T) / math.sqrt(d), axis=-1)
    return (p @ v) @ wo + bo


def _ref_ln(x, g, b):
    m = x.mean(-1, keepdims=True)
    v = ((x - m) ** 2).mean(-1, keepdims=True)
    return (x - m) / jnp.sqrt(v + EPS) * g + b


def _ref_ffn(x, p):
    return jnp.maximum(x @ p["w1"] + p["b1"], 0.0) @ p["w2"] + p["b2"]


def _ref_encoder_one(x, p):
    a = _ref_attn(x, x, p["wq"], p["bq"], p["wk"], p["bk"], p["wv"], p["bv"],
                  p["wo"], p["bo"])
    x = _ref_ln(x + a, p["ln_g"][0], p["ln_b"][0])
    return _ref_ln(x + _ref_ffn(x, p), p["ln_g"][1], p["ln_b"][1])


def _ref_decoder_one(y, e, p):
    a = _ref_attn(y, y, p["self_wq"], p["self_bq"], p["self_wk"], p["self_bk"],
                  p["self_wv"], p["self_bv"], p["self_wo"], p["self_bo"])
    y = _ref_ln(y + a, p["ln_g"][0], p["ln_b"][0])
    c = _ref_attn(y, e, p["cross_wq"], p["cross_bq"], p["cross_wk"], p["cross_bk"],
                  p["cross_wv"], p["cross_bv"], p["cross_wo"], p["cross_bo"])
    y = _ref_ln(y + c, p["ln_g"][1], p["ln_b"][1])
    return _ref_ln(y + _ref_ffn(y, p), p["ln_g"][2], p["ln_b"][2])


def reference_model(enc_in, dec_in, enc_p, dec_p):
    enc_out = jax.vmap(lambda x: _ref_encoder_one(x, enc_p))(enc_in)
    return jax.vmap(lambda y, e: _ref_decoder_one(y, e, dec_p))(dec_in, enc_out)


# ---------------------------------------------------------------------------
# parameter construction (deterministic)
# ---------------------------------------------------------------------------
def make_params(key, d_model, d_ff):
    keys = iter(jax.random.split(key, 48))
    s_d = 1.0 / math.sqrt(d_model)
    s_f = 1.0 / math.sqrt(d_ff)

    def _attn_params(prefix):
        p = {}
        for name in ("q", "k", "v", "o"):
            p[prefix + "w" + name] = (
                jax.random.normal(next(keys), (d_model, d_model), jnp.float32) * s_d)
            p[prefix + "b" + name] = (
                jax.random.normal(next(keys), (d_model,), jnp.float32) * 0.02)
        return p

    def _ffn_params():
        return {
            "w1": jax.random.normal(next(keys), (d_model, d_ff), jnp.float32) * s_d,
            "b1": jax.random.normal(next(keys), (d_ff,), jnp.float32) * 0.02,
            "w2": jax.random.normal(next(keys), (d_ff, d_model), jnp.float32) * s_f,
            "b2": jax.random.normal(next(keys), (d_model,), jnp.float32) * 0.02,
        }

    def _ln_params(n):
        return {
            "ln_g": 1.0 + 0.1 * jax.random.normal(next(keys), (n, d_model), jnp.float32),
            "ln_b": 0.1 * jax.random.normal(next(keys), (n, d_model), jnp.float32),
        }

    enc = {}
    enc.update(_attn_params(""))
    enc.update(_ffn_params())
    enc.update(_ln_params(2))

    dec = {}
    dec.update(_attn_params("self_"))
    dec.update(_attn_params("cross_"))
    dec.update(_ffn_params())
    dec.update(_ln_params(3))
    return enc, dec


if __name__ == "__main__":
    B, S_ENC, S_DEC = 2, 8, 8
    D_MODEL, D_FF = 128, 256        # lane-dense (multiples of 128)

    key = jax.random.PRNGKey(0)
    k_enc, k_dec, k_par = jax.random.split(key, 3)

    enc_input = jax.random.normal(k_enc, (B, S_ENC, D_MODEL), jnp.float32)
    dec_input = jax.random.normal(k_dec, (B, S_DEC, D_MODEL), jnp.float32)
    enc_params, dec_params = make_params(k_par, D_MODEL, D_FF)

    # One-time packing (amortized over all subsequent calls).
    packed = jax.block_until_ready(pack_params(enc_params, dec_params))

    out = encoder_decoder_model(enc_input, dec_input, packed)
    out = jax.block_until_ready(out)

    ref = reference_model(enc_input, dec_input, enc_params, dec_params)
    assert out.shape == (B, S_DEC, D_MODEL), out.shape
    # bf16 weight matmuls + approx reciprocal in the kernel -> loose tolerance vs f32 ref
    max_err = float(jnp.max(jnp.abs(out - ref)))
    assert jnp.allclose(out, ref, atol=5e-2, rtol=5e-2), f"mismatch, max_err={max_err}"

    print("KERNEL_OK")
</pallas_src>

<mosaic_0001>
module attributes {stable_mosaic.version = 11 : i64} {
  func.func @_encoder_decoder_kernel(%arg0: i32, %arg1: memref<2x8x128xf32, #tpu.memory_space<vmem>>, %arg2: memref<2x8x128xf32, #tpu.memory_space<vmem>>, %arg3: memref<128x768xbf16, #tpu.memory_space<vmem>>, %arg4: memref<256x128xbf16, #tpu.memory_space<vmem>>, %arg5: memref<128x1280xbf16, #tpu.memory_space<vmem>>, %arg6: memref<256x128xbf16, #tpu.memory_space<vmem>>, %arg7: memref<26x256xf32, #tpu.memory_space<vmem>>, %arg8: memref<2x8x128xf32, #tpu.memory_space<vmem>>) attributes {dimension_semantics = [#tpu.dimension_semantics<arbitrary>], iteration_bounds = array<i64: 1>, scalar_prefetch = 0 : i64, scratch_operands = 0 : i64, tpu.core_type = #tpu.core_type<tc>, window_params = [{pipeline_mode = #tpu.pipeline_mode<synchronous>, transform_indices = @transform_0, window_bounds = array<i64: 2, 8, 128>}, {pipeline_mode = #tpu.pipeline_mode<synchronous>, transform_indices = @transform_1, window_bounds = array<i64: 2, 8, 128>}, {pipeline_mode = #tpu.pipeline_mode<synchronous>, transform_indices = @transform_2, window_bounds = array<i64: 128, 768>}, {pipeline_mode = #tpu.pipeline_mode<synchronous>, transform_indices = @transform_3, window_bounds = array<i64: 256, 128>}, {pipeline_mode = #tpu.pipeline_mode<synchronous>, transform_indices = @transform_4, window_bounds = array<i64: 128, 1280>}, {pipeline_mode = #tpu.pipeline_mode<synchronous>, transform_indices = @transform_5, window_bounds = array<i64: 256, 128>}, {pipeline_mode = #tpu.pipeline_mode<synchronous>, transform_indices = @transform_6, window_bounds = array<i64: 26, 256>}, {pipeline_mode = #tpu.pipeline_mode<synchronous>, transform_indices = @transform_7, window_bounds = array<i64: 2, 8, 128>}]} {
    %c0 = arith.constant 0 : index
    %c0_0 = arith.constant 0 : index
    %c0_1 = arith.constant 0 : index
    %0 = vector.load %arg1[%c0, %c0_0, %c0_1] : memref<2x8x128xf32, #tpu.memory_space<vmem>>, vector<2x8x128xf32>
    %1 = vector.shape_cast %0 : vector<2x8x128xf32> to vector<16x128xf32>
    %c0_2 = arith.constant 0 : index
    %c0_3 = arith.constant 0 : index
    %2 = vector.load %arg3[%c0_2, %c0_3] : memref<128x768xbf16, #tpu.memory_space<vmem>>, vector<128x384xbf16>
    %3 = arith.truncf %1 : vector<16x128xf32> to vector<16x128xbf16>
    %cst = arith.constant dense<0.000000e+00> : vector<16x384xf32>
    %4 = tpu.matmul %3, %2, %cst {dimension_numbers = #tpu.dot_dimension_numbers<[1], [0], [0], [1], [0, 0, 1, 1], [], []>} : vector<16x128xbf16>, vector<128x384xbf16>, vector<16x384xf32> -> vector<16x384xf32>
    %5 = vector.extract_strided_slice %4 {offsets = [0, 0], sizes = [16, 128], strides = [1, 1]} : vector<16x384xf32> to vector<16x128xf32>
    %c0_4 = arith.constant 0 : index
    %c0_5 = arith.constant 0 : index
    %6 = vector.load %arg7[%c0_4, %c0_5] : memref<26x256xf32, #tpu.memory_space<vmem>>, vector<1x128xf32>
    %7 = vector.broadcast %6 : vector<1x128xf32> to vector<16x128xf32>
    %8 = arith.addf %5, %7 : vector<16x128xf32>
    %9 = vector.extract_strided_slice %4 {offsets = [0, 128], sizes = [16, 128], strides = [1, 1]} : vector<16x384xf32> to vector<16x128xf32>
    %c1 = arith.constant 1 : index
    %c0_6 = arith.constant 0 : index
    %10 = vector.load %arg7[%c1, %c0_6] : memref<26x256xf32, #tpu.memory_space<vmem>>, vector<1x128xf32>
    %11 = vector.broadcast %10 : vector<1x128xf32> to vector<16x128xf32>
    %12 = arith.addf %9, %11 : vector<16x128xf32>
    %13 = vector.extract_strided_slice %4 {offsets = [0, 256], sizes = [16, 128], strides = [1, 1]} : vector<16x384xf32> to vector<16x128xf32>
    %c2 = arith.constant 2 : index
    %c0_7 = arith.constant 0 : index
    %14 = vector.load %arg7[%c2, %c0_7] : memref<26x256xf32, #tpu.memory_space<vmem>>, vector<1x128xf32>
    %15 = vector.broadcast %14 : vector<1x128xf32> to vector<16x128xf32>
    %16 = arith.addf %13, %15 : vector<16x128xf32>
    %17 = vector.shape_cast %8 : vector<16x128xf32> to vector<2x8x128xf32>
    %18 = vector.shape_cast %12 : vector<16x128xf32> to vector<2x8x128xf32>
    %19 = vector.shape_cast %16 : vector<16x128xf32> to vector<2x8x128xf32>
    "tpu.trace_start"() <{level = 10 : i32, message = "bqd,bkd->bqk"}> : () -> ()
    %cst_8 = arith.constant dense<0.000000e+00> : vector<2x8x8xf32>
    %20 = tpu.matmul %17, %18, %cst_8 {dimension_numbers = #tpu.dot_dimension_numbers<[2], [2], [1], [1], [0, 0, 0, 1, 1, 1], [0], [0]>} : vector<2x8x128xf32>, vector<2x8x128xf32>, vector<2x8x8xf32> -> vector<2x8x8xf32>
    "tpu.trace_stop"() : () -> ()
    %cst_9 = arith.constant 0.0883883461 : f32
    %21 = vector.broadcast %cst_9 : f32 to vector<2x8x8xf32>
    %22 = arith.mulf %20, %21 : vector<2x8x8xf32>
    %cst_10 = arith.constant dense<0xFF800000> : vector<2x8xf32>
    %23 = vector.multi_reduction <maximumf>, %22, %cst_10 [2] : vector<2x8x8xf32> to vector<2x8xf32>
    %24 = vector.shape_cast %23 : vector<2x8xf32> to vector<2x8x1xf32>
    %25 = vector.broadcast %24 : vector<2x8x1xf32> to vector<2x8x8xf32>
    %26 = arith.subf %22, %25 : vector<2x8x8xf32>
    %27 = math.exp %26 : vector<2x8x8xf32>
    %cst_11 = arith.constant dense<0.000000e+00> : vector<2x8xf32>
    %28 = vector.multi_reduction <add>, %27, %cst_11 [2] : vector<2x8x8xf32> to vector<2x8xf32>
    %29 = vector.shape_cast %28 : vector<2x8xf32> to vector<2x8x1xf32>
    %30 = tpu.reciprocal %29 {approx = true} : vector<2x8x1xf32> -> vector<2x8x1xf32>
    %31 = vector.broadcast %30 : vector<2x8x1xf32> to vector<2x8x8xf32>
    %32 = arith.mulf %27, %31 : vector<2x8x8xf32>
    "tpu.trace_start"() <{level = 10 : i32, message = "bqk,bkd->bqd"}> : () -> ()
    %cst_12 = arith.constant dense<0.000000e+00> : vector<2x8x128xf32>
    %33 = tpu.matmul %32, %19, %cst_12 {dimension_numbers = #tpu.dot_dimension_numbers<[2], [1], [1], [2], [0, 0, 0, 1, 1, 2], [0], [0]>} : vector<2x8x8xf32>, vector<2x8x128xf32>, vector<2x8x128xf32> -> vector<2x8x128xf32>
    "tpu.trace_stop"() : () -> ()
    %34 = vector.shape_cast %33 : vector<2x8x128xf32> to vector<16x128xf32>
    %c0_13 = arith.constant 0 : index
    %c384 = arith.constant 384 : index
    %35 = vector.load %arg3[%c0_13, %c384] : memref<128x768xbf16, #tpu.memory_space<vmem>>, vector<128x128xbf16>
    %36 = arith.truncf %34 : vector<16x128xf32> to vector<16x128xbf16>
    %cst_14 = arith.constant dense<0.000000e+00> : vector<16x128xf32>
    %37 = tpu.matmul %36, %35, %cst_14 {dimension_numbers = #tpu.dot_dimension_numbers<[1], [0], [0], [1], [0, 0, 1, 1], [], []>} : vector<16x128xbf16>, vector<128x128xbf16>, vector<16x128xf32> -> vector<16x128xf32>
    %c3 = arith.constant 3 : index
    %c0_15 = arith.constant 0 : index
    %38 = vector.load %arg7[%c3, %c0_15] : memref<26x256xf32, #tpu.memory_space<vmem>>, vector<1x128xf32>
    %39 = vector.broadcast %38 : vector<1x128xf32> to vector<16x128xf32>
    %40 = arith.addf %37, %39 : vector<16x128xf32>
    %41 = arith.addf %1, %40 : vector<16x128xf32>
    %c5 = arith.constant 5 : index
    %c0_16 = arith.constant 0 : index
    %42 = vector.load %arg7[%c5, %c0_16] : memref<26x256xf32, #tpu.memory_space<vmem>>, vector<1x128xf32>
    %c6 = arith.constant 6 : index
    %c0_17 = arith.constant 0 : index
    %43 = vector.load %arg7[%c6, %c0_17] : memref<26x256xf32, #tpu.memory_space<vmem>>, vector<1x128xf32>
    %cst_18 = arith.constant dense<0.000000e+00> : vector<16xf32>
    %44 = vector.multi_reduction <add>, %41, %cst_18 [1] : vector<16x128xf32> to vector<16xf32>
    %45 = vector.shape_cast %44 : vector<16xf32> to vector<16x1xf32>
    %cst_19 = arith.constant 1.280000e+02 : f32
    %46 = vector.broadcast %cst_19 : f32 to vector<16x1xf32>
    %47 = arith.divf %45, %46 : vector<16x1xf32>
    %48 = vector.broadcast %47 : vector<16x1xf32> to vector<16x128xf32>
    %49 = arith.subf %41, %48 : vector<16x128xf32>
    %50 = arith.mulf %49, %49 : vector<16x128xf32>
    %cst_20 = arith.constant dense<0.000000e+00> : vector<16xf32>
    %51 = vector.multi_reduction <add>, %50, %cst_20 [1] : vector<16x128xf32> to vector<16xf32>
    %52 = vector.shape_cast %51 : vector<16xf32> to vector<16x1xf32>
    %cst_21 = arith.constant 1.280000e+02 : f32
    %53 = vector.broadcast %cst_21 : f32 to vector<16x1xf32>
    %54 = arith.divf %52, %53 : vector<16x1xf32>
    %cst_22 = arith.constant 9.99999974E-6 : f32
    %55 = vector.broadcast %cst_22 : f32 to vector<16x1xf32>
    %56 = arith.addf %54, %55 : vector<16x1xf32>
    %57 = math.rsqrt %56 : vector<16x1xf32>
    %58 = vector.broadcast %57 : vector<16x1xf32> to vector<16x128xf32>
    %59 = arith.mulf %49, %58 : vector<16x128xf32>
    %60 = vector.broadcast %42 : vector<1x128xf32> to vector<16x128xf32>
    %61 = arith.mulf %59, %60 : vector<16x128xf32>
    %62 = vector.broadcast %43 : vector<1x128xf32> to vector<16x128xf32>
    %63 = arith.addf %61, %62 : vector<16x128xf32>
    %c0_23 = arith.constant 0 : index
    %c512 = arith.constant 512 : index
    %64 = vector.load %arg3[%c0_23, %c512] : memref<128x768xbf16, #tpu.memory_space<vmem>>, vector<128x256xbf16>
    %65 = arith.truncf %63 : vector<16x128xf32> to vector<16x128xbf16>
    %cst_24 = arith.constant dense<0.000000e+00> : vector<16x256xf32>
    %66 = tpu.matmul %65, %64, %cst_24 {dimension_numbers = #tpu.dot_dimension_numbers<[1], [0], [0], [1], [0, 0, 1, 1], [], []>} : vector<16x128xbf16>, vector<128x256xbf16>, vector<16x256xf32> -> vector<16x256xf32>
    %c9 = arith.constant 9 : index
    %c0_25 = arith.constant 0 : index
    %67 = vector.load %arg7[%c9, %c0_25] : memref<26x256xf32, #tpu.memory_space<vmem>>, vector<1x256xf32>
    %68 = vector.broadcast %67 : vector<1x256xf32> to vector<16x256xf32>
    %69 = arith.addf %66, %68 : vector<16x256xf32>
    %cst_26 = arith.constant 0.000000e+00 : f32
    %70 = vector.broadcast %cst_26 : f32 to vector<16x256xf32>
    %71 = arith.maximumf %69, %70 : vector<16x256xf32>
    %c0_27 = arith.constant 0 : index
    %c0_28 = arith.constant 0 : index
    %72 = vector.load %arg4[%c0_27, %c0_28] : memref<256x128xbf16, #tpu.memory_space<vmem>>, vector<256x128xbf16>
    %73 = arith.truncf %71 : vector<16x256xf32> to vector<16x256xbf16>
    %cst_29 = arith.constant dense<0.000000e+00> : vector<16x128xf32>
    %74 = tpu.matmul %73, %72, %cst_29 {dimension_numbers = #tpu.dot_dimension_numbers<[1], [0], [0], [1], [0, 0, 1, 1], [], []>} : vector<16x256xbf16>, vector<256x128xbf16>, vector<16x128xf32> -> vector<16x128xf32>
    %c4 = arith.constant 4 : index
    %c0_30 = arith.constant 0 : index
    %75 = vector.load %arg7[%c4, %c0_30] : memref<26x256xf32, #tpu.memory_space<vmem>>, vector<1x128xf32>
    %76 = vector.broadcast %75 : vector<1x128xf32> to vector<16x128xf32>
    %77 = arith.addf %74, %76 : vector<16x128xf32>
    %78 = arith.addf %63, %77 : vector<16x128xf32>
    %c7 = arith.constant 7 : index
    %c0_31 = arith.constant 0 : index
    %79 = vector.load %arg7[%c7, %c0_31] : memref<26x256xf32, #tpu.memory_space<vmem>>, vector<1x128xf32>
    %c8 = arith.constant 8 : index
    %c0_32 = arith.constant 0 : index
    %80 = vector.load %arg7[%c8, %c0_32] : memref<26x256xf32, #tpu.memory_space<vmem>>, vector<1x128xf32>
    %cst_33 = arith.constant dense<0.000000e+00> : vector<16xf32>
    %81 = vector.multi_reduction <add>, %78, %cst_33 [1] : vector<16x128xf32> to vector<16xf32>
    %82 = vector.shape_cast %81 : vector<16xf32> to vector<16x1xf32>
    %cst_34 = arith.constant 1.280000e+02 : f32
    %83 = vector.broadcast %cst_34 : f32 to vector<16x1xf32>
    %84 = arith.divf %82, %83 : vector<16x1xf32>
    %85 = vector.broadcast %84 : vector<16x1xf32> to vector<16x128xf32>
    %86 = arith.subf %78, %85 : vector<16x128xf32>
    %87 = arith.mulf %86, %86 : vector<16x128xf32>
    %cst_35 = arith.constant dense<0.000000e+00> : vector<16xf32>
    %88 = vector.multi_reduction <add>, %87, %cst_35 [1] : vector<16x128xf32> to vector<16xf32>
    %89 = vector.shape_cast %88 : vector<16xf32> to vector<16x1xf32>
    %cst_36 = arith.constant 1.280000e+02 : f32
    %90 = vector.broadcast %cst_36 : f32 to vector<16x1xf32>
    %91 = arith.divf %89, %90 : vector<16x1xf32>
    %cst_37 = arith.constant 9.99999974E-6 : f32
    %92 = vector.broadcast %cst_37 : f32 to vector<16x1xf32>
    %93 = arith.addf %91, %92 : vector<16x1xf32>
    %94 = math.rsqrt %93 : vector<16x1xf32>
    %95 = vector.broadcast %94 : vector<16x1xf32> to vector<16x128xf32>
    %96 = arith.mulf %86, %95 : vector<16x128xf32>
    %97 = vector.broadcast %79 : vector<1x128xf32> to vector<16x128xf32>
    %98 = arith.mulf %96, %97 : vector<16x128xf32>
    %99 = vector.broadcast %80 : vector<1x128xf32> to vector<16x128xf32>
    %100 = arith.addf %98, %99 : vector<16x128xf32>
    %c0_38 = arith.constant 0 : index
    %c0_39 = arith.constant 0 : index
    %c0_40 = arith.constant 0 : index
    %101 = vector.load %arg2[%c0_38, %c0_39, %c0_40] : memref<2x8x128xf32, #tpu.memory_space<vmem>>, vector<2x8x128xf32>
    %102 = vector.shape_cast %101 : vector<2x8x128xf32> to vector<16x128xf32>
    %c0_41 = arith.constant 0 : index
    %c0_42 = arith.constant 0 : index
    %103 = vector.load %arg5[%c0_41, %c0_42] : memref<128x1280xbf16, #tpu.memory_space<vmem>>, vector<128x384xbf16>
    %104 = arith.truncf %102 : vector<16x128xf32> to vector<16x128xbf16>
    %cst_43 = arith.constant dense<0.000000e+00> : vector<16x384xf32>
    %105 = tpu.matmul %104, %103, %cst_43 {dimension_numbers = #tpu.dot_dimension_numbers<[1], [0], [0], [1], [0, 0, 1, 1], [], []>} : vector<16x128xbf16>, vector<128x384xbf16>, vector<16x384xf32> -> vector<16x384xf32>
    %106 = vector.extract_strided_slice %105 {offsets = [0, 0], sizes = [16, 128], strides = [1, 1]} : vector<16x384xf32> to vector<16x128xf32>
    %c10 = arith.constant 10 : index
    %c0_44 = arith.constant 0 : index
    %107 = vector.load %arg7[%c10, %c0_44] : memref<26x256xf32, #tpu.memory_space<vmem>>, vector<1x128xf32>
    %108 = vector.broadcast %107 : vector<1x128xf32> to vector<16x128xf32>
    %109 = arith.addf %106, %108 : vector<16x128xf32>
    %110 = vector.extract_strided_slice %105 {offsets = [0, 128], sizes = [16, 128], strides = [1, 1]} : vector<16x384xf32> to vector<16x128xf32>
    %c11 = arith.constant 11 : index
    %c0_45 = arith.constant 0 : index
    %111 = vector.load %arg7[%c11, %c0_45] : memref<26x256xf32, #tpu.memory_space<vmem>>, vector<1x128xf32>
    %112 = vector.broadcast %111 : vector<1x128xf32> to vector<16x128xf32>
    %113 = arith.addf %110, %112 : vector<16x128xf32>
    %114 = vector.extract_strided_slice %105 {offsets = [0, 256], sizes = [16, 128], strides = [1, 1]} : vector<16x384xf32> to vector<16x128xf32>
    %c12 = arith.constant 12 : index
    %c0_46 = arith.constant 0 : index
    %115 = vector.load %arg7[%c12, %c0_46] : memref<26x256xf32, #tpu.memory_space<vmem>>, vector<1x128xf32>
    %116 = vector.broadcast %115 : vector<1x128xf32> to vector<16x128xf32>
    %117 = arith.addf %114, %116 : vector<16x128xf32>
    %118 = vector.shape_cast %109 : vector<16x128xf32> to vector<2x8x128xf32>
    %119 = vector.shape_cast %113 : vector<16x128xf32> to vector<2x8x128xf32>
    %120 = vector.shape_cast %117 : vector<16x128xf32> to vector<2x8x128xf32>
    "tpu.trace_start"() <{level = 10 : i32, message = "bqd,bkd->bqk"}> : () -> ()
    %cst_47 = arith.constant dense<0.000000e+00> : vector<2x8x8xf32>
    %121 = tpu.matmul %118, %119, %cst_47 {dimension_numbers = #tpu.dot_dimension_numbers<[2], [2], [1], [1], [0, 0, 0, 1, 1, 1], [0], [0]>} : vector<2x8x128xf32>, vector<2x8x128xf32>, vector<2x8x8xf32> -> vector<2x8x8xf32>
    "tpu.trace_stop"() : () -> ()
    %cst_48 = arith.constant 0.0883883461 : f32
    %122 = vector.broadcast %cst_48 : f32 to vector<2x8x8xf32>
    %123 = arith.mulf %121, %122 : vector<2x8x8xf32>
    %cst_49 = arith.constant dense<0xFF800000> : vector<2x8xf32>
    %124 = vector.multi_reduction <maximumf>, %123, %cst_49 [2] : vector<2x8x8xf32> to vector<2x8xf32>
    %125 = vector.shape_cast %124 : vector<2x8xf32> to vector<2x8x1xf32>
    %126 = vector.broadcast %125 : vector<2x8x1xf32> to vector<2x8x8xf32>
    %127 = arith.subf %123, %126 : vector<2x8x8xf32>
    %128 = math.exp %127 : vector<2x8x8xf32>
    %cst_50 = arith.constant dense<0.000000e+00> : vector<2x8xf32>
    %129 = vector.multi_reduction <add>, %128, %cst_50 [2] : vector<2x8x8xf32> to vector<2x8xf32>
    %130 = vector.shape_cast %129 : vector<2x8xf32> to vector<2x8x1xf32>
    %131 = tpu.reciprocal %130 {approx = true} : vector<2x8x1xf32> -> vector<2x8x1xf32>
    %132 = vector.broadcast %131 : vector<2x8x1xf32> to vector<2x8x8xf32>
    %133 = arith.mulf %128, %132 : vector<2x8x8xf32>
    "tpu.trace_start"() <{level = 10 : i32, message = "bqk,bkd->bqd"}> : () -> ()
    %cst_51 = arith.constant dense<0.000000e+00> : vector<2x8x128xf32>
    %134 = tpu.matmul %133, %120, %cst_51 {dimension_numbers = #tpu.dot_dimension_numbers<[2], [1], [1], [2], [0, 0, 0, 1, 1, 2], [0], [0]>} : vector<2x8x8xf32>, vector<2x8x128xf32>, vector<2x8x128xf32> -> vector<2x8x128xf32>
    "tpu.trace_stop"() : () -> ()
    %135 = vector.shape_cast %134 : vector<2x8x128xf32> to vector<16x128xf32>
    %c0_52 = arith.constant 0 : index
    %c384_53 = arith.constant 384 : index
    %136 = vector.load %arg5[%c0_52, %c384_53] : memref<128x1280xbf16, #tpu.memory_space<vmem>>, vector<128x128xbf16>
    %137 = arith.truncf %135 : vector<16x128xf32> to vector<16x128xbf16>
    %cst_54 = arith.constant dense<0.000000e+00> : vector<16x128xf32>
    %138 = tpu.matmul %137, %136, %cst_54 {dimension_numbers = #tpu.dot_dimension_numbers<[1], [0], [0], [1], [0, 0, 1, 1], [], []>} : vector<16x128xbf16>, vector<128x128xbf16>, vector<16x128xf32> -> vector<16x128xf32>
    %c13 = arith.constant 13 : index
    %c0_55 = arith.constant 0 : index
    %139 = vector.load %arg7[%c13, %c0_55] : memref<26x256xf32, #tpu.memory_space<vmem>>, vector<1x128xf32>
    %140 = vector.broadcast %139 : vector<1x128xf32> to vector<16x128xf32>
    %141 = arith.addf %138, %140 : vector<16x128xf32>
    %142 = arith.addf %102, %141 : vector<16x128xf32>
    %c19 = arith.constant 19 : index
    %c0_56 = arith.constant 0 : index
    %143 = vector.load %arg7[%c19, %c0_56] : memref<26x256xf32, #tpu.memory_space<vmem>>, vector<1x128xf32>
    %c20 = arith.constant 20 : index
    %c0_57 = arith.constant 0 : index
    %144 = vector.load %arg7[%c20, %c0_57] : memref<26x256xf32, #tpu.memory_space<vmem>>, vector<1x128xf32>
    %cst_58 = arith.constant dense<0.000000e+00> : vector<16xf32>
    %145 = vector.multi_reduction <add>, %142, %cst_58 [1] : vector<16x128xf32> to vector<16xf32>
    %146 = vector.shape_cast %145 : vector<16xf32> to vector<16x1xf32>
    %cst_59 = arith.constant 1.280000e+02 : f32
    %147 = vector.broadcast %cst_59 : f32 to vector<16x1xf32>
    %148 = arith.divf %146, %147 : vector<16x1xf32>
    %149 = vector.broadcast %148 : vector<16x1xf32> to vector<16x128xf32>
    %150 = arith.subf %142, %149 : vector<16x128xf32>
    %151 = arith.mulf %150, %150 : vector<16x128xf32>
    %cst_60 = arith.constant dense<0.000000e+00> : vector<16xf32>
    %152 = vector.multi_reduction <add>, %151, %cst_60 [1] : vector<16x128xf32> to vector<16xf32>
    %153 = vector.shape_cast %152 : vector<16xf32> to vector<16x1xf32>
    %cst_61 = arith.constant 1.280000e+02 : f32
    %154 = vector.broadcast %cst_61 : f32 to vector<16x1xf32>
    %155 = arith.divf %153, %154 : vector<16x1xf32>
    %cst_62 = arith.constant 9.99999974E-6 : f32
    %156 = vector.broadcast %cst_62 : f32 to vector<16x1xf32>
    %157 = arith.addf %155, %156 : vector<16x1xf32>
    %158 = math.rsqrt %157 : vector<16x1xf32>
    %159 = vector.broadcast %158 : vector<16x1xf32> to vector<16x128xf32>
    %160 = arith.mulf %150, %159 : vector<16x128xf32>
    %161 = vector.broadcast %143 : vector<1x128xf32> to vector<16x128xf32>
    %162 = arith.mulf %160, %161 : vector<16x128xf32>
    %163 = vector.broadcast %144 : vector<1x128xf32> to vector<16x128xf32>
    %164 = arith.addf %162, %163 : vector<16x128xf32>
    %c0_63 = arith.constant 0 : index
    %c512_64 = arith.constant 512 : index
    %165 = vector.load %arg5[%c0_63, %c512_64] : memref<128x1280xbf16, #tpu.memory_space<vmem>>, vector<128x128xbf16>
    %166 = arith.truncf %164 : vector<16x128xf32> to vector<16x128xbf16>
    %cst_65 = arith.constant dense<0.000000e+00> : vector<16x128xf32>
    %167 = tpu.matmul %166, %165, %cst_65 {dimension_numbers = #tpu.dot_dimension_numbers<[1], [0], [0], [1], [0, 0, 1, 1], [], []>} : vector<16x128xbf16>, vector<128x128xbf16>, vector<16x128xf32> -> vector<16x128xf32>
    %c14 = arith.constant 14 : index
    %c0_66 = arith.constant 0 : index
    %168 = vector.load %arg7[%c14, %c0_66] : memref<26x256xf32, #tpu.memory_space<vmem>>, vector<1x128xf32>
    %169 = vector.broadcast %168 : vector<1x128xf32> to vector<16x128xf32>
    %170 = arith.addf %167, %169 : vector<16x128xf32>
    %c0_67 = arith.constant 0 : index
    %c640 = arith.constant 640 : index
    %171 = vector.load %arg5[%c0_67, %c640] : memref<128x1280xbf16, #tpu.memory_space<vmem>>, vector<128x256xbf16>
    %172 = arith.truncf %100 : vector<16x128xf32> to vector<16x128xbf16>
    %cst_68 = arith.constant dense<0.000000e+00> : vector<16x256xf32>
    %173 = tpu.matmul %172, %171, %cst_68 {dimension_numbers = #tpu.dot_dimension_numbers<[1], [0], [0], [1], [0, 0, 1, 1], [], []>} : vector<16x128xbf16>, vector<128x256xbf16>, vector<16x256xf32> -> vector<16x256xf32>
    %174 = vector.extract_strided_slice %173 {offsets = [0, 0], sizes = [16, 128], strides = [1, 1]} : vector<16x256xf32> to vector<16x128xf32>
    %c15 = arith.constant 15 : index
    %c0_69 = arith.constant 0 : index
    %175 = vector.load %arg7[%c15, %c0_69] : memref<26x256xf32, #tpu.memory_space<vmem>>, vector<1x128xf32>
    %176 = vector.broadcast %175 : vector<1x128xf32> to vector<16x128xf32>
    %177 = arith.addf %174, %176 : vector<16x128xf32>
    %178 = vector.extract_strided_slice %173 {offsets = [0, 128], sizes = [16, 128], strides = [1, 1]} : vector<16x256xf32> to vector<16x128xf32>
    %c16 = arith.constant 16 : index
    %c0_70 = arith.constant 0 : index
    %179 = vector.load %arg7[%c16, %c0_70] : memref<26x256xf32, #tpu.memory_space<vmem>>, vector<1x128xf32>
    %180 = vector.broadcast %179 : vector<1x128xf32> to vector<16x128xf32>
    %181 = arith.addf %178, %180 : vector<16x128xf32>
    %182 = vector.shape_cast %170 : vector<16x128xf32> to vector<2x8x128xf32>
    %183 = vector.shape_cast %177 : vector<16x128xf32> to vector<2x8x128xf32>
    %184 = vector.shape_cast %181 : vector<16x128xf32> to vector<2x8x128xf32>
    "tpu.trace_start"() <{level = 10 : i32, message = "bqd,bkd->bqk"}> : () -> ()
    %cst_71 = arith.constant dense<0.000000e+00> : vector<2x8x8xf32>
    %185 = tpu.matmul %182, %183, %cst_71 {dimension_numbers = #tpu.dot_dimension_numbers<[2], [2], [1], [1], [0, 0, 0, 1, 1, 1], [0], [0]>} : vector<2x8x128xf32>, vector<2x8x128xf32>, vector<2x8x8xf32> -> vector<2x8x8xf32>
    "tpu.trace_stop"() : () -> ()
    %cst_72 = arith.constant 0.0883883461 : f32
    %186 = vector.broadcast %cst_72 : f32 to vector<2x8x8xf32>
    %187 = arith.mulf %185, %186 : vector<2x8x8xf32>
    %cst_73 = arith.constant dense<0xFF800000> : vector<2x8xf32>
    %188 = vector.multi_reduction <maximumf>, %187, %cst_73 [2] : vector<2x8x8xf32> to vector<2x8xf32>
    %189 = vector.shape_cast %188 : vector<2x8xf32> to vector<2x8x1xf32>
    %190 = vector.broadcast %189 : vector<2x8x1xf32> to vector<2x8x8xf32>
    %191 = arith.subf %187, %190 : vector<2x8x8xf32>
    %192 = math.exp %191 : vector<2x8x8xf32>
    %cst_74 = arith.constant dense<0.000000e+00> : vector<2x8xf32>
    %193 = vector.multi_reduction <add>, %192, %cst_74 [2] : vector<2x8x8xf32> to vector<2x8xf32>
    %194 = vector.shape_cast %193 : vector<2x8xf32> to vector<2x8x1xf32>
    %195 = tpu.reciprocal %194 {approx = true} : vector<2x8x1xf32> -> vector<2x8x1xf32>
    %196 = vector.broadcast %195 : vector<2x8x1xf32> to vector<2x8x8xf32>
    %197 = arith.mulf %192, %196 : vector<2x8x8xf32>
    "tpu.trace_start"() <{level = 10 : i32, message = "bqk,bkd->bqd"}> : () -> ()
    %cst_75 = arith.constant dense<0.000000e+00> : vector<2x8x128xf32>
    %198 = tpu.matmul %197, %184, %cst_75 {dimension_numbers = #tpu.dot_dimension_numbers<[2], [1], [1], [2], [0, 0, 0, 1, 1, 2], [0], [0]>} : vector<2x8x8xf32>, vector<2x8x128xf32>, vector<2x8x128xf32> -> vector<2x8x128xf32>
    "tpu.trace_stop"() : () -> ()
    %199 = vector.shape_cast %198 : vector<2x8x128xf32> to vector<16x128xf32>
    %c0_76 = arith.constant 0 : index
    %c896 = arith.constant 896 : index
    %200 = vector.load %arg5[%c0_76, %c896] : memref<128x1280xbf16, #tpu.memory_space<vmem>>, vector<128x128xbf16>
    %201 = arith.truncf %199 : vector<16x128xf32> to vector<16x128xbf16>
    %cst_77 = arith.constant dense<0.000000e+00> : vector<16x128xf32>
    %202 = tpu.matmul %201, %200, %cst_77 {dimension_numbers = #tpu.dot_dimension_numbers<[1], [0], [0], [1], [0, 0, 1, 1], [], []>} : vector<16x128xbf16>, vector<128x128xbf16>, vector<16x128xf32> -> vector<16x128xf32>
    %c17 = arith.constant 17 : index
    %c0_78 = arith.constant 0 : index
    %203 = vector.load %arg7[%c17, %c0_78] : memref<26x256xf32, #tpu.memory_space<vmem>>, vector<1x128xf32>
    %204 = vector.broadcast %203 : vector<1x128xf32> to vector<16x128xf32>
    %205 = arith.addf %202, %204 : vector<16x128xf32>
    %206 = arith.addf %164, %205 : vector<16x128xf32>
    %c21 = arith.constant 21 : index
    %c0_79 = arith.constant 0 : index
    %207 = vector.load %arg7[%c21, %c0_79] : memref<26x256xf32, #tpu.memory_space<vmem>>, vector<1x128xf32>
    %c22 = arith.constant 22 : index
    %c0_80 = arith.constant 0 : index
    %208 = vector.load %arg7[%c22, %c0_80] : memref<26x256xf32, #tpu.memory_space<vmem>>, vector<1x128xf32>
    %cst_81 = arith.constant dense<0.000000e+00> : vector<16xf32>
    %209 = vector.multi_reduction <add>, %206, %cst_81 [1] : vector<16x128xf32> to vector<16xf32>
    %210 = vector.shape_cast %209 : vector<16xf32> to vector<16x1xf32>
    %cst_82 = arith.constant 1.280000e+02 : f32
    %211 = vector.broadcast %cst_82 : f32 to vector<16x1xf32>
    %212 = arith.divf %210, %211 : vector<16x1xf32>
    %213 = vector.broadcast %212 : vector<16x1xf32> to vector<16x128xf32>
    %214 = arith.subf %206, %213 : vector<16x128xf32>
    %215 = arith.mulf %214, %214 : vector<16x128xf32>
    %cst_83 = arith.constant dense<0.000000e+00> : vector<16xf32>
    %216 = vector.multi_reduction <add>, %215, %cst_83 [1] : vector<16x128xf32> to vector<16xf32>
    %217 = vector.shape_cast %216 : vector<16xf32> to vector<16x1xf32>
    %cst_84 = arith.constant 1.280000e+02 : f32
    %218 = vector.broadcast %cst_84 : f32 to vector<16x1xf32>
    %219 = arith.divf %217, %218 : vector<16x1xf32>
    %cst_85 = arith.constant 9.99999974E-6 : f32
    %220 = vector.broadcast %cst_85 : f32 to vector<16x1xf32>
    %221 = arith.addf %219, %220 : vector<16x1xf32>
    %222 = math.rsqrt %221 : vector<16x1xf32>
    %223 = vector.broadcast %222 : vector<16x1xf32> to vector<16x128xf32>
    %224 = arith.mulf %214, %223 : vector<16x128xf32>
    %225 = vector.broadcast %207 : vector<1x128xf32> to vector<16x128xf32>
    %226 = arith.mulf %224, %225 : vector<16x128xf32>
    %227 = vector.broadcast %208 : vector<1x128xf32> to vector<16x128xf32>
    %228 = arith.addf %226, %227 : vector<16x128xf32>
    %c0_86 = arith.constant 0 : index
    %c1024 = arith.constant 1024 : index
    %229 = vector.load %arg5[%c0_86, %c1024] : memref<128x1280xbf16, #tpu.memory_space<vmem>>, vector<128x256xbf16>
    %230 = arith.truncf %228 : vector<16x128xf32> to vector<16x128xbf16>
    %cst_87 = arith.constant dense<0.000000e+00> : vector<16x256xf32>
    %231 = tpu.matmul %230, %229, %cst_87 {dimension_numbers = #tpu.dot_dimension_numbers<[1], [0], [0], [1], [0, 0, 1, 1], [], []>} : vector<16x128xbf16>, vector<128x256xbf16>, vector<16x256xf32> -> vector<16x256xf32>
    %c25 = arith.constant 25 : index
    %c0_88 = arith.constant 0 : index
    %232 = vector.load %arg7[%c25, %c0_88] : memref<26x256xf32, #tpu.memory_space<vmem>>, vector<1x256xf32>
    %233 = vector.broadcast %232 : vector<1x256xf32> to vector<16x256xf32>
    %234 = arith.addf %231, %233 : vector<16x256xf32>
    %cst_89 = arith.constant 0.000000e+00 : f32
    %235 = vector.broadcast %cst_89 : f32 to vector<16x256xf32>
    %236 = arith.maximumf %234, %235 : vector<16x256xf32>
    %c0_90 = arith.constant 0 : index
    %c0_91 = arith.constant 0 : index
    %237 = vector.load %arg6[%c0_90, %c0_91] : memref<256x128xbf16, #tpu.memory_space<vmem>>, vector<256x128xbf16>
    %238 = arith.truncf %236 : vector<16x256xf32> to vector<16x256xbf16>
    %cst_92 = arith.constant dense<0.000000e+00> : vector<16x128xf32>
    %239 = tpu.matmul %238, %237, %cst_92 {dimension_numbers = #tpu.dot_dimension_numbers<[1], [0], [0], [1], [0, 0, 1, 1], [], []>} : vector<16x256xbf16>, vector<256x128xbf16>, vector<16x128xf32> -> vector<16x128xf32>
    %c18 = arith.constant 18 : index
    %c0_93 = arith.constant 0 : index
    %240 = vector.load %arg7[%c18, %c0_93] : memref<26x256xf32, #tpu.memory_space<vmem>>, vector<1x128xf32>
    %241 = vector.broadcast %240 : vector<1x128xf32> to vector<16x128xf32>
    %242 = arith.addf %239, %241 : vector<16x128xf32>
    %243 = arith.addf %228, %242 : vector<16x128xf32>
    %c23 = arith.constant 23 : index
    %c0_94 = arith.constant 0 : index
    %244 = vector.load %arg7[%c23, %c0_94] : memref<26x256xf32, #tpu.memory_space<vmem>>, vector<1x128xf32>
    %c24 = arith.constant 24 : index
    %c0_95 = arith.constant 0 : index
    %245 = vector.load %arg7[%c24, %c0_95] : memref<26x256xf32, #tpu.memory_space<vmem>>, vector<1x128xf32>
    %cst_96 = arith.constant dense<0.000000e+00> : vector<16xf32>
    %246 = vector.multi_reduction <add>, %243, %cst_96 [1] : vector<16x128xf32> to vector<16xf32>
    %247 = vector.shape_cast %246 : vector<16xf32> to vector<16x1xf32>
    %cst_97 = arith.constant 1.280000e+02 : f32
    %248 = vector.broadcast %cst_97 : f32 to vector<16x1xf32>
    %249 = arith.divf %247, %248 : vector<16x1xf32>
    %250 = vector.broadcast %249 : vector<16x1xf32> to vector<16x128xf32>
    %251 = arith.subf %243, %250 : vector<16x128xf32>
    %252 = arith.mulf %251, %251 : vector<16x128xf32>
    %cst_98 = arith.constant dense<0.000000e+00> : vector<16xf32>
    %253 = vector.multi_reduction <add>, %252, %cst_98 [1] : vector<16x128xf32> to vector<16xf32>
    %254 = vector.shape_cast %253 : vector<16xf32> to vector<16x1xf32>
    %cst_99 = arith.constant 1.280000e+02 : f32
    %255 = vector.broadcast %cst_99 : f32 to vector<16x1xf32>
    %256 = arith.divf %254, %255 : vector<16x1xf32>
    %cst_100 = arith.constant 9.99999974E-6 : f32
    %257 = vector.broadcast %cst_100 : f32 to vector<16x1xf32>
    %258 = arith.addf %256, %257 : vector<16x1xf32>
    %259 = math.rsqrt %258 : vector<16x1xf32>
    %260 = vector.broadcast %259 : vector<16x1xf32> to vector<16x128xf32>
    %261 = arith.mulf %251, %260 : vector<16x128xf32>
    %262 = vector.broadcast %244 : vector<1x128xf32> to vector<16x128xf32>
    %263 = arith.mulf %261, %262 : vector<16x128xf32>
    %264 = vector.broadcast %245 : vector<1x128xf32> to vector<16x128xf32>
    %265 = arith.addf %263, %264 : vector<16x128xf32>
    %266 = vector.shape_cast %265 : vector<16x128xf32> to vector<2x8x128xf32>
    %c0_101 = arith.constant 0 : index
    %c0_102 = arith.constant 0 : index
    %c0_103 = arith.constant 0 : index
    %267 = vector.load %arg8[%c0_101, %c0_102, %c0_103] : memref<2x8x128xf32, #tpu.memory_space<vmem>>, vector<2x8x128xf32>
    tpu.vector_store %arg8[%c0_101, %c0_102, %c0_103], %266 {strides = array<i32>} : memref<2x8x128xf32, #tpu.memory_space<vmem>>, vector<2x8x128xf32>,
    return
  }
  func.func @transform_0(%arg0: i32) -> (i32, i32, i32) {
    %c0_i32 = arith.constant 0 : i32
    %c0_i32_0 = arith.constant 0 : i32
    %c0_i32_1 = arith.constant 0 : i32
    %c0_i32_2 = arith.constant 0 : i32
    return %c0_i32, %c0_i32_0, %c0_i32_1 : i32, i32, i32
  }
  func.func @transform_1(%arg0: i32) -> (i32, i32, i32) {
    %c0_i32 = arith.constant 0 : i32
    %c0_i32_0 = arith.constant 0 : i32
    %c0_i32_1 = arith.constant 0 : i32
    %c0_i32_2 = arith.constant 0 : i32
    return %c0_i32, %c0_i32_0, %c0_i32_1 : i32, i32, i32
  }
  func.func @transform_2(%arg0: i32) -> (i32, i32) {
    %c0_i32 = arith.constant 0 : i32
    %c0_i32_0 = arith.constant 0 : i32
    %c0_i32_1 = arith.constant 0 : i32
    return %c0_i32, %c0_i32_0 : i32, i32
  }
  func.func @transform_3(%arg0: i32) -> (i32, i32) {
    %c0_i32 = arith.constant 0 : i32
    %c0_i32_0 = arith.constant 0 : i32
    %c0_i32_1 = arith.constant 0 : i32
    return %c0_i32, %c0_i32_0 : i32, i32
  }
  func.func @transform_4(%arg0: i32) -> (i32, i32) {
    %c0_i32 = arith.constant 0 : i32
    %c0_i32_0 = arith.constant 0 : i32
    %c0_i32_1 = arith.constant 0 : i32
    return %c0_i32, %c0_i32_0 : i32, i32
  }
  func.func @transform_5(%arg0: i32) -> (i32, i32) {
    %c0_i32 = arith.constant 0 : i32
    %c0_i32_0 = arith.constant 0 : i32
    %c0_i32_1 = arith.constant 0 : i32
    return %c0_i32, %c0_i32_0 : i32, i32
  }
  func.func @transform_6(%arg0: i32) -> (i32, i32) {
    %c0_i32 = arith.constant 0 : i32
    %c0_i32_0 = arith.constant 0 : i32
    %c0_i32_1 = arith.constant 0 : i32
    return %c0_i32, %c0_i32_0 : i32, i32
  }
  func.func @transform_7(%arg0: i32) -> (i32, i32, i32) {
    %c0_i32 = arith.constant 0 : i32
    %c0_i32_0 = arith.constant 0 : i32
    %c0_i32_1 = arith.constant 0 : i32
    %c0_i32_2 = arith.constant 0 : i32
    return %c0_i32, %c0_i32_0, %c0_i32_1 : i32, i32, i32
  }
}

</mosaic_0001>

<llo_original>
// kernel: encoder_decoder_model.1
$region0: #{encoder_decoder_model.1}
  #allocation0 [shape = 'u32[]', space=smem, size = 0x4, offset = 0x4, fixed_abs, tag = 'smem constant byte address 0x4 - core index']
  #allocation1 [shape = 'u32[144,128]{1,0:T(1,128)}', space=vmem, size = 0x12000, scoped, tag = 'internal scratch']
  %s0 = inlined_call_operand.hbm [shape: f32[2,8,128], index: 0, kind: input, shape index: {}]
  %s1 = inlined_call_operand.hbm [shape: f32[2,8,128], index: 1, kind: input, shape index: {}]
  %s2 = inlined_call_operand.hbm [shape: bf16[128,768], index: 2, kind: input, shape index: {}]
  %s3 = inlined_call_operand.hbm [shape: bf16[256,128], index: 3, kind: input, shape index: {}]
  %s4 = inlined_call_operand.hbm [shape: bf16[128,1280], index: 4, kind: input, shape index: {}]
  %s5 = inlined_call_operand.hbm [shape: bf16[256,128], index: 5, kind: input, shape index: {}]
  %s6 = inlined_call_operand.hbm [shape: f32[26,256], index: 6, kind: input, shape index: {}]
  %s7 = inlined_call_operand.hbm [shape: f32[2,8,128], index: 7, kind: output, shape index: {}]
  %s8 = sld [smem:[#allocation0]]
  $region66: #{encoder_decoder_model.1} parent=0
    _
  %s10 = ssub.s32 1, %s8
  %s11 = scalar_select 0, %s10, %s8
  $region1: #{encoder_decoder_model.1} parent=0
    #allocation2 [shape = 'u8[8192]{0}', space=vmem, size = 0x2000, scoped, tag = 'input window, operand 0, single buffered']
    #allocation3 [shape = 's32[1]{0}', space=sflag, size = 0x4, scoped, tag = 'scoped memory for encoder_decoder_model.1']
    #allocation4 [shape = 's32[1]{0}', space=sflag, size = 0x4, scoped, tag = 'scoped memory for encoder_decoder_model.1']
    #allocation5 [shape = 'u8[8192]{0}', space=vmem, size = 0x2000, scoped, tag = 'input window, operand 1, single buffered']
    #allocation6 [shape = 's32[1]{0}', space=sflag, size = 0x4, scoped, tag = 'scoped memory for encoder_decoder_model.1']
    #allocation7 [shape = 'u8[196608]{0}', space=vmem, size = 0x30000, scoped, tag = 'input window, operand 2, single buffered']
    #allocation8 [shape = 'u8[65536]{0}', space=vmem, size = 0x10000, scoped, tag = 'input window, operand 3, single buffered']
    #allocation9 [shape = 's32[1]{0}', space=sflag, size = 0x4, scoped, tag = 'scoped memory for encoder_decoder_model.1']
    #allocation10 [shape = 'u8[327680]{0}', space=vmem, size = 0x50000, scoped, tag = 'input window, operand 4, single buffered']
    #allocation11 [shape = 'u8[65536]{0}', space=vmem, size = 0x10000, scoped, tag = 'input window, operand 5, single buffered']
    #allocation12 [shape = 's32[1]{0}', space=sflag, size = 0x4, scoped, tag = 'scoped memory for encoder_decoder_model.1']
    #allocation13 [shape = 'u8[32768]{0}', space=vmem, size = 0x8000, scoped, tag = 'input window, operand 6, single buffered']
    #allocation14 [shape = 'u8[8192]{0}', space=vmem, size = 0x2000, scoped, tag = 'output window, operand 0, single buffered']
    %12 = vsyncpa [#allocation3], 0
    %13 = vsyncpa [#allocation6], 0
    %14 = vsyncpa [#allocation9], 0
    %15 = vsyncpa [#allocation12], 0
    %16 = vsyncpa [#allocation4], 0
    // Predicated region
    $region2: #{encoder_decoder_model.1} parent=1 // pred_check
      _
    $region3: #{encoder_decoder_model.1} parent=1 // pred_check_branch
      %18 = sbr.rel (0) target = $region5
    $region4: #{encoder_decoder_model.1} parent=1 // pred_region
      %s20 = ssub.s32 256, 256
      %21 = vsyncadd [#allocation3], %s20
      %s22 = sshll.u32 [#allocation2], 4
      %s23 = int_to_ptr.vmem [resolvable:$true] %s22
      %28 = dma.hbm_to_vmem [thread:$0]  %s0, 256, %s23, [#allocation3], 128, 128, 8
    $region5: #{encoder_decoder_model.1} parent=1 // pred_fallthru
      _
    // Predicated region
    $region6: #{encoder_decoder_model.1} parent=1 // pred_check
      _
    $region7: #{encoder_decoder_model.1} parent=1 // pred_check_branch
      %30 = sbr.rel (0) target = $region9
    $region8: #{encoder_decoder_model.1} parent=1 // pred_region
      %s32 = ssub.s32 256, 256
      %33 = vsyncadd [#allocation6], %s32
      %s34 = sshll.u32 [#allocation5], 4
      %s35 = int_to_ptr.vmem [resolvable:$true] %s34
      %40 = dma.hbm_to_vmem [thread:$0]  %s1, 256, %s35, [#allocation6], 128, 128, 8
    $region9: #{encoder_decoder_model.1} parent=1 // pred_fallthru
      _
    // Predicated region
    $region10: #{encoder_decoder_model.1} parent=1 // pred_check
      _
    $region11: #{encoder_decoder_model.1} parent=1 // pred_check_branch
      %42 = sbr.rel (0) target = $region13
    $region12: #{encoder_decoder_model.1} parent=1 // pred_region
      %s44 = ssub.s32 6144, 6144
      %45 = vsyncadd [#allocation6], %s44
      %s46 = sshll.u32 [#allocation7], 4
      %s47 = int_to_ptr.vmem [resolvable:$true] %s46
      %52 = dma.hbm_to_vmem [thread:$0]  %s2, 6144, %s47, [#allocation6], 384, 384, 24
    $region13: #{encoder_decoder_model.1} parent=1 // pred_fallthru
      _
    // Predicated region
    $region14: #{encoder_decoder_model.1} parent=1 // pred_check
      _
    $region15: #{encoder_decoder_model.1} parent=1 // pred_check_branch
      %54 = sbr.rel (0) target = $region17
    $region16: #{encoder_decoder_model.1} parent=1 // pred_region
      %s56 = ssub.s32 2048, 2048
      %57 = vsyncadd [#allocation9], %s56
      %s58 = sshll.u32 [#allocation8], 4
      %s59 = int_to_ptr.vmem [resolvable:$true] %s58
      %64 = dma.hbm_to_vmem [thread:$0]  %s3, 2048, %s59, [#allocation9], 64, 64, 4
    $region17: #{encoder_decoder_model.1} parent=1 // pred_fallthru
      _
    // Predicated region
    $region18: #{encoder_decoder_model.1} parent=1 // pred_check
      _
    $region19: #{encoder_decoder_model.1} parent=1 // pred_check_branch
      %66 = sbr.rel (0) target = $region21
    $region20: #{encoder_decoder_model.1} parent=1 // pred_region
      %s68 = ssub.s32 10240, 10240
      %69 = vsyncadd [#allocation9], %s68
      %s70 = sshll.u32 [#allocation10], 4
      %s71 = int_to_ptr.vmem [resolvable:$true] %s70
      %76 = dma.hbm_to_vmem [thread:$0]  %s4, 10240, %s71, [#allocation9], 640, 640, 40
    $region21: #{encoder_decoder_model.1} parent=1 // pred_fallthru
      _
    // Predicated region
    $region22: #{encoder_decoder_model.1} parent=1 // pred_check
      _
    $region23: #{encoder_decoder_model.1} parent=1 // pred_check_branch
      %78 = sbr.rel (0) target = $region25
    $region24: #{encoder_decoder_model.1} parent=1 // pred_region
      %s80 = ssub.s32 2048, 2048
      %81 = vsyncadd [#allocation12], %s80
      %s82 = sshll.u32 [#allocation11], 4
      %s83 = int_to_ptr.vmem [resolvable:$true] %s82
      %88 = dma.hbm_to_vmem [thread:$0]  %s5, 2048, %s83, [#allocation12], 64, 64, 4
    $region25: #{encoder_decoder_model.1} parent=1 // pred_fallthru
      _
    // Predicated region
    $region26: #{encoder_decoder_model.1} parent=1 // pred_check
      _
    $region27: #{encoder_decoder_model.1} parent=1 // pred_check_branch
      %90 = sbr.rel (0) target = $region29
    $region28: #{encoder_decoder_model.1} parent=1 // pred_region
      %s92 = ssub.s32 1024, 1024
      %93 = vsyncadd [#allocation12], %s92
      %s94 = sshll.u32 [#allocation13], 4
      %s95 = int_to_ptr.vmem [resolvable:$true] %s94
      %100 = dma.hbm_to_vmem [thread:$0]  %s6, 1024, %s95, [#allocation12], 256, 256, 16
    $region29: #{encoder_decoder_model.1} parent=1 // pred_fallthru
      _
    // Predicated region
    $region30: #{encoder_decoder_model.1} parent=1 // pred_check
      _
    $region31: #{encoder_decoder_model.1} parent=1 // pred_check_branch
      %102 = sbr.rel (0) target = $region33
    $region32: #{encoder_decoder_model.1} parent=1 // pred_region
      %103 = dma.done [#allocation3], 256
    $region33: #{encoder_decoder_model.1} parent=1 // pred_fallthru
      _
    // Predicated region
    $region34: #{encoder_decoder_model.1} parent=1 // pred_check
      _
    $region35: #{encoder_decoder_model.1} parent=1 // pred_check_branch
      %105 = sbr.rel (0) target = $region37
    $region36: #{encoder_decoder_model.1} parent=1 // pred_region
      %106 = dma.done [#allocation6], 256
    $region37: #{encoder_decoder_model.1} parent=1 // pred_fallthru
      _
    // Predicated region
    $region38: #{encoder_decoder_model.1} parent=1 // pred_check
      _
    $region39: #{encoder_decoder_model.1} parent=1 // pred_check_branch
      %108 = sbr.rel (0) target = $region41
    $region40: #{encoder_decoder_model.1} parent=1 // pred_region
      %109 = dma.done [#allocation6], 6144
    $region41: #{encoder_decoder_model.1} parent=1 // pred_fallthru
      _
    // Predicated region
    $region42: #{encoder_decoder_model.1} parent=1 // pred_check
      _
    $region43: #{encoder_decoder_model.1} parent=1 // pred_check_branch
      %111 = sbr.rel (0) target = $region45
    $region44: #{encoder_decoder_model.1} parent=1 // pred_region
      %112 = dma.done [#allocation9], 2048
    $region45: #{encoder_decoder_model.1} parent=1 // pred_fallthru
      _
    // Predicated region
    $region46: #{encoder_decoder_model.1} parent=1 // pred_check
      _
    $region47: #{encoder_decoder_model.1} parent=1 // pred_check_branch
      %114 = sbr.rel (0) target = $region49
    $region48: #{encoder_decoder_model.1} parent=1 // pred_region
      %115 = dma.done [#allocation9], 10240
    $region49: #{encoder_decoder_model.1} parent=1 // pred_fallthru
      _
    // Predicated region
    $region50: #{encoder_decoder_model.1} parent=1 // pred_check
      _
    $region51: #{encoder_decoder_model.1} parent=1 // pred_check_branch
      %117 = sbr.rel (0) target = $region53
    $region52: #{encoder_decoder_model.1} parent=1 // pred_region
      %118 = dma.done [#allocation12], 2048
    $region53: #{encoder_decoder_model.1} parent=1 // pred_fallthru
      _
    // Predicated region
    $region54: #{encoder_decoder_model.1} parent=1 // pred_check
      _
    $region55: #{encoder_decoder_model.1} parent=1 // pred_check_branch
      %120 = sbr.rel (0) target = $region57
    $region56: #{encoder_decoder_model.1} parent=1 // pred_region
      %121 = dma.done [#allocation12], 1024
    $region57: #{encoder_decoder_model.1} parent=1 // pred_fallthru
      _
    %v123 = vld [vmem:[#allocation2] sm:$0xff]
    %v124 = vld [vmem:[#allocation2 + $0x8] sm:$0xff]
    %v125 = vld [vmem:[#allocation7] sm:$0xff]
    %v126 = vld [vmem:[#allocation7 + $0x8] sm:$0xf]
    %v127 = vld [vmem:[#allocation7 + $0x18] sm:$0xff]
    %v128 = vld [vmem:[#allocation7 + $0x20] sm:$0xf]
    %v129 = vld [vmem:[#allocation7 + $0x30] sm:$0xff]
    %v130 = vld [vmem:[#allocation7 + $0x38] sm:$0xf]
    %v131 = vld [vmem:[#allocation7 + $0x48] sm:$0xff]
    %v132 = vld [vmem:[#allocation7 + $0x50] sm:$0xf]
    %v133 = vld [vmem:[#allocation7 + $0x60] sm:$0xff]
    %v134 = vld [vmem:[#allocation7 + $0x68] sm:$0xf]
    %v135 = vld [vmem:[#allocation7 + $0x78] sm:$0xff]
    %v136 = vld [vmem:[#allocation7 + $0x80] sm:$0xf]
    %v137 = vld [vmem:[#allocation7 + $0x90] sm:$0xff]
    %v138 = vld [vmem:[#allocation7 + $0x98] sm:$0xf]
    %v139 = vld [vmem:[#allocation7 + $0xa8] sm:$0xff]
    %v140 = vld [vmem:[#allocation7 + $0xb0] sm:$0xf]
    %v141 = vld [vmem:[#allocation7 + $0xc0] sm:$0xff]
    %v142 = vld [vmem:[#allocation7 + $0xc8] sm:$0xf]
    %v143 = vld [vmem:[#allocation7 + $0xd8] sm:$0xff]
    %v144 = vld [vmem:[#allocation7 + $0xe0] sm:$0xf]
    %v145 = vld [vmem:[#allocation7 + $0xf0] sm:$0xff]
    %v146 = vld [vmem:[#allocation7 + $0xf8] sm:$0xf]
    %v147 = vld [vmem:[#allocation7 + $0x108] sm:$0xff]
    %v148 = vld [vmem:[#allocation7 + $0x110] sm:$0xf]
    %v149 = vld [vmem:[#allocation7 + $0x120] sm:$0xff]
    %v150 = vld [vmem:[#allocation7 + $0x128] sm:$0xf]
    %v151 = vld [vmem:[#allocation7 + $0x138] sm:$0xff]
    %v152 = vld [vmem:[#allocation7 + $0x140] sm:$0xf]
    %v153 = vld [vmem:[#allocation7 + $0x150] sm:$0xff]
    %v154 = vld [vmem:[#allocation7 + $0x158] sm:$0xf]
    %v155 = vld [vmem:[#allocation7 + $0x168] sm:$0xff]
    %v156 = vld [vmem:[#allocation7 + $0x170] sm:$0xf]
    %v157 = vpack.c.bf16 %v124, %v123
    %v190 = vunpack.c.l.b16 %v125
    %v191 = vunpack.c.h.b16 %v125
    %v192 = vunpack.c.l.b16 %v126
    %v193 = vunpack.c.l.b16 %v127
    %v194 = vunpack.c.h.b16 %v127
    %v195 = vunpack.c.l.b16 %v128
    %v196 = vunpack.c.l.b16 %v129
    %v197 = vunpack.c.h.b16 %v129
    %v198 = vunpack.c.l.b16 %v130
    %v199 = vunpack.c.l.b16 %v131
    %v200 = vunpack.c.h.b16 %v131
    %v201 = vunpack.c.l.b16 %v132
    %v202 = vunpack.c.l.b16 %v133
    %v203 = vunpack.c.h.b16 %v133
    %v204 = vunpack.c.l.b16 %v134
    %v205 = vunpack.c.l.b16 %v135
    %v206 = vunpack.c.h.b16 %v135
    %v207 = vunpack.c.l.b16 %v136
    %v208 = vunpack.c.l.b16 %v137
    %v209 = vunpack.c.h.b16 %v137
    %v210 = vunpack.c.l.b16 %v138
    %v211 = vunpack.c.l.b16 %v139
    %v212 = vunpack.c.h.b16 %v139
    %v213 = vunpack.c.l.b16 %v140
    %v214 = vunpack.c.l.b16 %v141
    %v215 = vunpack.c.h.b16 %v141
    %v216 = vunpack.c.l.b16 %v142
    %v217 = vunpack.c.l.b16 %v143
    %v218 = vunpack.c.h.b16 %v143
    %v219 = vunpack.c.l.b16 %v144
    %v220 = vunpack.c.l.b16 %v145
    %v221 = vunpack.c.h.b16 %v145
    %v222 = vunpack.c.l.b16 %v146
    %v223 = vunpack.c.l.b16 %v147
    %v224 = vunpack.c.h.b16 %v147
    %v225 = vunpack.c.l.b16 %v148
    %v226 = vunpack.c.l.b16 %v149
    %v227 = vunpack.c.h.b16 %v149
    %v228 = vunpack.c.l.b16 %v150
    %v229 = vunpack.c.l.b16 %v151
    %v230 = vunpack.c.h.b16 %v151
    %v231 = vunpack.c.l.b16 %v152
    %v232 = vunpack.c.l.b16 %v153
    %v233 = vunpack.c.h.b16 %v153
    %v234 = vunpack.c.l.b16 %v154
    %v235 = vunpack.c.l.b16 %v155
    %v236 = vunpack.c.h.b16 %v155
    %v237 = vunpack.c.l.b16 %v156
    %v238 = vpack.c.b16 %v193, %v190
    %v239 = vpack.c.b16 %v194, %v191
    %v240 = vpack.c.b16 %v195, %v192
    %v241 = vpack.c.b16 %v199, %v196
    %v242 = vpack.c.b16 %v200, %v197
    %v243 = vpack.c.b16 %v201, %v198
    %v244 = vpack.c.b16 %v205, %v202
    %v245 = vpack.c.b16 %v206, %v203
    %v246 = vpack.c.b16 %v207, %v204
    %v247 = vpack.c.b16 %v211, %v208
    %v248 = vpack.c.b16 %v212, %v209
    %v249 = vpack.c.b16 %v213, %v210
    %v250 = vpack.c.b16 %v217, %v214
    %v251 = vpack.c.b16 %v218, %v215
    %v252 = vpack.c.b16 %v219, %v216
    %v253 = vpack.c.b16 %v223, %v220
    %v254 = vpack.c.b16 %v224, %v221
    %v255 = vpack.c.b16 %v225, %v222
    %v256 = vpack.c.b16 %v229, %v226
    %v257 = vpack.c.b16 %v230, %v227
    %v258 = vpack.c.b16 %v231, %v228
    %v259 = vpack.c.b16 %v235, %v232
    %v260 = vpack.c.b16 %v236, %v233
    %v261 = vpack.c.b16 %v237, %v234
    %286 = vmatprep.subr.bf16.mxu0 %v239
    %287 = vmatpush1.bf16.msra.mxu0 %v238
    %288 = vmatprep.subr.bf16.mxu0 %v242
    %289 = vmatpush1.bf16.msra.mxu0 %v241
    %290 = vmatprep.subr.bf16.mxu0 %v245
    %291 = vmatpush1.bf16.msra.mxu0 %v244
    %292 = vmatprep.subr.bf16.mxu0 %v248
    %293 = vmatpush1.bf16.msra.mxu0 %v247
    %294 = vmatprep.subr.bf16.mxu0 %v251
    %295 = vmatpush1.bf16.msra.mxu0 %v250
    %296 = vmatprep.subr.bf16.mxu0 %v254
    %297 = vmatpush1.bf16.msra.mxu0 %v253
    %298 = vmatprep.subr.bf16.mxu0 %v257
    %299 = vmatpush1.bf16.msra.mxu0 %v256
    %300 = vmatprep.subr.bf16.mxu0 %v260
    %301 = vmatpush1.bf16.msra.mxu0 %v259
    %302 = vmatprep.subr.bf16.mxu0 0
    %303 = vmatpush1.bf16.msra.mxu0 0
    %304 = vmatprep.subr.bf16.mxu0 0
    %305 = vmatpush1.bf16.msra.mxu0 0
    %306 = vmatprep.subr.bf16.mxu0 0
    %307 = vmatpush1.bf16.msra.mxu0 0
    %308 = vmatprep.subr.bf16.mxu0 0
    %309 = vmatpush1.bf16.msra.mxu0 0
    %310 = vmatprep.subr.bf16.mxu0 0
    %311 = vmatpush1.bf16.msra.mxu0 0
    %312 = vmatprep.subr.bf16.mxu0 0
    %313 = vmatpush1.bf16.msra.mxu0 0
    %314 = vmatprep.subr.bf16.mxu0 0
    %315 = vmatpush1.bf16.msra.mxu0 0
    %316 = vmatprep.subr.bf16.mxu0 0
    %317 = vmatpush1.bf16.msra.mxu0 0
    %318 = vmatprep.mubr.bf16.mxu0 0
    %319 = vmatmul.mubr.bf16.gmra.mrb[0].mxu0 %v157
    %v320 = vpop.f32.mrb[0].mxu0
    %v321 = vadd.f32 0.0, %v320
    %v322 = vpop.f32.mrb[0].mxu0
    %v323 = vadd.f32 0.0, %v322
    %v324 = vpop.f32.mrb[0].mxu0
    %v325 = vadd.f32 0.0, %v324
    %v326 = vpop.f32.mrb[0].mxu0
    %v327 = vadd.f32 0.0, %v326
    %328 = vdwg.mxu0
    %329 = vmatprep.subr.bf16.mxu0 0
    %330 = vmatpush1.bf16.msra.mxu0 %v240
    %331 = vmatprep.subr.bf16.mxu0 0
    %332 = vmatpush1.bf16.msra.mxu0 %v243
    %333 = vmatprep.subr.bf16.mxu0 0
    %334 = vmatpush1.bf16.msra.mxu0 %v246
    %335 = vmatprep.subr.bf16.mxu0 0
    %336 = vmatpush1.bf16.msra.mxu0 %v249
    %337 = vmatprep.subr.bf16.mxu0 0
    %338 = vmatpush1.bf16.msra.mxu0 %v252
    %339 = vmatprep.subr.bf16.mxu0 0
    %340 = vmatpush1.bf16.msra.mxu0 %v255
    %341 = vmatprep.subr.bf16.mxu0 0
    %342 = vmatpush1.bf16.msra.mxu0 %v258
    %343 = vmatprep.subr.bf16.mxu0 0
    %344 = vmatpush1.bf16.msra.mxu0 %v261
    %345 = vmatprep.subr.bf16.mxu0 0
    %346 = vmatpush1.bf16.msra.mxu0 0
    %347 = vmatprep.subr.bf16.mxu0 0
    %348 = vmatpush1.bf16.msra.mxu0 0
    %349 = vmatprep.subr.bf16.mxu0 0
    %350 = vmatpush1.bf16.msra.mxu0 0
    %351 = vmatprep.subr.bf16.mxu0 0
    %352 = vmatpush1.bf16.msra.mxu0 0
    %353 = vmatprep.subr.bf16.mxu0 0
    %354 = vmatpush1.bf16.msra.mxu0 0
    %355 = vmatprep.subr.bf16.mxu0 0
    %356 = vmatpush1.bf16.msra.mxu0 0
    %357 = vmatprep.subr.bf16.mxu0 0
    %358 = vmatpush1.bf16.msra.mxu0 0
    %359 = vmatprep.subr.bf16.mxu0 0
    %360 = vmatpush1.bf16.msra.mxu0 0
    %361 = vmatprep.mubr.bf16.mxu0 0
    %362 = vmatmul.mubr.bf16.gmra.mrb[0].mxu0 %v157
    %v363 = vpop.f32.mrb[0].mxu0
    %v364 = vadd.f32 0.0, %v363
    %v365 = vpop.f32.mrb[0].mxu0
    %v366 = vpop.f32.mrb[0].mxu0
    %v367 = vadd.f32 0.0, %v366
    %v368 = vpop.f32.mrb[0].mxu0
    %369 = vdwg.mxu0
    %v370 = vld [vmem:[#allocation13] ss:$0 sm:$0xff]
    %v371 = vadd.f32 %v321, %v370
    %v372 = vadd.f32 %v325, %v370
    %v373 = vld [vmem:[#allocation13 + $0x1] ss:$0 sm:$0xff]
    %v374 = vadd.f32 %v323, %v373
    %v375 = vadd.f32 %v327, %v373
    %v376 = vld [vmem:[#allocation13 + $0x2] ss:$0 sm:$0xff]
    %v377 = vadd.f32 %v364, %v376
    %v378 = vadd.f32 %v367, %v376
    %379 = vmatprep.subr.mxu0 0.0
    %380 = vmatpush1.xpose.msra.mxu0 %v374
    %381 = vmatprep.subr.mxu0 0.0
    %382 = vmatpush1.xpose.msra.mxu0 0.0
    %383 = vmatprep.subr.mxu0 0.0
    %384 = vmatpush1.xpose.msra.mxu0 0.0
    %385 = vmatprep.subr.mxu0 0.0
    %386 = vmatpush1.xpose.msra.mxu0 0.0
    %387 = vmatprep.subr.mxu0 0.0
    %388 = vmatpush1.xpose.msra.mxu0 0.0
    %389 = vmatprep.subr.mxu0 0.0
    %390 = vmatpush1.xpose.msra.mxu0 0.0
    %391 = vmatprep.subr.mxu0 0.0
    %392 = vmatpush1.xpose.msra.mxu0 0.0
    %393 = vmatprep.subr.mxu0 0.0
    %394 = vmatpush1.xpose.msra.mxu0 0.0
    %395 = vmatprep.subr.mxu0 0.0
    %396 = vmatpush1.xpose.msra.mxu0 0.0
    %397 = vmatprep.subr.mxu0 0.0
    %398 = vmatpush1.xpose.msra.mxu0 0.0
    %399 = vmatprep.subr.mxu0 0.0
    %400 = vmatpush1.xpose.msra.mxu0 0.0
    %401 = vmatprep.subr.mxu0 0.0
    %402 = vmatpush1.xpose.msra.mxu0 0.0
    %403 = vmatprep.subr.mxu0 0.0
    %404 = vmatpush1.xpose.msra.mxu0 0.0
    %405 = vmatprep.subr.mxu0 0.0
    %406 = vmatpush1.xpose.msra.mxu0 0.0
    %407 = vmatprep.subr.mxu0 0.0
    %408 = vmatpush1.xpose.msra.mxu0 0.0
    %409 = vmatprep.subr.mxu0 0.0
    %410 = vmatpush1.xpose.msra.mxu0 0.0
    %411 = vmatprep.subr.mxu0 0.0
    %412 = vmatpush1.xpose.msra.mxu0 0.0
    %413 = vmatprep.subr.mxu0 0.0
    %414 = vmatpush1.xpose.msra.mxu0 0.0
    %415 = vmatprep.subr.mxu0 0.0
    %416 = vmatpush1.xpose.msra.mxu0 0.0
    %417 = vmatprep.subr.mxu0 0.0
    %418 = vmatpush1.xpose.msra.mxu0 0.0
    %419 = vmatprep.subr.mxu0 0.0
    %420 = vmatpush1.xpose.msra.mxu0 0.0
    %421 = vmatprep.subr.mxu0 0.0
    %422 = vmatpush1.xpose.msra.mxu0 0.0
    %423 = vmatprep.subr.mxu0 0.0
    %424 = vmatpush1.xpose.msra.mxu0 0.0
    %425 = vmatprep.subr.mxu0 0.0
    %426 = vmatpush1.xpose.msra.mxu0 0.0
    %427 = vmatprep.subr.mxu0 0.0
    %428 = vmatpush1.xpose.msra.mxu0 0.0
    %429 = vmatprep.subr.mxu0 0.0
    %430 = vmatpush1.xpose.msra.mxu0 0.0
    %431 = vmatprep.subr.mxu0 0.0
    %432 = vmatpush1.xpose.msra.mxu0 0.0
    %433 = vmatprep.subr.mxu0 0.0
    %434 = vmatpush1.xpose.msra.mxu0 0.0
    %435 = vmatprep.subr.mxu0 0.0
    %436 = vmatpush1.xpose.msra.mxu0 0.0
    %437 = vmatprep.subr.mxu0 0.0
    %438 = vmatpush1.xpose.msra.mxu0 0.0
    %439 = vmatprep.subr.mxu0 0.0
    %440 = vmatpush1.xpose.msra.mxu0 0.0
    %441 = vmatprep.subr.mxu0 0.0
    %442 = vmatpush1.xpose.msra.mxu0 0.0
    %443 = vmatprep.mubr.f32.mxu0 0.0
    %444 = vmatmul.mubr.f32.gmra.mrb[0].mxu0 %v371
    %v445 = vpop.f32.mrb[0].mxu0
    %v446 = vadd.f32 0.0, %v445
    %v447 = vpop.f32.mrb[0].mxu0
    %448 = vdwg.mxu0
    %449 = vmatprep.subr.mxu0 0.0
    %450 = vmatpush1.xpose.msra.mxu0 %v375
    %451 = vmatprep.subr.mxu0 0.0
    %452 = vmatpush1.xpose.msra.mxu0 0.0
    %453 = vmatprep.subr.mxu0 0.0
    %454 = vmatpush1.xpose.msra.mxu0 0.0
    %455 = vmatprep.subr.mxu0 0.0
    %456 = vmatpush1.xpose.msra.mxu0 0.0
    %457 = vmatprep.subr.mxu0 0.0
    %458 = vmatpush1.xpose.msra.mxu0 0.0
    %459 = vmatprep.subr.mxu0 0.0
    %460 = vmatpush1.xpose.msra.mxu0 0.0
    %461 = vmatprep.subr.mxu0 0.0
    %462 = vmatpush1.xpose.msra.mxu0 0.0
    %463 = vmatprep.subr.mxu0 0.0
    %464 = vmatpush1.xpose.msra.mxu0 0.0
    %465 = vmatprep.subr.mxu0 0.0
    %466 = vmatpush1.xpose.msra.mxu0 0.0
    %467 = vmatprep.subr.mxu0 0.0
    %468 = vmatpush1.xpose.msra.mxu0 0.0
    %469 = vmatprep.subr.mxu0 0.0
    %470 = vmatpush1.xpose.msra.mxu0 0.0
    %471 = vmatprep.subr.mxu0 0.0
    %472 = vmatpush1.xpose.msra.mxu0 0.0
    %473 = vmatprep.subr.mxu0 0.0
    %474 = vmatpush1.xpose.msra.mxu0 0.0
    %475 = vmatprep.subr.mxu0 0.0
    %476 = vmatpush1.xpose.msra.mxu0 0.0
    %477 = vmatprep.subr.mxu0 0.0
    %478 = vmatpush1.xpose.msra.mxu0 0.0
    %479 = vmatprep.subr.mxu0 0.0
    %480 = vmatpush1.xpose.msra.mxu0 0.0
    %481 = vmatprep.subr.mxu0 0.0
    %482 = vmatpush1.xpose.msra.mxu0 0.0
    %483 = vmatprep.subr.mxu0 0.0
    %484 = vmatpush1.xpose.msra.mxu0 0.0
    %485 = vmatprep.subr.mxu0 0.0
    %486 = vmatpush1.xpose.msra.mxu0 0.0
    %487 = vmatprep.subr.mxu0 0.0
    %488 = vmatpush1.xpose.msra.mxu0 0.0
    %489 = vmatprep.subr.mxu0 0.0
    %490 = vmatpush1.xpose.msra.mxu0 0.0
    %491 = vmatprep.subr.mxu0 0.0
    %492 = vmatpush1.xpose.msra.mxu0 0.0
    %493 = vmatprep.subr.mxu0 0.0
    %494 = vmatpush1.xpose.msra.mxu0 0.0
    %495 = vmatprep.subr.mxu0 0.0
    %496 = vmatpush1.xpose.msra.mxu0 0.0
    %497 = vmatprep.subr.mxu0 0.0
    %498 = vmatpush1.xpose.msra.mxu0 0.0
    %499 = vmatprep.subr.mxu0 0.0
    %500 = vmatpush1.xpose.msra.mxu0 0.0
    %501 = vmatprep.subr.mxu0 0.0
    %502 = vmatpush1.xpose.msra.mxu0 0.0
    %503 = vmatprep.subr.mxu0 0.0
    %504 = vmatpush1.xpose.msra.mxu0 0.0
    %505 = vmatprep.subr.mxu0 0.0
    %506 = vmatpush1.xpose.msra.mxu0 0.0
    %507 = vmatprep.subr.mxu0 0.0
    %508 = vmatpush1.xpose.msra.mxu0 0.0
    %509 = vmatprep.subr.mxu0 0.0
    %510 = vmatpush1.xpose.msra.mxu0 0.0
    %511 = vmatprep.subr.mxu0 0.0
    %512 = vmatpush1.xpose.msra.mxu0 0.0
    %513 = vmatprep.mubr.f32.mxu0 0.0
    %514 = vmatmul.mubr.f32.gmra.mrb[0].mxu0 %v372
    %v515 = vpop.f32.mrb[0].mxu0
    %v516 = vadd.f32 0.0, %v515
    %v517 = vpop.f32.mrb[0].mxu0
    %518 = vdwg.mxu0
    %v519 = vmul.f32 %v446, 0.088388346
    %v520 = vmul.f32 %v516, 0.088388346
    %vm521 = vcmask 64512
    %v522 = vsel %vm521, %v519, -inf
    %523 = vmax.xlane.f32.xlu0 %v522
    %v524 = vpop.xlane.xlu0 %523
    %v525 = vsel %vm521, %v520, -inf
    %526 = vmax.xlane.f32.xlu0 %v525
    %v527 = vpop.xlane.xlu0 %526
    %v528 = vsub.f32 %v519, %v524
    %v529 = vsub.f32 %v520, %v527
    %v530 = vmul.f32 %v528, 1.442695
    %v531 = vpow.pop %v530
    %v532 = vmul.f32 %v529, 1.442695
    %v533 = vpow.pop %v532
    %v534 = vsel %vm521, %v531, 0.0
    %535 = vadd.xlane.f32.xlu0 %v534
    %v536 = vpop.xlane.xlu0 %535
    %v537 = vsel %vm521, %v533, 0.0
    %538 = vadd.xlane.f32.xlu0 %v537
    %v539 = vpop.xlane.xlu0 %538
    %v540 = vrcp.pop %v536
    %v541 = vrcp.pop %v539
    %v542 = vmul.f32 %v531, %v540
    %v543 = vmul.f32 %v533, %v541
    %v545 = vsel %vm521, %v542, 0
    %547 = vmatprep.subr.mxu0 0.0
    %548 = vmatpush1.msra.mxu0 %v377
    %549 = vmatprep.subr.mxu0 0.0
    %550 = vmatpush1.msra.mxu0 0.0
    %551 = vmatprep.subr.mxu0 0.0
    %552 = vmatpush1.msra.mxu0 0.0
    %553 = vmatprep.subr.mxu0 0.0
    %554 = vmatpush1.msra.mxu0 0.0
    %555 = vmatprep.subr.mxu0 0.0
    %556 = vmatpush1.msra.mxu0 0.0
    %557 = vmatprep.subr.mxu0 0.0
    %558 = vmatpush1.msra.mxu0 0.0
    %559 = vmatprep.subr.mxu0 0.0
    %560 = vmatpush1.msra.mxu0 0.0
    %561 = vmatprep.subr.mxu0 0.0
    %562 = vmatpush1.msra.mxu0 0.0
    %563 = vmatprep.subr.mxu0 0.0
    %564 = vmatpush1.msra.mxu0 0.0
    %565 = vmatprep.subr.mxu0 0.0
    %566 = vmatpush1.msra.mxu0 0.0
    %567 = vmatprep.subr.mxu0 0.0
    %568 = vmatpush1.msra.mxu0 0.0
    %569 = vmatprep.subr.mxu0 0.0
    %570 = vmatpush1.msra.mxu0 0.0
    %571 = vmatprep.subr.mxu0 0.0
    %572 = vmatpush1.msra.mxu0 0.0
    %573 = vmatprep.subr.mxu0 0.0
    %574 = vmatpush1.msra.mxu0 0.0
    %575 = vmatprep.subr.mxu0 0.0
    %576 = vmatpush1.msra.mxu0 0.0
    %577 = vmatprep.subr.mxu0 0.0
    %578 = vmatpush1.msra.mxu0 0.0
    %579 = vmatprep.subr.mxu0 0.0
    %580 = vmatpush1.msra.mxu0 0.0
    %581 = vmatprep.subr.mxu0 0.0
    %582 = vmatpush1.msra.mxu0 0.0
    %583 = vmatprep.subr.mxu0 0.0
    %584 = vmatpush1.msra.mxu0 0.0
    %585 = vmatprep.subr.mxu0 0.0
    %586 = vmatpush1.msra.mxu0 0.0
    %587 = vmatprep.subr.mxu0 0.0
    %588 = vmatpush1.msra.mxu0 0.0
    %589 = vmatprep.subr.mxu0 0.0
    %590 = vmatpush1.msra.mxu0 0.0
    %591 = vmatprep.subr.mxu0 0.0
    %592 = vmatpush1.msra.mxu0 0.0
    %593 = vmatprep.subr.mxu0 0.0
    %594 = vmatpush1.msra.mxu0 0.0
    %595 = vmatprep.subr.mxu0 0.0
    %596 = vmatpush1.msra.mxu0 0.0
    %597 = vmatprep.subr.mxu0 0.0
    %598 = vmatpush1.msra.mxu0 0.0
    %599 = vmatprep.subr.mxu0 0.0
    %600 = vmatpush1.msra.mxu0 0.0
    %601 = vmatprep.subr.mxu0 0.0
    %602 = vmatpush1.msra.mxu0 0.0
    %603 = vmatprep.subr.mxu0 0.0
    %604 = vmatpush1.msra.mxu0 0.0
    %605 = vmatprep.subr.mxu0 0.0
    %606 = vmatpush1.msra.mxu0 0.0
    %607 = vmatprep.subr.mxu0 0.0
    %608 = vmatpush1.msra.mxu0 0.0
    %609 = vmatprep.subr.mxu0 0.0
    %610 = vmatpush1.msra.mxu0 0.0
    %611 = vmatprep.mubr.f32.mxu0 0.0
    %612 = vmatmul.mubr.f32.gmra.mrb[0].mxu0 %v545
    %v613 = vpop.f32.mrb[0].mxu0
    %v614 = vadd.f32 0.0, %v613
    %v615 = vpop.f32.mrb[0].mxu0
    %616 = vdwg.mxu0
    %v618 = vsel %vm521, %v543, 0
    %620 = vmatprep.subr.mxu0 0.0
    %621 = vmatpush1.msra.mxu0 %v378
    %622 = vmatprep.subr.mxu0 0.0
    %623 = vmatpush1.msra.mxu0 0.0
    %624 = vmatprep.subr.mxu0 0.0
    %625 = vmatpush1.msra.mxu0 0.0
    %626 = vmatprep.subr.mxu0 0.0
    %627 = vmatpush1.msra.mxu0 0.0
    %628 = vmatprep.subr.mxu0 0.0
    %629 = vmatpush1.msra.mxu0 0.0
    %630 = vmatprep.subr.mxu0 0.0
    %631 = vmatpush1.msra.mxu0 0.0
    %632 = vmatprep.subr.mxu0 0.0
    %633 = vmatpush1.msra.mxu0 0.0
    %634 = vmatprep.subr.mxu0 0.0
    %635 = vmatpush1.msra.mxu0 0.0
    %636 = vmatprep.subr.mxu0 0.0
    %637 = vmatpush1.msra.mxu0 0.0
    %638 = vmatprep.subr.mxu0 0.0
    %639 = vmatpush1.msra.mxu0 0.0
    %640 = vmatprep.subr.mxu0 0.0
    %641 = vmatpush1.msra.mxu0 0.0
    %642 = vmatprep.subr.mxu0 0.0
    %643 = vmatpush1.msra.mxu0 0.0
    %644 = vmatprep.subr.mxu0 0.0
    %645 = vmatpush1.msra.mxu0 0.0
    %646 = vmatprep.subr.mxu0 0.0
    %647 = vmatpush1.msra.mxu0 0.0
    %648 = vmatprep.subr.mxu0 0.0
    %649 = vmatpush1.msra.mxu0 0.0
    %650 = vmatprep.subr.mxu0 0.0
    %651 = vmatpush1.msra.mxu0 0.0
    %652 = vmatprep.subr.mxu0 0.0
    %653 = vmatpush1.msra.mxu0 0.0
    %654 = vmatprep.subr.mxu0 0.0
    %655 = vmatpush1.msra.mxu0 0.0
    %656 = vmatprep.subr.mxu0 0.0
    %657 = vmatpush1.msra.mxu0 0.0
    %658 = vmatprep.subr.mxu0 0.0
    %659 = vmatpush1.msra.mxu0 0.0
    %660 = vmatprep.subr.mxu0 0.0
    %661 = vmatpush1.msra.mxu0 0.0
    %662 = vmatprep.subr.mxu0 0.0
    %663 = vmatpush1.msra.mxu0 0.0
    %664 = vmatprep.subr.mxu0 0.0
    %665 = vmatpush1.msra.mxu0 0.0
    %666 = vmatprep.subr.mxu0 0.0
    %667 = vmatpush1.msra.mxu0 0.0
    %668 = vmatprep.subr.mxu0 0.0
    %669 = vmatpush1.msra.mxu0 0.0
    %670 = vmatprep.subr.mxu0 0.0
    %671 = vmatpush1.msra.mxu0 0.0
    %672 = vmatprep.subr.mxu0 0.0
    %673 = vmatpush1.msra.mxu0 0.0
    %674 = vmatprep.subr.mxu0 0.0
    %675 = vmatpush1.msra.mxu0 0.0
    %676 = vmatprep.subr.mxu0 0.0
    %677 = vmatpush1.msra.mxu0 0.0
    %678 = vmatprep.subr.mxu0 0.0
    %679 = vmatpush1.msra.mxu0 0.0
    %680 = vmatprep.subr.mxu0 0.0
    %681 = vmatpush1.msra.mxu0 0.0
    %682 = vmatprep.subr.mxu0 0.0
    %683 = vmatpush1.msra.mxu0 0.0
    %684 = vmatprep.mubr.f32.mxu0 0.0
    %685 = vmatmul.mubr.f32.gmra.mrb[0].mxu0 %v618
    %v686 = vpop.f32.mrb[0].mxu0
    %v687 = vadd.f32 0.0, %v686
    %v688 = vpop.f32.mrb[0].mxu0
    %689 = vdwg.mxu0
    %v690 = vld [vmem:[#allocation7 + $0xc] sm:$0xf]
    %v691 = vld [vmem:[#allocation7 + $0x24] sm:$0xf]
    %v692 = vld [vmem:[#allocation7 + $0x3c] sm:$0xf]
    %v693 = vld [vmem:[#allocation7 + $0x54] sm:$0xf]
    %v694 = vld [vmem:[#allocation7 + $0x6c] sm:$0xf]
    %v695 = vld [vmem:[#allocation7 + $0x84] sm:$0xf]
    %v696 = vld [vmem:[#allocation7 + $0x9c] sm:$0xf]
    %v697 = vld [vmem:[#allocation7 + $0xb4] sm:$0xf]
    %v698 = vld [vmem:[#allocation7 + $0xcc] sm:$0xf]
    %v699 = vld [vmem:[#allocation7 + $0xe4] sm:$0xf]
    %v700 = vld [vmem:[#allocation7 + $0xfc] sm:$0xf]
    %v701 = vld [vmem:[#allocation7 + $0x114] sm:$0xf]
    %v702 = vld [vmem:[#allocation7 + $0x12c] sm:$0xf]
    %v703 = vld [vmem:[#allocation7 + $0x144] sm:$0xf]
    %v704 = vld [vmem:[#allocation7 + $0x15c] sm:$0xf]
    %v705 = vld [vmem:[#allocation7 + $0x174] sm:$0xf]
    %v706 = vpack.c.bf16 %v687, %v614
    %v707 = vld [vmem:[#allocation13 + $0x3] ss:$0 sm:$0xff]
    %v724 = vunpack.c.l.b16 %v690
    %v725 = vunpack.c.l.b16 %v691
    %v726 = vunpack.c.l.b16 %v692
    %v727 = vunpack.c.l.b16 %v693
    %v728 = vunpack.c.l.b16 %v694
    %v729 = vunpack.c.l.b16 %v695
    %v730 = vunpack.c.l.b16 %v696
    %v731 = vunpack.c.l.b16 %v697
    %v732 = vunpack.c.l.b16 %v698
    %v733 = vunpack.c.l.b16 %v699
    %v734 = vunpack.c.l.b16 %v700
    %v735 = vunpack.c.l.b16 %v701
    %v736 = vunpack.c.l.b16 %v702
    %v737 = vunpack.c.l.b16 %v703
    %v738 = vunpack.c.l.b16 %v704
    %v739 = vunpack.c.l.b16 %v705
    %v740 = vpack.c.b16 %v725, %v724
    %v741 = vpack.c.b16 %v727, %v726
    %v742 = vpack.c.b16 %v729, %v728
    %v743 = vpack.c.b16 %v731, %v730
    %v744 = vpack.c.b16 %v733, %v732
    %v745 = vpack.c.b16 %v735, %v734
    %v746 = vpack.c.b16 %v737, %v736
    %v747 = vpack.c.b16 %v739, %v738
    %756 = vmatprep.subr.bf16.mxu0 0
    %757 = vmatpush1.bf16.msra.mxu0 %v740
    %758 = vmatprep.subr.bf16.mxu0 0
    %759 = vmatpush1.bf16.msra.mxu0 %v741
    %760 = vmatprep.subr.bf16.mxu0 0
    %761 = vmatpush1.bf16.msra.mxu0 %v742
    %762 = vmatprep.subr.bf16.mxu0 0
    %763 = vmatpush1.bf16.msra.mxu0 %v743
    %764 = vmatprep.subr.bf16.mxu0 0
    %765 = vmatpush1.bf16.msra.mxu0 %v744
    %766 = vmatprep.subr.bf16.mxu0 0
    %767 = vmatpush1.bf16.msra.mxu0 %v745
    %768 = vmatprep.subr.bf16.mxu0 0
    %769 = vmatpush1.bf16.msra.mxu0 %v746
    %770 = vmatprep.subr.bf16.mxu0 0
    %771 = vmatpush1.bf16.msra.mxu0 %v747
    %772 = vmatprep.subr.bf16.mxu0 0
    %773 = vmatpush1.bf16.msra.mxu0 0
    %774 = vmatprep.subr.bf16.mxu0 0
    %775 = vmatpush1.bf16.msra.mxu0 0
    %776 = vmatprep.subr.bf16.mxu0 0
    %777 = vmatpush1.bf16.msra.mxu0 0
    %778 = vmatprep.subr.bf16.mxu0 0
    %779 = vmatpush1.bf16.msra.mxu0 0
    %780 = vmatprep.subr.bf16.mxu0 0
    %781 = vmatpush1.bf16.msra.mxu0 0
    %782 = vmatprep.subr.bf16.mxu0 0
    %783 = vmatpush1.bf16.msra.mxu0 0
    %784 = vmatprep.subr.bf16.mxu0 0
    %785 = vmatpush1.bf16.msra.mxu0 0
    %786 = vmatprep.subr.bf16.mxu0 0
    %787 = vmatpush1.bf16.msra.mxu0 0
    %788 = vmatprep.mubr.bf16.mxu0 0
    %789 = vmatmul.mubr.bf16.gmra.mrb[0].mxu0 %v706
    %v790 = vpop.f32.mrb[0].mxu0
    %v791 = vadd.f32 %v707, %v790
    %v792 = vpop.f32.mrb[0].mxu0
    %v793 = vpop.f32.mrb[0].mxu0
    %v794 = vadd.f32 %v707, %v793
    %v795 = vpop.f32.mrb[0].mxu0
    %796 = vdwg.mxu0
    %v797 = vadd.f32 %v123, %v791
    %v798 = vadd.f32 %v124, %v794
    %v799 = vld [vmem:[#allocation13 + $0x5] ss:$0 sm:$0xff]
    %v800 = vld [vmem:[#allocation13 + $0x6] ss:$0 sm:$0xff]
    %801 = vadd.xlane.f32.xlu0 %v797
    %v802 = vpop.xlane.xlu0 %801
    %803 = vadd.xlane.f32.xlu0 %v798
    %v804 = vpop.xlane.xlu0 %803
    %v805 = vrcp.pop 128.0
    %v806 = vmul.f32 %v802, %v805
    %v807 = vmul.f32 %v804, %v805
    %v808 = vsub.f32 %v797, %v806
    %v809 = vsub.f32 %v798, %v807
    %v810 = vmul.f32 %v808, %v808
    %v811 = vmul.f32 %v809, %v809
    %812 = vadd.xlane.f32.xlu0 %v810
    %v813 = vpop.xlane.xlu0 %812
    %814 = vadd.xlane.f32.xlu0 %v811
    %v815 = vpop.xlane.xlu0 %814
    %v816 = vmul.f32 %v813, %v805
    %v817 = vmul.f32 %v815, %v805
    %v818 = vadd.f32 %v816, 1e-05
    %v819 = vadd.f32 %v817, 1e-05
    %v820 = vrsqrt.pop %v818
    %v821 = vrsqrt.pop %v819
    %v822 = vmul.f32 %v808, %v820
    %v823 = vmul.f32 %v809, %v821
    %v824 = vmul.f32 %v822, %v799
    %v825 = vmul.f32 %v823, %v799
    %v826 = vadd.f32 %v824, %v800
    %v827 = vadd.f32 %v825, %v800
    %v828 = vld [vmem:[#allocation7 + $0x10] sm:$0xff]
    %v829 = vld [vmem:[#allocation7 + $0x28] sm:$0xff]
    %v830 = vld [vmem:[#allocation7 + $0x40] sm:$0xff]
    %v831 = vld [vmem:[#allocation7 + $0x58] sm:$0xff]
    %v832 = vld [vmem:[#allocation7 + $0x70] sm:$0xff]
    %v833 = vld [vmem:[#allocation7 + $0x88] sm:$0xff]
    %v834 = vld [vmem:[#allocation7 + $0xa0] sm:$0xff]
    %v835 = vld [vmem:[#allocation7 + $0xb8] sm:$0xff]
    %v836 = vld [vmem:[#allocation7 + $0xd0] sm:$0xff]
    %v837 = vld [vmem:[#allocation7 + $0xe8] sm:$0xff]
    %v838 = vld [vmem:[#allocation7 + $0x100] sm:$0xff]
    %v839 = vld [vmem:[#allocation7 + $0x118] sm:$0xff]
    %v840 = vld [vmem:[#allocation7 + $0x130] sm:$0xff]
    %v841 = vld [vmem:[#allocation7 + $0x148] sm:$0xff]
    %v842 = vld [vmem:[#allocation7 + $0x160] sm:$0xff]
    %v843 = vld [vmem:[#allocation7 + $0x178] sm:$0xff]
    %v844 = vpack.c.bf16 %v827, %v826
    %s845 = scalar_lea.vmem [#allocation13], 17
    %v846 = vld [vmem:[%s845] ss:$8 sm:$0x3]
    %v848 = vlaneseq
    %v849 = vshrl.u32 %v848, 7
    %v850 = vsub.s32 0, %v849
    %v851 = vrot.slane %v846, %v850
    %v852 = vlaneseq
    %v853 = vshrl.u32 %v852, 7
    %v854 = vsub.s32 1, %v853
    %v855 = vrot.slane %v846, %v854
    %v874 = vunpack.c.l.b16 %v828
    %v875 = vunpack.c.h.b16 %v828
    %v876 = vunpack.c.l.b16 %v829
    %v877 = vunpack.c.h.b16 %v829
    %v878 = vunpack.c.l.b16 %v830
    %v879 = vunpack.c.h.b16 %v830
    %v880 = vunpack.c.l.b16 %v831
    %v881 = vunpack.c.h.b16 %v831
    %v882 = vunpack.c.l.b16 %v832
    %v883 = vunpack.c.h.b16 %v832
    %v884 = vunpack.c.l.b16 %v833
    %v885 = vunpack.c.h.b16 %v833
    %v886 = vunpack.c.l.b16 %v834
    %v887 = vunpack.c.h.b16 %v834
    %v888 = vunpack.c.l.b16 %v835
    %v889 = vunpack.c.h.b16 %v835
    %v890 = vunpack.c.l.b16 %v836
    %v891 = vunpack.c.h.b16 %v836
    %v892 = vunpack.c.l.b16 %v837
    %v893 = vunpack.c.h.b16 %v837
    %v894 = vunpack.c.l.b16 %v838
    %v895 = vunpack.c.h.b16 %v838
    %v896 = vunpack.c.l.b16 %v839
    %v897 = vunpack.c.h.b16 %v839
    %v898 = vunpack.c.l.b16 %v840
    %v899 = vunpack.c.h.b16 %v840
    %v900 = vunpack.c.l.b16 %v841
    %v901 = vunpack.c.h.b16 %v841
    %v902 = vunpack.c.l.b16 %v842
    %v903 = vunpack.c.h.b16 %v842
    %v904 = vunpack.c.l.b16 %v843
    %v905 = vunpack.c.h.b16 %v843
    %v906 = vpack.c.b16 %v876, %v874
    %v907 = vpack.c.b16 %v877, %v875
    %v908 = vpack.c.b16 %v880, %v878
    %v909 = vpack.c.b16 %v881, %v879
    %v910 = vpack.c.b16 %v884, %v882
    %v911 = vpack.c.b16 %v885, %v883
    %v912 = vpack.c.b16 %v888, %v886
    %v913 = vpack.c.b16 %v889, %v887
    %v914 = vpack.c.b16 %v892, %v890
    %v915 = vpack.c.b16 %v893, %v891
    %v916 = vpack.c.b16 %v896, %v894
    %v917 = vpack.c.b16 %v897, %v895
    %v918 = vpack.c.b16 %v900, %v898
    %v919 = vpack.c.b16 %v901, %v899
    %v920 = vpack.c.b16 %v904, %v902
    %v921 = vpack.c.b16 %v905, %v903
    %938 = vmatprep.subr.bf16.mxu0 %v907
    %939 = vmatpush1.bf16.msra.mxu0 %v906
    %940 = vmatprep.subr.bf16.mxu0 %v909
    %941 = vmatpush1.bf16.msra.mxu0 %v908
    %942 = vmatprep.subr.bf16.mxu0 %v911
    %943 = vmatpush1.bf16.msra.mxu0 %v910
    %944 = vmatprep.subr.bf16.mxu0 %v913
    %945 = vmatpush1.bf16.msra.mxu0 %v912
    %946 = vmatprep.subr.bf16.mxu0 %v915
    %947 = vmatpush1.bf16.msra.mxu0 %v914
    %948 = vmatprep.subr.bf16.mxu0 %v917
    %949 = vmatpush1.bf16.msra.mxu0 %v916
    %950 = vmatprep.subr.bf16.mxu0 %v919
    %951 = vmatpush1.bf16.msra.mxu0 %v918
    %952 = vmatprep.subr.bf16.mxu0 %v921
    %953 = vmatpush1.bf16.msra.mxu0 %v920
    %954 = vmatprep.subr.bf16.mxu0 0
    %955 = vmatpush1.bf16.msra.mxu0 0
    %956 = vmatprep.subr.bf16.mxu0 0
    %957 = vmatpush1.bf16.msra.mxu0 0
    %958 = vmatprep.subr.bf16.mxu0 0
    %959 = vmatpush1.bf16.msra.mxu0 0
    %960 = vmatprep.subr.bf16.mxu0 0
    %961 = vmatpush1.bf16.msra.mxu0 0
    %962 = vmatprep.subr.bf16.mxu0 0
    %963 = vmatpush1.bf16.msra.mxu0 0
    %964 = vmatprep.subr.bf16.mxu0 0
    %965 = vmatpush1.bf16.msra.mxu0 0
    %966 = vmatprep.subr.bf16.mxu0 0
    %967 = vmatpush1.bf16.msra.mxu0 0
    %968 = vmatprep.subr.bf16.mxu0 0
    %969 = vmatpush1.bf16.msra.mxu0 0
    %970 = vmatprep.mubr.bf16.mxu0 0
    %971 = vmatmul.mubr.bf16.gmra.mrb[0].mxu0 %v844
    %v972 = vpop.f32.mrb[0].mxu0
    %v973 = vadd.f32 %v851, %v972
    %v974 = vpop.f32.mrb[0].mxu0
    %v975 = vadd.f32 %v855, %v974
    %v976 = vpop.f32.mrb[0].mxu0
    %v977 = vadd.f32 %v851, %v976
    %v978 = vpop.f32.mrb[0].mxu0
    %v979 = vadd.f32 %v855, %v978
    %980 = vdwg.mxu0
    %v981 = vmax.f32 %v973, 0.0
    %v982 = vmax.f32 %v975, 0.0
    %v983 = vmax.f32 %v977, 0.0
    %v984 = vmax.f32 %v979, 0.0
    %v985 = vld [vmem:[#allocation8] sm:$0xf]
    %v986 = vld [vmem:[#allocation8 + $0x4] sm:$0xf]
    %v987 = vld [vmem:[#allocation8 + $0x8] sm:$0xf]
    %v988 = vld [vmem:[#allocation8 + $0xc] sm:$0xf]
    %v989 = vld [vmem:[#allocation8 + $0x10] sm:$0xf]
    %v990 = vld [vmem:[#allocation8 + $0x14] sm:$0xf]
    %v991 = vld [vmem:[#allocation8 + $0x18] sm:$0xf]
    %v992 = vld [vmem:[#allocation8 + $0x1c] sm:$0xf]
    %v993 = vld [vmem:[#allocation8 + $0x20] sm:$0xf]
    %v994 = vld [vmem:[#allocation8 + $0x24] sm:$0xf]
    %v995 = vld [vmem:[#allocation8 + $0x28] sm:$0xf]
    %v996 = vld [vmem:[#allocation8 + $0x2c] sm:$0xf]
    %v997 = vld [vmem:[#allocation8 + $0x30] sm:$0xf]
    %v998 = vld [vmem:[#allocation8 + $0x34] sm:$0xf]
    %v999 = vld [vmem:[#allocation8 + $0x38] sm:$0xf]
    %v1000 = vld [vmem:[#allocation8 + $0x3c] sm:$0xf]
    %v1001 = vld [vmem:[#allocation8 + $0x40] sm:$0xf]
    %v1002 = vld [vmem:[#allocation8 + $0x44] sm:$0xf]
    %v1003 = vld [vmem:[#allocation8 + $0x48] sm:$0xf]
    %v1004 = vld [vmem:[#allocation8 + $0x4c] sm:$0xf]
    %v1005 = vld [vmem:[#allocation8 + $0x50] sm:$0xf]
    %v1006 = vld [vmem:[#allocation8 + $0x54] sm:$0xf]
    %v1007 = vld [vmem:[#allocation8 + $0x58] sm:$0xf]
    %v1008 = vld [vmem:[#allocation8 + $0x5c] sm:$0xf]
    %v1009 = vld [vmem:[#allocation8 + $0x60] sm:$0xf]
    %v1010 = vld [vmem:[#allocation8 + $0x64] sm:$0xf]
    %v1011 = vld [vmem:[#allocation8 + $0x68] sm:$0xf]
    %v1012 = vld [vmem:[#allocation8 + $0x6c] sm:$0xf]
    %v1013 = vld [vmem:[#allocation8 + $0x70] sm:$0xf]
    %v1014 = vld [vmem:[#allocation8 + $0x74] sm:$0xf]
    %v1015 = vld [vmem:[#allocation8 + $0x78] sm:$0xf]
    %v1016 = vld [vmem:[#allocation8 + $0x7c] sm:$0xf]
    %v1017 = vpack.c.bf16 %v983, %v981
    %v1018 = vpack.c.bf16 %v984, %v982
    %v1019 = vld [vmem:[#allocation13 + $0x4] ss:$0 sm:$0xff]
    %v1052 = vunpack.c.l.b16 %v985
    %v1053 = vunpack.c.l.b16 %v986
    %v1054 = vunpack.c.l.b16 %v987
    %v1055 = vunpack.c.l.b16 %v988
    %v1056 = vunpack.c.l.b16 %v989
    %v1057 = vunpack.c.l.b16 %v990
    %v1058 = vunpack.c.l.b16 %v991
    %v1059 = vunpack.c.l.b16 %v992
    %v1060 = vunpack.c.l.b16 %v993
    %v1061 = vunpack.c.l.b16 %v994
    %v1062 = vunpack.c.l.b16 %v995
    %v1063 = vunpack.c.l.b16 %v996
    %v1064 = vunpack.c.l.b16 %v997
    %v1065 = vunpack.c.l.b16 %v998
    %v1066 = vunpack.c.l.b16 %v999
    %v1067 = vunpack.c.l.b16 %v1000
    %v1068 = vunpack.c.l.b16 %v1001
    %v1069 = vunpack.c.l.b16 %v1002
    %v1070 = vunpack.c.l.b16 %v1003
    %v1071 = vunpack.c.l.b16 %v1004
    %v1072 = vunpack.c.l.b16 %v1005
    %v1073 = vunpack.c.l.b16 %v1006
    %v1074 = vunpack.c.l.b16 %v1007
    %v1075 = vunpack.c.l.b16 %v1008
    %v1076 = vunpack.c.l.b16 %v1009
    %v1077 = vunpack.c.l.b16 %v1010
    %v1078 = vunpack.c.l.b16 %v1011
    %v1079 = vunpack.c.l.b16 %v1012
    %v1080 = vunpack.c.l.b16 %v1013
    %v1081 = vunpack.c.l.b16 %v1014
    %v1082 = vunpack.c.l.b16 %v1015
    %v1083 = vunpack.c.l.b16 %v1016
    %v1084 = vpack.c.b16 %v1053, %v1052
    %v1085 = vpack.c.b16 %v1055, %v1054
    %v1086 = vpack.c.b16 %v1057, %v1056
    %v1087 = vpack.c.b16 %v1059, %v1058
    %v1088 = vpack.c.b16 %v1061, %v1060
    %v1089 = vpack.c.b16 %v1063, %v1062
    %v1090 = vpack.c.b16 %v1065, %v1064
    %v1091 = vpack.c.b16 %v1067, %v1066
    %v1092 = vpack.c.b16 %v1069, %v1068
    %v1093 = vpack.c.b16 %v1071, %v1070
    %v1094 = vpack.c.b16 %v1073, %v1072
    %v1095 = vpack.c.b16 %v1075, %v1074
    %v1096 = vpack.c.b16 %v1077, %v1076
    %v1097 = vpack.c.b16 %v1079, %v1078
    %v1098 = vpack.c.b16 %v1081, %v1080
    %v1099 = vpack.c.b16 %v1083, %v1082
    %1116 = vmatprep.subr.bf16.mxu0 0
    %1117 = vmatpush1.bf16.msra.mxu0 %v1084
    %1118 = vmatprep.subr.bf16.mxu0 0
    %1119 = vmatpush1.bf16.msra.mxu0 %v1085
    %1120 = vmatprep.subr.bf16.mxu0 0
    %1121 = vmatpush1.bf16.msra.mxu0 %v1086
    %1122 = vmatprep.subr.bf16.mxu0 0
    %1123 = vmatpush1.bf16.msra.mxu0 %v1087
    %1124 = vmatprep.subr.bf16.mxu0 0
    %1125 = vmatpush1.bf16.msra.mxu0 %v1088
    %1126 = vmatprep.subr.bf16.mxu0 0
    %1127 = vmatpush1.bf16.msra.mxu0 %v1089
    %1128 = vmatprep.subr.bf16.mxu0 0
    %1129 = vmatpush1.bf16.msra.mxu0 %v1090
    %1130 = vmatprep.subr.bf16.mxu0 0
    %1131 = vmatpush1.bf16.msra.mxu0 %v1091
    %1132 = vmatprep.subr.bf16.mxu0 0
    %1133 = vmatpush1.bf16.msra.mxu0 %v1092
    %1134 = vmatprep.subr.bf16.mxu0 0
    %1135 = vmatpush1.bf16.msra.mxu0 %v1093
    %1136 = vmatprep.subr.bf16.mxu0 0
    %1137 = vmatpush1.bf16.msra.mxu0 %v1094
    %1138 = vmatprep.subr.bf16.mxu0 0
    %1139 = vmatpush1.bf16.msra.mxu0 %v1095
    %1140 = vmatprep.subr.bf16.mxu0 0
    %1141 = vmatpush1.bf16.msra.mxu0 %v1096
    %1142 = vmatprep.subr.bf16.mxu0 0
    %1143 = vmatpush1.bf16.msra.mxu0 %v1097
    %1144 = vmatprep.subr.bf16.mxu0 0
    %1145 = vmatpush1.bf16.msra.mxu0 %v1098
    %1146 = vmatprep.subr.bf16.mxu0 0
    %1147 = vmatpush1.bf16.msra.mxu0 %v1099
    %1148 = vmatprep.mubr.bf16.mxu0 %v1018
    %1149 = vmatmul.mubr.bf16.gmra.mrb[0].mxu0 %v1017
    %v1150 = vpop.f32.mrb[0].mxu0
    %v1151 = vadd.f32 %v1019, %v1150
    %v1152 = vpop.f32.mrb[0].mxu0
    %v1153 = vpop.f32.mrb[0].mxu0
    %v1154 = vadd.f32 %v1019, %v1153
    %v1155 = vpop.f32.mrb[0].mxu0
    %1156 = vdwg.mxu0
    %v1157 = vadd.f32 %v826, %v1151
    %v1158 = vadd.f32 %v827, %v1154
    %v1159 = vld [vmem:[#allocation13 + $0x7] ss:$0 sm:$0xff]
    %v1160 = vld [vmem:[#allocation13 + $0x10] ss:$0 sm:$0xff]
    %1161 = vadd.xlane.f32.xlu0 %v1157
    %v1162 = vpop.xlane.xlu0 %1161
    %1163 = vadd.xlane.f32.xlu0 %v1158
    %v1164 = vpop.xlane.xlu0 %1163
    %v1165 = vmul.f32 %v1162, %v805
    %v1166 = vmul.f32 %v1164, %v805
    %v1167 = vsub.f32 %v1157, %v1165
    %v1168 = vsub.f32 %v1158, %v1166
    %v1169 = vmul.f32 %v1167, %v1167
    %v1170 = vmul.f32 %v1168, %v1168
    %1171 = vadd.xlane.f32.xlu0 %v1169
    %v1172 = vpop.xlane.xlu0 %1171
    %1173 = vadd.xlane.f32.xlu0 %v1170
    %v1174 = vpop.xlane.xlu0 %1173
    %v1175 = vmul.f32 %v1172, %v805
    %v1176 = vmul.f32 %v1174, %v805
    %v1177 = vadd.f32 %v1175, 1e-05
    %v1178 = vadd.f32 %v1176, 1e-05
    %v1179 = vrsqrt.pop %v1177
    %v1180 = vrsqrt.pop %v1178
    %v1181 = vmul.f32 %v1167, %v1179
    %v1182 = vmul.f32 %v1168, %v1180
    %v1183 = vmul.f32 %v1181, %v1159
    %v1184 = vmul.f32 %v1182, %v1159
    %v1185 = vadd.f32 %v1183, %v1160
    %v1186 = vadd.f32 %v1184, %v1160
    %v1187 = vld [vmem:[#allocation5] sm:$0xff]
    %v1188 = vld [vmem:[#allocation5 + $0x8] sm:$0xff]
    %v1189 = vld [vmem:[#allocation10] sm:$0xff]
    %v1190 = vld [vmem:[#allocation10 + $0x8] sm:$0xf]
    %v1191 = vld [vmem:[#allocation10 + $0x28] sm:$0xff]
    %v1192 = vld [vmem:[#allocation10 + $0x30] sm:$0xf]
    %v1193 = vld [vmem:[#allocation10 + $0x50] sm:$0xff]
    %v1194 = vld [vmem:[#allocation10 + $0x58] sm:$0xf]
    %v1195 = vld [vmem:[#allocation10 + $0x78] sm:$0xff]
    %v1196 = vld [vmem:[#allocation10 + $0x80] sm:$0xf]
    %v1197 = vld [vmem:[#allocation10 + $0xa0] sm:$0xff]
    %v1198 = vld [vmem:[#allocation10 + $0xa8] sm:$0xf]
    %v1199 = vld [vmem:[#allocation10 + $0xc8] sm:$0xff]
    %v1200 = vld [vmem:[#allocation10 + $0xd0] sm:$0xf]
    %v1201 = vld [vmem:[#allocation10 + $0xf0] sm:$0xff]
    %v1202 = vld [vmem:[#allocation10 + $0xf8] sm:$0xf]
    %v1203 = vld [vmem:[#allocation10 + $0x118] sm:$0xff]
    %v1204 = vld [vmem:[#allocation10 + $0x120] sm:$0xf]
    %v1205 = vld [vmem:[#allocation10 + $0x140] sm:$0xff]
    %v1206 = vld [vmem:[#allocation10 + $0x148] sm:$0xf]
    %v1207 = vld [vmem:[#allocation10 + $0x168] sm:$0xff]
    %v1208 = vld [vmem:[#allocation10 + $0x170] sm:$0xf]
    %v1209 = vld [vmem:[#allocation10 + $0x190] sm:$0xff]
    %v1210 = vld [vmem:[#allocation10 + $0x198] sm:$0xf]
    %v1211 = vld [vmem:[#allocation10 + $0x1b8] sm:$0xff]
    %v1212 = vld [vmem:[#allocation10 + $0x1c0] sm:$0xf]
    %v1213 = vld [vmem:[#allocation10 + $0x1e0] sm:$0xff]
    %v1214 = vld [vmem:[#allocation10 + $0x1e8] sm:$0xf]
    %v1215 = vld [vmem:[#allocation10 + $0x208] sm:$0xff]
    %v1216 = vld [vmem:[#allocation10 + $0x210] sm:$0xf]
    %v1217 = vld [vmem:[#allocation10 + $0x230] sm:$0xff]
    %v1218 = vld [vmem:[#allocation10 + $0x238] sm:$0xf]
    %v1219 = vld [vmem:[#allocation10 + $0x258] sm:$0xff]
    %v1220 = vld [vmem:[#allocation10 + $0x260] sm:$0xf]
    %v1221 = vpack.c.bf16 %v1188, %v1187
    %v1254 = vunpack.c.l.b16 %v1189
    %v1255 = vunpack.c.h.b16 %v1189
    %v1256 = vunpack.c.l.b16 %v1190
    %v1257 = vunpack.c.l.b16 %v1191
    %v1258 = vunpack.c.h.b16 %v1191
    %v1259 = vunpack.c.l.b16 %v1192
    %v1260 = vunpack.c.l.b16 %v1193
    %v1261 = vunpack.c.h.b16 %v1193
    %v1262 = vunpack.c.l.b16 %v1194
    %v1263 = vunpack.c.l.b16 %v1195
    %v1264 = vunpack.c.h.b16 %v1195
    %v1265 = vunpack.c.l.b16 %v1196
    %v1266 = vunpack.c.l.b16 %v1197
    %v1267 = vunpack.c.h.b16 %v1197
    %v1268 = vunpack.c.l.b16 %v1198
    %v1269 = vunpack.c.l.b16 %v1199
    %v1270 = vunpack.c.h.b16 %v1199
    %v1271 = vunpack.c.l.b16 %v1200
    %v1272 = vunpack.c.l.b16 %v1201
    %v1273 = vunpack.c.h.b16 %v1201
    %v1274 = vunpack.c.l.b16 %v1202
    %v1275 = vunpack.c.l.b16 %v1203
    %v1276 = vunpack.c.h.b16 %v1203
    %v1277 = vunpack.c.l.b16 %v1204
    %v1278 = vunpack.c.l.b16 %v1205
    %v1279 = vunpack.c.h.b16 %v1205
    %v1280 = vunpack.c.l.b16 %v1206
    %v1281 = vunpack.c.l.b16 %v1207
    %v1282 = vunpack.c.h.b16 %v1207
    %v1283 = vunpack.c.l.b16 %v1208
    %v1284 = vunpack.c.l.b16 %v1209
    %v1285 = vunpack.c.h.b16 %v1209
    %v1286 = vunpack.c.l.b16 %v1210
    %v1287 = vunpack.c.l.b16 %v1211
    %v1288 = vunpack.c.h.b16 %v1211
    %v1289 = vunpack.c.l.b16 %v1212
    %v1290 = vunpack.c.l.b16 %v1213
    %v1291 = vunpack.c.h.b16 %v1213
    %v1292 = vunpack.c.l.b16 %v1214
    %v1293 = vunpack.c.l.b16 %v1215
    %v1294 = vunpack.c.h.b16 %v1215
    %v1295 = vunpack.c.l.b16 %v1216
    %v1296 = vunpack.c.l.b16 %v1217
    %v1297 = vunpack.c.h.b16 %v1217
    %v1298 = vunpack.c.l.b16 %v1218
    %v1299 = vunpack.c.l.b16 %v1219
    %v1300 = vunpack.c.h.b16 %v1219
    %v1301 = vunpack.c.l.b16 %v1220
    %v1302 = vpack.c.b16 %v1257, %v1254
    %v1303 = vpack.c.b16 %v1258, %v1255
    %v1304 = vpack.c.b16 %v1259, %v1256
    %v1305 = vpack.c.b16 %v1263, %v1260
    %v1306 = vpack.c.b16 %v1264, %v1261
    %v1307 = vpack.c.b16 %v1265, %v1262
    %v1308 = vpack.c.b16 %v1269, %v1266
    %v1309 = vpack.c.b16 %v1270, %v1267
    %v1310 = vpack.c.b16 %v1271, %v1268
    %v1311 = vpack.c.b16 %v1275, %v1272
    %v1312 = vpack.c.b16 %v1276, %v1273
    %v1313 = vpack.c.b16 %v1277, %v1274
    %v1314 = vpack.c.b16 %v1281, %v1278
    %v1315 = vpack.c.b16 %v1282, %v1279
    %v1316 = vpack.c.b16 %v1283, %v1280
    %v1317 = vpack.c.b16 %v1287, %v1284
    %v1318 = vpack.c.b16 %v1288, %v1285
    %v1319 = vpack.c.b16 %v1289, %v1286
    %v1320 = vpack.c.b16 %v1293, %v1290
    %v1321 = vpack.c.b16 %v1294, %v1291
    %v1322 = vpack.c.b16 %v1295, %v1292
    %v1323 = vpack.c.b16 %v1299, %v1296
    %v1324 = vpack.c.b16 %v1300, %v1297
    %v1325 = vpack.c.b16 %v1301, %v1298
    %1350 = vmatprep.subr.bf16.mxu0 %v1303
    %1351 = vmatpush1.bf16.msra.mxu0 %v1302
    %1352 = vmatprep.subr.bf16.mxu0 %v1306
    %1353 = vmatpush1.bf16.msra.mxu0 %v1305
    %1354 = vmatprep.subr.bf16.mxu0 %v1309
    %1355 = vmatpush1.bf16.msra.mxu0 %v1308
    %1356 = vmatprep.subr.bf16.mxu0 %v1312
    %1357 = vmatpush1.bf16.msra.mxu0 %v1311
    %1358 = vmatprep.subr.bf16.mxu0 %v1315
    %1359 = vmatpush1.bf16.msra.mxu0 %v1314
    %1360 = vmatprep.subr.bf16.mxu0 %v1318
    %1361 = vmatpush1.bf16.msra.mxu0 %v1317
    %1362 = vmatprep.subr.bf16.mxu0 %v1321
    %1363 = vmatpush1.bf16.msra.mxu0 %v1320
    %1364 = vmatprep.subr.bf16.mxu0 %v1324
    %1365 = vmatpush1.bf16.msra.mxu0 %v1323
    %1366 = vmatprep.subr.bf16.mxu0 0
    %1367 = vmatpush1.bf16.msra.mxu0 0
    %1368 = vmatprep.subr.bf16.mxu0 0
    %1369 = vmatpush1.bf16.msra.mxu0 0
    %1370 = vmatprep.subr.bf16.mxu0 0
    %1371 = vmatpush1.bf16.msra.mxu0 0
    %1372 = vmatprep.subr.bf16.mxu0 0
    %1373 = vmatpush1.bf16.msra.mxu0 0
    %1374 = vmatprep.subr.bf16.mxu0 0
    %1375 = vmatpush1.bf16.msra.mxu0 0
    %1376 = vmatprep.subr.bf16.mxu0 0
    %1377 = vmatpush1.bf16.msra.mxu0 0
    %1378 = vmatprep.subr.bf16.mxu0 0
    %1379 = vmatpush1.bf16.msra.mxu0 0
    %1380 = vmatprep.subr.bf16.mxu0 0
    %1381 = vmatpush1.bf16.msra.mxu0 0
    %1382 = vmatprep.mubr.bf16.mxu0 0
    %1383 = vmatmul.mubr.bf16.gmra.mrb[0].mxu0 %v1221
    %v1384 = vpop.f32.mrb[0].mxu0
    %v1385 = vadd.f32 0.0, %v1384
    %v1386 = vpop.f32.mrb[0].mxu0
    %v1387 = vadd.f32 0.0, %v1386
    %v1388 = vpop.f32.mrb[0].mxu0
    %v1389 = vadd.f32 0.0, %v1388
    %v1390 = vpop.f32.mrb[0].mxu0
    %v1391 = vadd.f32 0.0, %v1390
    %1392 = vdwg.mxu0
    %1393 = vmatprep.subr.bf16.mxu0 0
    %1394 = vmatpush1.bf16.msra.mxu0 %v1304
    %1395 = vmatprep.subr.bf16.mxu0 0
    %1396 = vmatpush1.bf16.msra.mxu0 %v1307
    %1397 = vmatprep.subr.bf16.mxu0 0
    %1398 = vmatpush1.bf16.msra.mxu0 %v1310
    %1399 = vmatprep.subr.bf16.mxu0 0
    %1400 = vmatpush1.bf16.msra.mxu0 %v1313
    %1401 = vmatprep.subr.bf16.mxu0 0
    %1402 = vmatpush1.bf16.msra.mxu0 %v1316
    %1403 = vmatprep.subr.bf16.mxu0 0
    %1404 = vmatpush1.bf16.msra.mxu0 %v1319
    %1405 = vmatprep.subr.bf16.mxu0 0
    %1406 = vmatpush1.bf16.msra.mxu0 %v1322
    %1407 = vmatprep.subr.bf16.mxu0 0
    %1408 = vmatpush1.bf16.msra.mxu0 %v1325
    %1409 = vmatprep.subr.bf16.mxu0 0
    %1410 = vmatpush1.bf16.msra.mxu0 0
    %1411 = vmatprep.subr.bf16.mxu0 0
    %1412 = vmatpush1.bf16.msra.mxu0 0
    %1413 = vmatprep.subr.bf16.mxu0 0
    %1414 = vmatpush1.bf16.msra.mxu0 0
    %1415 = vmatprep.subr.bf16.mxu0 0
    %1416 = vmatpush1.bf16.msra.mxu0 0
    %1417 = vmatprep.subr.bf16.mxu0 0
    %1418 = vmatpush1.bf16.msra.mxu0 0
    %1419 = vmatprep.subr.bf16.mxu0 0
    %1420 = vmatpush1.bf16.msra.mxu0 0
    %1421 = vmatprep.subr.bf16.mxu0 0
    %1422 = vmatpush1.bf16.msra.mxu0 0
    %1423 = vmatprep.subr.bf16.mxu0 0
    %1424 = vmatpush1.bf16.msra.mxu0 0
    %1425 = vmatprep.mubr.bf16.mxu0 0
    %1426 = vmatmul.mubr.bf16.gmra.mrb[0].mxu0 %v1221
    %v1427 = vpop.f32.mrb[0].mxu0
    %v1428 = vadd.f32 0.0, %v1427
    %v1429 = vpop.f32.mrb[0].mxu0
    %v1430 = vpop.f32.mrb[0].mxu0
    %v1431 = vadd.f32 0.0, %v1430
    %v1432 = vpop.f32.mrb[0].mxu0
    %1433 = vdwg.mxu0
    %v1434 = vld [vmem:[#allocation13 + $0x12] ss:$0 sm:$0xff]
    %v1435 = vadd.f32 %v1385, %v1434
    %v1436 = vadd.f32 %v1389, %v1434
    %v1437 = vld [vmem:[#allocation13 + $0x13] ss:$0 sm:$0xff]
    %v1438 = vadd.f32 %v1387, %v1437
    %v1439 = vadd.f32 %v1391, %v1437
    %v1440 = vld [vmem:[#allocation13 + $0x14] ss:$0 sm:$0xff]
    %v1441 = vadd.f32 %v1428, %v1440
    %v1442 = vadd.f32 %v1431, %v1440
    %1443 = vmatprep.subr.mxu0 0.0
    %1444 = vmatpush1.xpose.msra.mxu0 %v1438
    %1445 = vmatprep.subr.mxu0 0.0
    %1446 = vmatpush1.xpose.msra.mxu0 0.0
    %1447 = vmatprep.subr.mxu0 0.0
    %1448 = vmatpush1.xpose.msra.mxu0 0.0
    %1449 = vmatprep.subr.mxu0 0.0
    %1450 = vmatpush1.xpose.msra.mxu0 0.0
    %1451 = vmatprep.subr.mxu0 0.0
    %1452 = vmatpush1.xpose.msra.mxu0 0.0
    %1453 = vmatprep.subr.mxu0 0.0
    %1454 = vmatpush1.xpose.msra.mxu0 0.0
    %1455 = vmatprep.subr.mxu0 0.0
    %1456 = vmatpush1.xpose.msra.mxu0 0.0
    %1457 = vmatprep.subr.mxu0 0.0
    %1458 = vmatpush1.xpose.msra.mxu0 0.0
    %1459 = vmatprep.subr.mxu0 0.0
    %1460 = vmatpush1.xpose.msra.mxu0 0.0
    %1461 = vmatprep.subr.mxu0 0.0
    %1462 = vmatpush1.xpose.msra.mxu0 0.0
    %1463 = vmatprep.subr.mxu0 0.0
    %1464 = vmatpush1.xpose.msra.mxu0 0.0
    %1465 = vmatprep.subr.mxu0 0.0
    %1466 = vmatpush1.xpose.msra.mxu0 0.0
    %1467 = vmatprep.subr.mxu0 0.0
    %1468 = vmatpush1.xpose.msra.mxu0 0.0
    %1469 = vmatprep.subr.mxu0 0.0
    %1470 = vmatpush1.xpose.msra.mxu0 0.0
    %1471 = vmatprep.subr.mxu0 0.0
    %1472 = vmatpush1.xpose.msra.mxu0 0.0
    %1473 = vmatprep.subr.mxu0 0.0
    %1474 = vmatpush1.xpose.msra.mxu0 0.0
    %1475 = vmatprep.subr.mxu0 0.0
    %1476 = vmatpush1.xpose.msra.mxu0 0.0
    %1477 = vmatprep.subr.mxu0 0.0
    %1478 = vmatpush1.xpose.msra.mxu0 0.0
    %1479 = vmatprep.subr.mxu0 0.0
    %1480 = vmatpush1.xpose.msra.mxu0 0.0
    %1481 = vmatprep.subr.mxu0 0.0
    %1482 = vmatpush1.xpose.msra.mxu0 0.0
    %1483 = vmatprep.subr.mxu0 0.0
    %1484 = vmatpush1.xpose.msra.mxu0 0.0
    %1485 = vmatprep.subr.mxu0 0.0
    %1486 = vmatpush1.xpose.msra.mxu0 0.0
    %1487 = vmatprep.subr.mxu0 0.0
    %1488 = vmatpush1.xpose.msra.mxu0 0.0
    %1489 = vmatprep.subr.mxu0 0.0
    %1490 = vmatpush1.xpose.msra.mxu0 0.0
    %1491 = vmatprep.subr.mxu0 0.0
    %1492 = vmatpush1.xpose.msra.mxu0 0.0
    %1493 = vmatprep.subr.mxu0 0.0
    %1494 = vmatpush1.xpose.msra.mxu0 0.0
    %1495 = vmatprep.subr.mxu0 0.0
    %1496 = vmatpush1.xpose.msra.mxu0 0.0
    %1497 = vmatprep.subr.mxu0 0.0
    %1498 = vmatpush1.xpose.msra.mxu0 0.0
    %1499 = vmatprep.subr.mxu0 0.0
    %1500 = vmatpush1.xpose.msra.mxu0 0.0
    %1501 = vmatprep.subr.mxu0 0.0
    %1502 = vmatpush1.xpose.msra.mxu0 0.0
    %1503 = vmatprep.subr.mxu0 0.0
    %1504 = vmatpush1.xpose.msra.mxu0 0.0
    %1505 = vmatprep.subr.mxu0 0.0
    %1506 = vmatpush1.xpose.msra.mxu0 0.0
    %1507 = vmatprep.mubr.f32.mxu0 0.0
    %1508 = vmatmul.mubr.f32.gmra.mrb[0].mxu0 %v1435
    %v1509 = vpop.f32.mrb[0].mxu0
    %v1510 = vadd.f32 0.0, %v1509
    %v1511 = vpop.f32.mrb[0].mxu0
    %1512 = vdwg.mxu0
    %1513 = vmatprep.subr.mxu0 0.0
    %1514 = vmatpush1.xpose.msra.mxu0 %v1439
    %1515 = vmatprep.subr.mxu0 0.0
    %1516 = vmatpush1.xpose.msra.mxu0 0.0
    %1517 = vmatprep.subr.mxu0 0.0
    %1518 = vmatpush1.xpose.msra.mxu0 0.0
    %1519 = vmatprep.subr.mxu0 0.0
    %1520 = vmatpush1.xpose.msra.mxu0 0.0
    %1521 = vmatprep.subr.mxu0 0.0
    %1522 = vmatpush1.xpose.msra.mxu0 0.0
    %1523 = vmatprep.subr.mxu0 0.0
    %1524 = vmatpush1.xpose.msra.mxu0 0.0
    %1525 = vmatprep.subr.mxu0 0.0
    %1526 = vmatpush1.xpose.msra.mxu0 0.0
    %1527 = vmatprep.subr.mxu0 0.0
    %1528 = vmatpush1.xpose.msra.mxu0 0.0
    %1529 = vmatprep.subr.mxu0 0.0
    %1530 = vmatpush1.xpose.msra.mxu0 0.0
    %1531 = vmatprep.subr.mxu0 0.0
    %1532 = vmatpush1.xpose.msra.mxu0 0.0
    %1533 = vmatprep.subr.mxu0 0.0
    %1534 = vmatpush1.xpose.msra.mxu0 0.0
    %1535 = vmatprep.subr.mxu0 0.0
    %1536 = vmatpush1.xpose.msra.mxu0 0.0
    %1537 = vmatprep.subr.mxu0 0.0
    %1538 = vmatpush1.xpose.msra.mxu0 0.0
    %1539 = vmatprep.subr.mxu0 0.0
    %1540 = vmatpush1.xpose.msra.mxu0 0.0
    %1541 = vmatprep.subr.mxu0 0.0
    %1542 = vmatpush1.xpose.msra.mxu0 0.0
    %1543 = vmatprep.subr.mxu0 0.0
    %1544 = vmatpush1.xpose.msra.mxu0 0.0
    %1545 = vmatprep.subr.mxu0 0.0
    %1546 = vmatpush1.xpose.msra.mxu0 0.0
    %1547 = vmatprep.subr.mxu0 0.0
    %1548 = vmatpush1.xpose.msra.mxu0 0.0
    %1549 = vmatprep.subr.mxu0 0.0
    %1550 = vmatpush1.xpose.msra.mxu0 0.0
    %1551 = vmatprep.subr.mxu0 0.0
    %1552 = vmatpush1.xpose.msra.mxu0 0.0
    %1553 = vmatprep.subr.mxu0 0.0
    %1554 = vmatpush1.xpose.msra.mxu0 0.0
    %1555 = vmatprep.subr.mxu0 0.0
    %1556 = vmatpush1.xpose.msra.mxu0 0.0
    %1557 = vmatprep.subr.mxu0 0.0
    %1558 = vmatpush1.xpose.msra.mxu0 0.0
    %1559 = vmatprep.subr.mxu0 0.0
    %1560 = vmatpush1.xpose.msra.mxu0 0.0
    %1561 = vmatprep.subr.mxu0 0.0
    %1562 = vmatpush1.xpose.msra.mxu0 0.0
    %1563 = vmatprep.subr.mxu0 0.0
    %1564 = vmatpush1.xpose.msra.mxu0 0.0
    %1565 = vmatprep.subr.mxu0 0.0
    %1566 = vmatpush1.xpose.msra.mxu0 0.0
    %1567 = vmatprep.subr.mxu0 0.0
    %1568 = vmatpush1.xpose.msra.mxu0 0.0
    %1569 = vmatprep.subr.mxu0 0.0
    %1570 = vmatpush1.xpose.msra.mxu0 0.0
    %1571 = vmatprep.subr.mxu0 0.0
    %1572 = vmatpush1.xpose.msra.mxu0 0.0
    %1573 = vmatprep.subr.mxu0 0.0
    %1574 = vmatpush1.xpose.msra.mxu0 0.0
    %1575 = vmatprep.subr.mxu0 0.0
    %1576 = vmatpush1.xpose.msra.mxu0 0.0
    %1577 = vmatprep.mubr.f32.mxu0 0.0
    %1578 = vmatmul.mubr.f32.gmra.mrb[0].mxu0 %v1436
    %v1579 = vpop.f32.mrb[0].mxu0
    %v1580 = vadd.f32 0.0, %v1579
    %v1581 = vpop.f32.mrb[0].mxu0
    %1582 = vdwg.mxu0
    %v1583 = vmul.f32 %v1510, 0.088388346
    %v1584 = vmul.f32 %v1580, 0.088388346
    %v1585 = vsel %vm521, %v1583, -inf
    %1586 = vmax.xlane.f32.xlu0 %v1585
    %v1587 = vpop.xlane.xlu0 %1586
    %v1588 = vsel %vm521, %v1584, -inf
    %1589 = vmax.xlane.f32.xlu0 %v1588
    %v1590 = vpop.xlane.xlu0 %1589
    %v1591 = vsub.f32 %v1583, %v1587
    %v1592 = vsub.f32 %v1584, %v1590
    %v1593 = vmul.f32 %v1591, 1.442695
    %v1594 = vpow.pop %v1593
    %v1595 = vmul.f32 %v1592, 1.442695
    %v1596 = vpow.pop %v1595
    %v1597 = vsel %vm521, %v1594, 0.0
    %1598 = vadd.xlane.f32.xlu0 %v1597
    %v1599 = vpop.xlane.xlu0 %1598
    %v1600 = vsel %vm521, %v1596, 0.0
    %1601 = vadd.xlane.f32.xlu0 %v1600
    %v1602 = vpop.xlane.xlu0 %1601
    %v1603 = vrcp.pop %v1599
    %v1604 = vrcp.pop %v1602
    %v1605 = vmul.f32 %v1594, %v1603
    %v1606 = vmul.f32 %v1596, %v1604
    %v1608 = vsel %vm521, %v1605, 0
    %1610 = vmatprep.subr.mxu0 0.0
    %1611 = vmatpush1.msra.mxu0 %v1441
    %1612 = vmatprep.subr.mxu0 0.0
    %1613 = vmatpush1.msra.mxu0 0.0
    %1614 = vmatprep.subr.mxu0 0.0
    %1615 = vmatpush1.msra.mxu0 0.0
    %1616 = vmatprep.subr.mxu0 0.0
    %1617 = vmatpush1.msra.mxu0 0.0
    %1618 = vmatprep.subr.mxu0 0.0
    %1619 = vmatpush1.msra.mxu0 0.0
    %1620 = vmatprep.subr.mxu0 0.0
    %1621 = vmatpush1.msra.mxu0 0.0
    %1622 = vmatprep.subr.mxu0 0.0
    %1623 = vmatpush1.msra.mxu0 0.0
    %1624 = vmatprep.subr.mxu0 0.0
    %1625 = vmatpush1.msra.mxu0 0.0
    %1626 = vmatprep.subr.mxu0 0.0
    %1627 = vmatpush1.msra.mxu0 0.0
    %1628 = vmatprep.subr.mxu0 0.0
    %1629 = vmatpush1.msra.mxu0 0.0
    %1630 = vmatprep.subr.mxu0 0.0
    %1631 = vmatpush1.msra.mxu0 0.0
    %1632 = vmatprep.subr.mxu0 0.0
    %1633 = vmatpush1.msra.mxu0 0.0
    %1634 = vmatprep.subr.mxu0 0.0
    %1635 = vmatpush1.msra.mxu0 0.0
    %1636 = vmatprep.subr.mxu0 0.0
    %1637 = vmatpush1.msra.mxu0 0.0
    %1638 = vmatprep.subr.mxu0 0.0
    %1639 = vmatpush1.msra.mxu0 0.0
    %1640 = vmatprep.subr.mxu0 0.0
    %1641 = vmatpush1.msra.mxu0 0.0
    %1642 = vmatprep.subr.mxu0 0.0
    %1643 = vmatpush1.msra.mxu0 0.0
    %1644 = vmatprep.subr.mxu0 0.0
    %1645 = vmatpush1.msra.mxu0 0.0
    %1646 = vmatprep.subr.mxu0 0.0
    %1647 = vmatpush1.msra.mxu0 0.0
    %1648 = vmatprep.subr.mxu0 0.0
    %1649 = vmatpush1.msra.mxu0 0.0
    %1650 = vmatprep.subr.mxu0 0.0
    %1651 = vmatpush1.msra.mxu0 0.0
    %1652 = vmatprep.subr.mxu0 0.0
    %1653 = vmatpush1.msra.mxu0 0.0
    %1654 = vmatprep.subr.mxu0 0.0
    %1655 = vmatpush1.msra.mxu0 0.0
    %1656 = vmatprep.subr.mxu0 0.0
    %1657 = vmatpush1.msra.mxu0 0.0
    %1658 = vmatprep.subr.mxu0 0.0
    %1659 = vmatpush1.msra.mxu0 0.0
    %1660 = vmatprep.subr.mxu0 0.0
    %1661 = vmatpush1.msra.mxu0 0.0
    %1662 = vmatprep.subr.mxu0 0.0
    %1663 = vmatpush1.msra.mxu0 0.0
    %1664 = vmatprep.subr.mxu0 0.0
    %1665 = vmatpush1.msra.mxu0 0.0
    %1666 = vmatprep.subr.mxu0 0.0
    %1667 = vmatpush1.msra.mxu0 0.0
    %1668 = vmatprep.subr.mxu0 0.0
    %1669 = vmatpush1.msra.mxu0 0.0
    %1670 = vmatprep.subr.mxu0 0.0
    %1671 = vmatpush1.msra.mxu0 0.0
    %1672 = vmatprep.subr.mxu0 0.0
    %1673 = vmatpush1.msra.mxu0 0.0
    %1674 = vmatprep.mubr.f32.mxu0 0.0
    %1675 = vmatmul.mubr.f32.gmra.mrb[0].mxu0 %v1608
    %v1676 = vpop.f32.mrb[0].mxu0
    %v1677 = vadd.f32 0.0, %v1676
    %v1678 = vpop.f32.mrb[0].mxu0
    %1679 = vdwg.mxu0
    %v1681 = vsel %vm521, %v1606, 0
    %1683 = vmatprep.subr.mxu0 0.0
    %1684 = vmatpush1.msra.mxu0 %v1442
    %1685 = vmatprep.subr.mxu0 0.0
    %1686 = vmatpush1.msra.mxu0 0.0
    %1687 = vmatprep.subr.mxu0 0.0
    %1688 = vmatpush1.msra.mxu0 0.0
    %1689 = vmatprep.subr.mxu0 0.0
    %1690 = vmatpush1.msra.mxu0 0.0
    %1691 = vmatprep.subr.mxu0 0.0
    %1692 = vmatpush1.msra.mxu0 0.0
    %1693 = vmatprep.subr.mxu0 0.0
    %1694 = vmatpush1.msra.mxu0 0.0
    %1695 = vmatprep.subr.mxu0 0.0
    %1696 = vmatpush1.msra.mxu0 0.0
    %1697 = vmatprep.subr.mxu0 0.0
    %1698 = vmatpush1.msra.mxu0 0.0
    %1699 = vmatprep.subr.mxu0 0.0
    %1700 = vmatpush1.msra.mxu0 0.0
    %1701 = vmatprep.subr.mxu0 0.0
    %1702 = vmatpush1.msra.mxu0 0.0
    %1703 = vmatprep.subr.mxu0 0.0
    %1704 = vmatpush1.msra.mxu0 0.0
    %1705 = vmatprep.subr.mxu0 0.0
    %1706 = vmatpush1.msra.mxu0 0.0
    %1707 = vmatprep.subr.mxu0 0.0
    %1708 = vmatpush1.msra.mxu0 0.0
    %1709 = vmatprep.subr.mxu0 0.0
    %1710 = vmatpush1.msra.mxu0 0.0
    %1711 = vmatprep.subr.mxu0 0.0
    %1712 = vmatpush1.msra.mxu0 0.0
    %1713 = vmatprep.subr.mxu0 0.0
    %1714 = vmatpush1.msra.mxu0 0.0
    %1715 = vmatprep.subr.mxu0 0.0
    %1716 = vmatpush1.msra.mxu0 0.0
    %1717 = vmatprep.subr.mxu0 0.0
    %1718 = vmatpush1.msra.mxu0 0.0
    %1719 = vmatprep.subr.mxu0 0.0
    %1720 = vmatpush1.msra.mxu0 0.0
    %1721 = vmatprep.subr.mxu0 0.0
    %1722 = vmatpush1.msra.mxu0 0.0
    %1723 = vmatprep.subr.mxu0 0.0
    %1724 = vmatpush1.msra.mxu0 0.0
    %1725 = vmatprep.subr.mxu0 0.0
    %1726 = vmatpush1.msra.mxu0 0.0
    %1727 = vmatprep.subr.mxu0 0.0
    %1728 = vmatpush1.msra.mxu0 0.0
    %1729 = vmatprep.subr.mxu0 0.0
    %1730 = vmatpush1.msra.mxu0 0.0
    %1731 = vmatprep.subr.mxu0 0.0
    %1732 = vmatpush1.msra.mxu0 0.0
    %1733 = vmatprep.subr.mxu0 0.0
    %1734 = vmatpush1.msra.mxu0 0.0
    %1735 = vmatprep.subr.mxu0 0.0
    %1736 = vmatpush1.msra.mxu0 0.0
    %1737 = vmatprep.subr.mxu0 0.0
    %1738 = vmatpush1.msra.mxu0 0.0
    %1739 = vmatprep.subr.mxu0 0.0
    %1740 = vmatpush1.msra.mxu0 0.0
    %1741 = vmatprep.subr.mxu0 0.0
    %1742 = vmatpush1.msra.mxu0 0.0
    %1743 = vmatprep.subr.mxu0 0.0
    %1744 = vmatpush1.msra.mxu0 0.0
    %1745 = vmatprep.subr.mxu0 0.0
    %1746 = vmatpush1.msra.mxu0 0.0
    %1747 = vmatprep.mubr.f32.mxu0 0.0
    %1748 = vmatmul.mubr.f32.gmra.mrb[0].mxu0 %v1681
    %v1749 = vpop.f32.mrb[0].mxu0
    %v1750 = vadd.f32 0.0, %v1749
    %v1751 = vpop.f32.mrb[0].mxu0
    %1752 = vdwg.mxu0
    %v1753 = vld [vmem:[#allocation10 + $0xc] sm:$0xf]
    %v1754 = vld [vmem:[#allocation10 + $0x34] sm:$0xf]
    %v1755 = vld [vmem:[#allocation10 + $0x5c] sm:$0xf]
    %v1756 = vld [vmem:[#allocation10 + $0x84] sm:$0xf]
    %v1757 = vld [vmem:[#allocation10 + $0xac] sm:$0xf]
    %v1758 = vld [vmem:[#allocation10 + $0xd4] sm:$0xf]
    %v1759 = vld [vmem:[#allocation10 + $0xfc] sm:$0xf]
    %v1760 = vld [vmem:[#allocation10 + $0x124] sm:$0xf]
    %v1761 = vld [vmem:[#allocation10 + $0x14c] sm:$0xf]
    %v1762 = vld [vmem:[#allocation10 + $0x174] sm:$0xf]
    %v1763 = vld [vmem:[#allocation10 + $0x19c] sm:$0xf]
    %v1764 = vld [vmem:[#allocation10 + $0x1c4] sm:$0xf]
    %v1765 = vld [vmem:[#allocation10 + $0x1ec] sm:$0xf]
    %v1766 = vld [vmem:[#allocation10 + $0x214] sm:$0xf]
    %v1767 = vld [vmem:[#allocation10 + $0x23c] sm:$0xf]
    %v1768 = vld [vmem:[#allocation10 + $0x264] sm:$0xf]
    %v1769 = vpack.c.bf16 %v1750, %v1677
    %v1770 = vld [vmem:[#allocation13 + $0x15] ss:$0 sm:$0xff]
    %v1787 = vunpack.c.l.b16 %v1753
    %v1788 = vunpack.c.l.b16 %v1754
    %v1789 = vunpack.c.l.b16 %v1755
    %v1790 = vunpack.c.l.b16 %v1756
    %v1791 = vunpack.c.l.b16 %v1757
    %v1792 = vunpack.c.l.b16 %v1758
    %v1793 = vunpack.c.l.b16 %v1759
    %v1794 = vunpack.c.l.b16 %v1760
    %v1795 = vunpack.c.l.b16 %v1761
    %v1796 = vunpack.c.l.b16 %v1762
    %v1797 = vunpack.c.l.b16 %v1763
    %v1798 = vunpack.c.l.b16 %v1764
    %v1799 = vunpack.c.l.b16 %v1765
    %v1800 = vunpack.c.l.b16 %v1766
    %v1801 = vunpack.c.l.b16 %v1767
    %v1802 = vunpack.c.l.b16 %v1768
    %v1803 = vpack.c.b16 %v1788, %v1787
    %v1804 = vpack.c.b16 %v1790, %v1789
    %v1805 = vpack.c.b16 %v1792, %v1791
    %v1806 = vpack.c.b16 %v1794, %v1793
    %v1807 = vpack.c.b16 %v1796, %v1795
    %v1808 = vpack.c.b16 %v1798, %v1797
    %v1809 = vpack.c.b16 %v1800, %v1799
    %v1810 = vpack.c.b16 %v1802, %v1801
    %1819 = vmatprep.subr.bf16.mxu0 0
    %1820 = vmatpush1.bf16.msra.mxu0 %v1803
    %1821 = vmatprep.subr.bf16.mxu0 0
    %1822 = vmatpush1.bf16.msra.mxu0 %v1804
    %1823 = vmatprep.subr.bf16.mxu0 0
    %1824 = vmatpush1.bf16.msra.mxu0 %v1805
    %1825 = vmatprep.subr.bf16.mxu0 0
    %1826 = vmatpush1.bf16.msra.mxu0 %v1806
    %1827 = vmatprep.subr.bf16.mxu0 0
    %1828 = vmatpush1.bf16.msra.mxu0 %v1807
    %1829 = vmatprep.subr.bf16.mxu0 0
    %1830 = vmatpush1.bf16.msra.mxu0 %v1808
    %1831 = vmatprep.subr.bf16.mxu0 0
    %1832 = vmatpush1.bf16.msra.mxu0 %v1809
    %1833 = vmatprep.subr.bf16.mxu0 0
    %1834 = vmatpush1.bf16.msra.mxu0 %v1810
    %1835 = vmatprep.subr.bf16.mxu0 0
    %1836 = vmatpush1.bf16.msra.mxu0 0
    %1837 = vmatprep.subr.bf16.mxu0 0
    %1838 = vmatpush1.bf16.msra.mxu0 0
    %1839 = vmatprep.subr.bf16.mxu0 0
    %1840 = vmatpush1.bf16.msra.mxu0 0
    %1841 = vmatprep.subr.bf16.mxu0 0
    %1842 = vmatpush1.bf16.msra.mxu0 0
    %1843 = vmatprep.subr.bf16.mxu0 0
    %1844 = vmatpush1.bf16.msra.mxu0 0
    %1845 = vmatprep.subr.bf16.mxu0 0
    %1846 = vmatpush1.bf16.msra.mxu0 0
    %1847 = vmatprep.subr.bf16.mxu0 0
    %1848 = vmatpush1.bf16.msra.mxu0 0
    %1849 = vmatprep.subr.bf16.mxu0 0
    %1850 = vmatpush1.bf16.msra.mxu0 0
    %1851 = vmatprep.mubr.bf16.mxu0 0
    %1852 = vmatmul.mubr.bf16.gmra.mrb[0].mxu0 %v1769
    %v1853 = vpop.f32.mrb[0].mxu0
    %v1854 = vadd.f32 %v1770, %v1853
    %v1855 = vpop.f32.mrb[0].mxu0
    %v1856 = vpop.f32.mrb[0].mxu0
    %v1857 = vadd.f32 %v1770, %v1856
    %v1858 = vpop.f32.mrb[0].mxu0
    %1859 = vdwg.mxu0
    %v1860 = vadd.f32 %v1187, %v1854
    %v1861 = vadd.f32 %v1188, %v1857
    %v1862 = vld [vmem:[#allocation13 + $0x23] ss:$0 sm:$0xff]
    %v1863 = vld [vmem:[#allocation13 + $0x24] ss:$0 sm:$0xff]
    %1864 = vadd.xlane.f32.xlu0 %v1860
    %v1865 = vpop.xlane.xlu0 %1864
    %1866 = vadd.xlane.f32.xlu0 %v1861
    %v1867 = vpop.xlane.xlu0 %1866
    %v1868 = vmul.f32 %v1865, %v805
    %v1869 = vmul.f32 %v1867, %v805
    %v1870 = vsub.f32 %v1860, %v1868
    %v1871 = vsub.f32 %v1861, %v1869
    %v1872 = vmul.f32 %v1870, %v1870
    %v1873 = vmul.f32 %v1871, %v1871
    %1874 = vadd.xlane.f32.xlu0 %v1872
    %v1875 = vpop.xlane.xlu0 %1874
    %1876 = vadd.xlane.f32.xlu0 %v1873
    %v1877 = vpop.xlane.xlu0 %1876
    %v1878 = vmul.f32 %v1875, %v805
    %v1879 = vmul.f32 %v1877, %v805
    %v1880 = vadd.f32 %v1878, 1e-05
    %v1881 = vadd.f32 %v1879, 1e-05
    %v1882 = vrsqrt.pop %v1880
    %v1883 = vrsqrt.pop %v1881
    %v1884 = vmul.f32 %v1870, %v1882
    %v1885 = vmul.f32 %v1871, %v1883
    %v1886 = vmul.f32 %v1884, %v1862
    %v1887 = vmul.f32 %v1885, %v1862
    %v1888 = vadd.f32 %v1886, %v1863
    %v1889 = vadd.f32 %v1887, %v1863
    %v1890 = vld [vmem:[#allocation10 + $0x10] sm:$0xf]
    %v1891 = vld [vmem:[#allocation10 + $0x38] sm:$0xf]
    %v1892 = vld [vmem:[#allocation10 + $0x60] sm:$0xf]
    %v1893 = vld [vmem:[#allocation10 + $0x88] sm:$0xf]
    %v1894 = vld [vmem:[#allocation10 + $0xb0] sm:$0xf]
    %v1895 = vld [vmem:[#allocation10 + $0xd8] sm:$0xf]
    %v1896 = vld [vmem:[#allocation10 + $0x100] sm:$0xf]
    %v1897 = vld [vmem:[#allocation10 + $0x128] sm:$0xf]
    %v1898 = vld [vmem:[#allocation10 + $0x150] sm:$0xf]
    %v1899 = vld [vmem:[#allocation10 + $0x178] sm:$0xf]
    %v1900 = vld [vmem:[#allocation10 + $0x1a0] sm:$0xf]
    %v1901 = vld [vmem:[#allocation10 + $0x1c8] sm:$0xf]
    %v1902 = vld [vmem:[#allocation10 + $0x1f0] sm:$0xf]
    %v1903 = vld [vmem:[#allocation10 + $0x218] sm:$0xf]
    %v1904 = vld [vmem:[#allocation10 + $0x240] sm:$0xf]
    %v1905 = vld [vmem:[#allocation10 + $0x268] sm:$0xf]
    %v1906 = vpack.c.bf16 %v1889, %v1888
    %v1907 = vld [vmem:[#allocation13 + $0x16] ss:$0 sm:$0xff]
    %v1924 = vunpack.c.l.b16 %v1890
    %v1925 = vunpack.c.l.b16 %v1891
    %v1926 = vunpack.c.l.b16 %v1892
    %v1927 = vunpack.c.l.b16 %v1893
    %v1928 = vunpack.c.l.b16 %v1894
    %v1929 = vunpack.c.l.b16 %v1895
    %v1930 = vunpack.c.l.b16 %v1896
    %v1931 = vunpack.c.l.b16 %v1897
    %v1932 = vunpack.c.l.b16 %v1898
    %v1933 = vunpack.c.l.b16 %v1899
    %v1934 = vunpack.c.l.b16 %v1900
    %v1935 = vunpack.c.l.b16 %v1901
    %v1936 = vunpack.c.l.b16 %v1902
    %v1937 = vunpack.c.l.b16 %v1903
    %v1938 = vunpack.c.l.b16 %v1904
    %v1939 = vunpack.c.l.b16 %v1905
    %v1940 = vpack.c.b16 %v1925, %v1924
    %v1941 = vpack.c.b16 %v1927, %v1926
    %v1942 = vpack.c.b16 %v1929, %v1928
    %v1943 = vpack.c.b16 %v1931, %v1930
    %v1944 = vpack.c.b16 %v1933, %v1932
    %v1945 = vpack.c.b16 %v1935, %v1934
    %v1946 = vpack.c.b16 %v1937, %v1936
    %v1947 = vpack.c.b16 %v1939, %v1938
    %1956 = vmatprep.subr.bf16.mxu0 0
    %1957 = vmatpush1.bf16.msra.mxu0 %v1940
    %1958 = vmatprep.subr.bf16.mxu0 0
    %1959 = vmatpush1.bf16.msra.mxu0 %v1941
    %1960 = vmatprep.subr.bf16.mxu0 0
    %1961 = vmatpush1.bf16.msra.mxu0 %v1942
    %1962 = vmatprep.subr.bf16.mxu0 0
    %1963 = vmatpush1.bf16.msra.mxu0 %v1943
    %1964 = vmatprep.subr.bf16.mxu0 0
    %1965 = vmatpush1.bf16.msra.mxu0 %v1944
    %1966 = vmatprep.subr.bf16.mxu0 0
    %1967 = vmatpush1.bf16.msra.mxu0 %v1945
    %1968 = vmatprep.subr.bf16.mxu0 0
    %1969 = vmatpush1.bf16.msra.mxu0 %v1946
    %1970 = vmatprep.subr.bf16.mxu0 0
    %1971 = vmatpush1.bf16.msra.mxu0 %v1947
    %1972 = vmatprep.subr.bf16.mxu0 0
    %1973 = vmatpush1.bf16.msra.mxu0 0
    %1974 = vmatprep.subr.bf16.mxu0 0
    %1975 = vmatpush1.bf16.msra.mxu0 0
    %1976 = vmatprep.subr.bf16.mxu0 0
    %1977 = vmatpush1.bf16.msra.mxu0 0
    %1978 = vmatprep.subr.bf16.mxu0 0
    %1979 = vmatpush1.bf16.msra.mxu0 0
    %1980 = vmatprep.subr.bf16.mxu0 0
    %1981 = vmatpush1.bf16.msra.mxu0 0
    %1982 = vmatprep.subr.bf16.mxu0 0
    %1983 = vmatpush1.bf16.msra.mxu0 0
    %1984 = vmatprep.subr.bf16.mxu0 0
    %1985 = vmatpush1.bf16.msra.mxu0 0
    %1986 = vmatprep.subr.bf16.mxu0 0
    %1987 = vmatpush1.bf16.msra.mxu0 0
    %1988 = vmatprep.mubr.bf16.mxu0 0
    %1989 = vmatmul.mubr.bf16.gmra.mrb[0].mxu0 %v1906
    %v1990 = vpop.f32.mrb[0].mxu0
    %v1991 = vadd.f32 %v1907, %v1990
    %v1992 = vpop.f32.mrb[0].mxu0
    %v1993 = vpop.f32.mrb[0].mxu0
    %v1994 = vadd.f32 %v1907, %v1993
    %v1995 = vpop.f32.mrb[0].mxu0
    %1996 = vdwg.mxu0
    %v1997 = vld [vmem:[#allocation10 + $0x14] sm:$0xff]
    %v1998 = vld [vmem:[#allocation10 + $0x3c] sm:$0xff]
    %v1999 = vld [vmem:[#allocation10 + $0x64] sm:$0xff]
    %v2000 = vld [vmem:[#allocation10 + $0x8c] sm:$0xff]
    %v2001 = vld [vmem:[#allocation10 + $0xb4] sm:$0xff]
    %v2002 = vld [vmem:[#allocation10 + $0xdc] sm:$0xff]
    %v2003 = vld [vmem:[#allocation10 + $0x104] sm:$0xff]
    %v2004 = vld [vmem:[#allocation10 + $0x12c] sm:$0xff]
    %v2005 = vld [vmem:[#allocation10 + $0x154] sm:$0xff]
    %v2006 = vld [vmem:[#allocation10 + $0x17c] sm:$0xff]
    %v2007 = vld [vmem:[#allocation10 + $0x1a4] sm:$0xff]
    %v2008 = vld [vmem:[#allocation10 + $0x1cc] sm:$0xff]
    %v2009 = vld [vmem:[#allocation10 + $0x1f4] sm:$0xff]
    %v2010 = vld [vmem:[#allocation10 + $0x21c] sm:$0xff]
    %v2011 = vld [vmem:[#allocation10 + $0x244] sm:$0xff]
    %v2012 = vld [vmem:[#allocation10 + $0x26c] sm:$0xff]
    %v2013 = vpack.c.bf16 %v1186, %v1185
    %v2030 = vunpack.c.l.b16 %v1997
    %v2031 = vunpack.c.h.b16 %v1997
    %v2032 = vunpack.c.l.b16 %v1998
    %v2033 = vunpack.c.h.b16 %v1998
    %v2034 = vunpack.c.l.b16 %v1999
    %v2035 = vunpack.c.h.b16 %v1999
    %v2036 = vunpack.c.l.b16 %v2000
    %v2037 = vunpack.c.h.b16 %v2000
    %v2038 = vunpack.c.l.b16 %v2001
    %v2039 = vunpack.c.h.b16 %v2001
    %v2040 = vunpack.c.l.b16 %v2002
    %v2041 = vunpack.c.h.b16 %v2002
    %v2042 = vunpack.c.l.b16 %v2003
    %v2043 = vunpack.c.h.b16 %v2003
    %v2044 = vunpack.c.l.b16 %v2004
    %v2045 = vunpack.c.h.b16 %v2004
    %v2046 = vunpack.c.l.b16 %v2005
    %v2047 = vunpack.c.h.b16 %v2005
    %v2048 = vunpack.c.l.b16 %v2006
    %v2049 = vunpack.c.h.b16 %v2006
    %v2050 = vunpack.c.l.b16 %v2007
    %v2051 = vunpack.c.h.b16 %v2007
    %v2052 = vunpack.c.l.b16 %v2008
    %v2053 = vunpack.c.h.b16 %v2008
    %v2054 = vunpack.c.l.b16 %v2009
    %v2055 = vunpack.c.h.b16 %v2009
    %v2056 = vunpack.c.l.b16 %v2010
    %v2057 = vunpack.c.h.b16 %v2010
    %v2058 = vunpack.c.l.b16 %v2011
    %v2059 = vunpack.c.h.b16 %v2011
    %v2060 = vunpack.c.l.b16 %v2012
    %v2061 = vunpack.c.h.b16 %v2012
    %v2062 = vpack.c.b16 %v2032, %v2030
    %v2063 = vpack.c.b16 %v2033, %v2031
    %v2064 = vpack.c.b16 %v2036, %v2034
    %v2065 = vpack.c.b16 %v2037, %v2035
    %v2066 = vpack.c.b16 %v2040, %v2038
    %v2067 = vpack.c.b16 %v2041, %v2039
    %v2068 = vpack.c.b16 %v2044, %v2042
    %v2069 = vpack.c.b16 %v2045, %v2043
    %v2070 = vpack.c.b16 %v2048, %v2046
    %v2071 = vpack.c.b16 %v2049, %v2047
    %v2072 = vpack.c.b16 %v2052, %v2050
    %v2073 = vpack.c.b16 %v2053, %v2051
    %v2074 = vpack.c.b16 %v2056, %v2054
    %v2075 = vpack.c.b16 %v2057, %v2055
    %v2076 = vpack.c.b16 %v2060, %v2058
    %v2077 = vpack.c.b16 %v2061, %v2059
    %2094 = vmatprep.subr.bf16.mxu0 %v2063
    %2095 = vmatpush1.bf16.msra.mxu0 %v2062
    %2096 = vmatprep.subr.bf16.mxu0 %v2065
    %2097 = vmatpush1.bf16.msra.mxu0 %v2064
    %2098 = vmatprep.subr.bf16.mxu0 %v2067
    %2099 = vmatpush1.bf16.msra.mxu0 %v2066
    %2100 = vmatprep.subr.bf16.mxu0 %v2069
    %2101 = vmatpush1.bf16.msra.mxu0 %v2068
    %2102 = vmatprep.subr.bf16.mxu0 %v2071
    %2103 = vmatpush1.bf16.msra.mxu0 %v2070
    %2104 = vmatprep.subr.bf16.mxu0 %v2073
    %2105 = vmatpush1.bf16.msra.mxu0 %v2072
    %2106 = vmatprep.subr.bf16.mxu0 %v2075
    %2107 = vmatpush1.bf16.msra.mxu0 %v2074
    %2108 = vmatprep.subr.bf16.mxu0 %v2077
    %2109 = vmatpush1.bf16.msra.mxu0 %v2076
    %2110 = vmatprep.subr.bf16.mxu0 0
    %2111 = vmatpush1.bf16.msra.mxu0 0
    %2112 = vmatprep.subr.bf16.mxu0 0
    %2113 = vmatpush1.bf16.msra.mxu0 0
    %2114 = vmatprep.subr.bf16.mxu0 0
    %2115 = vmatpush1.bf16.msra.mxu0 0
    %2116 = vmatprep.subr.bf16.mxu0 0
    %2117 = vmatpush1.bf16.msra.mxu0 0
    %2118 = vmatprep.subr.bf16.mxu0 0
    %2119 = vmatpush1.bf16.msra.mxu0 0
    %2120 = vmatprep.subr.bf16.mxu0 0
    %2121 = vmatpush1.bf16.msra.mxu0 0
    %2122 = vmatprep.subr.bf16.mxu0 0
    %2123 = vmatpush1.bf16.msra.mxu0 0
    %2124 = vmatprep.subr.bf16.mxu0 0
    %2125 = vmatpush1.bf16.msra.mxu0 0
    %2126 = vmatprep.mubr.bf16.mxu0 0
    %2127 = vmatmul.mubr.bf16.gmra.mrb[0].mxu0 %v2013
    %v2128 = vpop.f32.mrb[0].mxu0
    %v2129 = vadd.f32 0.0, %v2128
    %v2130 = vpop.f32.mrb[0].mxu0
    %v2131 = vadd.f32 0.0, %v2130
    %v2132 = vpop.f32.mrb[0].mxu0
    %v2133 = vadd.f32 0.0, %v2132
    %v2134 = vpop.f32.mrb[0].mxu0
    %v2135 = vadd.f32 0.0, %v2134
    %2136 = vdwg.mxu0
    %v2137 = vld [vmem:[#allocation13 + $0x17] ss:$0 sm:$0xff]
    %v2138 = vadd.f32 %v2129, %v2137
    %v2139 = vadd.f32 %v2133, %v2137
    %v2140 = vld [vmem:[#allocation13 + $0x20] ss:$0 sm:$0xff]
    %v2141 = vadd.f32 %v2131, %v2140
    %v2142 = vadd.f32 %v2135, %v2140
    %2143 = vmatprep.subr.mxu0 0.0
    %2144 = vmatpush1.xpose.msra.mxu0 %v2138
    %2145 = vmatprep.subr.mxu0 0.0
    %2146 = vmatpush1.xpose.msra.mxu0 0.0
    %2147 = vmatprep.subr.mxu0 0.0
    %2148 = vmatpush1.xpose.msra.mxu0 0.0
    %2149 = vmatprep.subr.mxu0 0.0
    %2150 = vmatpush1.xpose.msra.mxu0 0.0
    %2151 = vmatprep.subr.mxu0 0.0
    %2152 = vmatpush1.xpose.msra.mxu0 0.0
    %2153 = vmatprep.subr.mxu0 0.0
    %2154 = vmatpush1.xpose.msra.mxu0 0.0
    %2155 = vmatprep.subr.mxu0 0.0
    %2156 = vmatpush1.xpose.msra.mxu0 0.0
    %2157 = vmatprep.subr.mxu0 0.0
    %2158 = vmatpush1.xpose.msra.mxu0 0.0
    %2159 = vmatprep.subr.mxu0 0.0
    %2160 = vmatpush1.xpose.msra.mxu0 0.0
    %2161 = vmatprep.subr.mxu0 0.0
    %2162 = vmatpush1.xpose.msra.mxu0 0.0
    %2163 = vmatprep.subr.mxu0 0.0
    %2164 = vmatpush1.xpose.msra.mxu0 0.0
    %2165 = vmatprep.subr.mxu0 0.0
    %2166 = vmatpush1.xpose.msra.mxu0 0.0
    %2167 = vmatprep.subr.mxu0 0.0
    %2168 = vmatpush1.xpose.msra.mxu0 0.0
    %2169 = vmatprep.subr.mxu0 0.0
    %2170 = vmatpush1.xpose.msra.mxu0 0.0
    %2171 = vmatprep.subr.mxu0 0.0
    %2172 = vmatpush1.xpose.msra.mxu0 0.0
    %2173 = vmatprep.subr.mxu0 0.0
    %2174 = vmatpush1.xpose.msra.mxu0 0.0
    %2175 = vmatprep.subr.mxu0 0.0
    %2176 = vmatpush1.xpose.msra.mxu0 0.0
    %2177 = vmatprep.subr.mxu0 0.0
    %2178 = vmatpush1.xpose.msra.mxu0 0.0
    %2179 = vmatprep.subr.mxu0 0.0
    %2180 = vmatpush1.xpose.msra.mxu0 0.0
    %2181 = vmatprep.subr.mxu0 0.0
    %2182 = vmatpush1.xpose.msra.mxu0 0.0
    %2183 = vmatprep.subr.mxu0 0.0
    %2184 = vmatpush1.xpose.msra.mxu0 0.0
    %2185 = vmatprep.subr.mxu0 0.0
    %2186 = vmatpush1.xpose.msra.mxu0 0.0
    %2187 = vmatprep.subr.mxu0 0.0
    %2188 = vmatpush1.xpose.msra.mxu0 0.0
    %2189 = vmatprep.subr.mxu0 0.0
    %2190 = vmatpush1.xpose.msra.mxu0 0.0
    %2191 = vmatprep.subr.mxu0 0.0
    %2192 = vmatpush1.xpose.msra.mxu0 0.0
    %2193 = vmatprep.subr.mxu0 0.0
    %2194 = vmatpush1.xpose.msra.mxu0 0.0
    %2195 = vmatprep.subr.mxu0 0.0
    %2196 = vmatpush1.xpose.msra.mxu0 0.0
    %2197 = vmatprep.subr.mxu0 0.0
    %2198 = vmatpush1.xpose.msra.mxu0 0.0
    %2199 = vmatprep.subr.mxu0 0.0
    %2200 = vmatpush1.xpose.msra.mxu0 0.0
    %2201 = vmatprep.subr.mxu0 0.0
    %2202 = vmatpush1.xpose.msra.mxu0 0.0
    %2203 = vmatprep.subr.mxu0 0.0
    %2204 = vmatpush1.xpose.msra.mxu0 0.0
    %2205 = vmatprep.subr.mxu0 0.0
    %2206 = vmatpush1.xpose.msra.mxu0 0.0
    %2207 = vmatprep.mubr.f32.mxu0 0.0
    %2208 = vmatmul.mubr.f32.gmra.mrb[0].mxu0 %v1991
    %v2209 = vpop.f32.mrb[0].mxu0
    %v2210 = vadd.f32 0.0, %v2209
    %v2211 = vpop.f32.mrb[0].mxu0
    %2212 = vdwg.mxu0
    %2213 = vmatprep.subr.mxu0 0.0
    %2214 = vmatpush1.xpose.msra.mxu0 %v2139
    %2215 = vmatprep.subr.mxu0 0.0
    %2216 = vmatpush1.xpose.msra.mxu0 0.0
    %2217 = vmatprep.subr.mxu0 0.0
    %2218 = vmatpush1.xpose.msra.mxu0 0.0
    %2219 = vmatprep.subr.mxu0 0.0
    %2220 = vmatpush1.xpose.msra.mxu0 0.0
    %2221 = vmatprep.subr.mxu0 0.0
    %2222 = vmatpush1.xpose.msra.mxu0 0.0
    %2223 = vmatprep.subr.mxu0 0.0
    %2224 = vmatpush1.xpose.msra.mxu0 0.0
    %2225 = vmatprep.subr.mxu0 0.0
    %2226 = vmatpush1.xpose.msra.mxu0 0.0
    %2227 = vmatprep.subr.mxu0 0.0
    %2228 = vmatpush1.xpose.msra.mxu0 0.0
    %2229 = vmatprep.subr.mxu0 0.0
    %2230 = vmatpush1.xpose.msra.mxu0 0.0
    %2231 = vmatprep.subr.mxu0 0.0
    %2232 = vmatpush1.xpose.msra.mxu0 0.0
    %2233 = vmatprep.subr.mxu0 0.0
    %2234 = vmatpush1.xpose.msra.mxu0 0.0
    %2235 = vmatprep.subr.mxu0 0.0
    %2236 = vmatpush1.xpose.msra.mxu0 0.0
    %2237 = vmatprep.subr.mxu0 0.0
    %2238 = vmatpush1.xpose.msra.mxu0 0.0
    %2239 = vmatprep.subr.mxu0 0.0
    %2240 = vmatpush1.xpose.msra.mxu0 0.0
    %2241 = vmatprep.subr.mxu0 0.0
    %2242 = vmatpush1.xpose.msra.mxu0 0.0
    %2243 = vmatprep.subr.mxu0 0.0
    %2244 = vmatpush1.xpose.msra.mxu0 0.0
    %2245 = vmatprep.subr.mxu0 0.0
    %2246 = vmatpush1.xpose.msra.mxu0 0.0
    %2247 = vmatprep.subr.mxu0 0.0
    %2248 = vmatpush1.xpose.msra.mxu0 0.0
    %2249 = vmatprep.subr.mxu0 0.0
    %2250 = vmatpush1.xpose.msra.mxu0 0.0
    %2251 = vmatprep.subr.mxu0 0.0
    %2252 = vmatpush1.xpose.msra.mxu0 0.0
    %2253 = vmatprep.subr.mxu0 0.0
    %2254 = vmatpush1.xpose.msra.mxu0 0.0
    %2255 = vmatprep.subr.mxu0 0.0
    %2256 = vmatpush1.xpose.msra.mxu0 0.0
    %2257 = vmatprep.subr.mxu0 0.0
    %2258 = vmatpush1.xpose.msra.mxu0 0.0
    %2259 = vmatprep.subr.mxu0 0.0
    %2260 = vmatpush1.xpose.msra.mxu0 0.0
    %2261 = vmatprep.subr.mxu0 0.0
    %2262 = vmatpush1.xpose.msra.mxu0 0.0
    %2263 = vmatprep.subr.mxu0 0.0
    %2264 = vmatpush1.xpose.msra.mxu0 0.0
    %2265 = vmatprep.subr.mxu0 0.0
    %2266 = vmatpush1.xpose.msra.mxu0 0.0
    %2267 = vmatprep.subr.mxu0 0.0
    %2268 = vmatpush1.xpose.msra.mxu0 0.0
    %2269 = vmatprep.subr.mxu0 0.0
    %2270 = vmatpush1.xpose.msra.mxu0 0.0
    %2271 = vmatprep.subr.mxu0 0.0
    %2272 = vmatpush1.xpose.msra.mxu0 0.0
    %2273 = vmatprep.subr.mxu0 0.0
    %2274 = vmatpush1.xpose.msra.mxu0 0.0
    %2275 = vmatprep.subr.mxu0 0.0
    %2276 = vmatpush1.xpose.msra.mxu0 0.0
    %2277 = vmatprep.mubr.f32.mxu0 0.0
    %2278 = vmatmul.mubr.f32.gmra.mrb[0].mxu0 %v1994
    %v2279 = vpop.f32.mrb[0].mxu0
    %v2280 = vadd.f32 0.0, %v2279
    %v2281 = vpop.f32.mrb[0].mxu0
    %2282 = vdwg.mxu0
    %v2283 = vmul.f32 %v2210, 0.088388346
    %v2284 = vmul.f32 %v2280, 0.088388346
    %v2285 = vsel %vm521, %v2283, -inf
    %2286 = vmax.xlane.f32.xlu0 %v2285
    %v2287 = vpop.xlane.xlu0 %2286
    %v2288 = vsel %vm521, %v2284, -inf
    %2289 = vmax.xlane.f32.xlu0 %v2288
    %v2290 = vpop.xlane.xlu0 %2289
    %v2291 = vsub.f32 %v2283, %v2287
    %v2292 = vsub.f32 %v2284, %v2290
    %v2293 = vmul.f32 %v2291, 1.442695
    %v2294 = vpow.pop %v2293
    %v2295 = vmul.f32 %v2292, 1.442695
    %v2296 = vpow.pop %v2295
    %v2297 = vsel %vm521, %v2294, 0.0
    %2298 = vadd.xlane.f32.xlu0 %v2297
    %v2299 = vpop.xlane.xlu0 %2298
    %v2300 = vsel %vm521, %v2296, 0.0
    %2301 = vadd.xlane.f32.xlu0 %v2300
    %v2302 = vpop.xlane.xlu0 %2301
    %v2303 = vrcp.pop %v2299
    %v2304 = vrcp.pop %v2302
    %v2305 = vmul.f32 %v2294, %v2303
    %v2306 = vmul.f32 %v2296, %v2304
    %v2308 = vsel %vm521, %v2305, 0
    %2310 = vmatprep.subr.mxu0 0.0
    %2311 = vmatpush1.msra.mxu0 %v2141
    %2312 = vmatprep.subr.mxu0 0.0
    %2313 = vmatpush1.msra.mxu0 0.0
    %2314 = vmatprep.subr.mxu0 0.0
    %2315 = vmatpush1.msra.mxu0 0.0
    %2316 = vmatprep.subr.mxu0 0.0
    %2317 = vmatpush1.msra.mxu0 0.0
    %2318 = vmatprep.subr.mxu0 0.0
    %2319 = vmatpush1.msra.mxu0 0.0
    %2320 = vmatprep.subr.mxu0 0.0
    %2321 = vmatpush1.msra.mxu0 0.0
    %2322 = vmatprep.subr.mxu0 0.0
    %2323 = vmatpush1.msra.mxu0 0.0
    %2324 = vmatprep.subr.mxu0 0.0
    %2325 = vmatpush1.msra.mxu0 0.0
    %2326 = vmatprep.subr.mxu0 0.0
    %2327 = vmatpush1.msra.mxu0 0.0
    %2328 = vmatprep.subr.mxu0 0.0
    %2329 = vmatpush1.msra.mxu0 0.0
    %2330 = vmatprep.subr.mxu0 0.0
    %2331 = vmatpush1.msra.mxu0 0.0
    %2332 = vmatprep.subr.mxu0 0.0
    %2333 = vmatpush1.msra.mxu0 0.0
    %2334 = vmatprep.subr.mxu0 0.0
    %2335 = vmatpush1.msra.mxu0 0.0
    %2336 = vmatprep.subr.mxu0 0.0
    %2337 = vmatpush1.msra.mxu0 0.0
    %2338 = vmatprep.subr.mxu0 0.0
    %2339 = vmatpush1.msra.mxu0 0.0
    %2340 = vmatprep.subr.mxu0 0.0
    %2341 = vmatpush1.msra.mxu0 0.0
    %2342 = vmatprep.subr.mxu0 0.0
    %2343 = vmatpush1.msra.mxu0 0.0
    %2344 = vmatprep.subr.mxu0 0.0
    %2345 = vmatpush1.msra.mxu0 0.0
    %2346 = vmatprep.subr.mxu0 0.0
    %2347 = vmatpush1.msra.mxu0 0.0
    %2348 = vmatprep.subr.mxu0 0.0
    %2349 = vmatpush1.msra.mxu0 0.0
    %2350 = vmatprep.subr.mxu0 0.0
    %2351 = vmatpush1.msra.mxu0 0.0
    %2352 = vmatprep.subr.mxu0 0.0
    %2353 = vmatpush1.msra.mxu0 0.0
    %2354 = vmatprep.subr.mxu0 0.0
    %2355 = vmatpush1.msra.mxu0 0.0
    %2356 = vmatprep.subr.mxu0 0.0
    %2357 = vmatpush1.msra.mxu0 0.0
    %2358 = vmatprep.subr.mxu0 0.0
    %2359 = vmatpush1.msra.mxu0 0.0
    %2360 = vmatprep.subr.mxu0 0.0
    %2361 = vmatpush1.msra.mxu0 0.0
    %2362 = vmatprep.subr.mxu0 0.0
    %2363 = vmatpush1.msra.mxu0 0.0
    %2364 = vmatprep.subr.mxu0 0.0
    %2365 = vmatpush1.msra.mxu0 0.0
    %2366 = vmatprep.subr.mxu0 0.0
    %2367 = vmatpush1.msra.mxu0 0.0
    %2368 = vmatprep.subr.mxu0 0.0
    %2369 = vmatpush1.msra.mxu0 0.0
    %2370 = vmatprep.subr.mxu0 0.0
    %2371 = vmatpush1.msra.mxu0 0.0
    %2372 = vmatprep.subr.mxu0 0.0
    %2373 = vmatpush1.msra.mxu0 0.0
    %2374 = vmatprep.mubr.f32.mxu0 0.0
    %2375 = vmatmul.mubr.f32.gmra.mrb[0].mxu0 %v2308
    %v2376 = vpop.f32.mrb[0].mxu0
    %v2377 = vadd.f32 0.0, %v2376
    %v2378 = vpop.f32.mrb[0].mxu0
    %2379 = vdwg.mxu0
    %v2381 = vsel %vm521, %v2306, 0
    %2383 = vmatprep.subr.mxu0 0.0
    %2384 = vmatpush1.msra.mxu0 %v2142
    %2385 = vmatprep.subr.mxu0 0.0
    %2386 = vmatpush1.msra.mxu0 0.0
    %2387 = vmatprep.subr.mxu0 0.0
    %2388 = vmatpush1.msra.mxu0 0.0
    %2389 = vmatprep.subr.mxu0 0.0
    %2390 = vmatpush1.msra.mxu0 0.0
    %2391 = vmatprep.subr.mxu0 0.0
    %2392 = vmatpush1.msra.mxu0 0.0
    %2393 = vmatprep.subr.mxu0 0.0
    %2394 = vmatpush1.msra.mxu0 0.0
    %2395 = vmatprep.subr.mxu0 0.0
    %2396 = vmatpush1.msra.mxu0 0.0
    %2397 = vmatprep.subr.mxu0 0.0
    %2398 = vmatpush1.msra.mxu0 0.0
    %2399 = vmatprep.subr.mxu0 0.0
    %2400 = vmatpush1.msra.mxu0 0.0
    %2401 = vmatprep.subr.mxu0 0.0
    %2402 = vmatpush1.msra.mxu0 0.0
    %2403 = vmatprep.subr.mxu0 0.0
    %2404 = vmatpush1.msra.mxu0 0.0
    %2405 = vmatprep.subr.mxu0 0.0
    %2406 = vmatpush1.msra.mxu0 0.0
    %2407 = vmatprep.subr.mxu0 0.0
    %2408 = vmatpush1.msra.mxu0 0.0
    %2409 = vmatprep.subr.mxu0 0.0
    %2410 = vmatpush1.msra.mxu0 0.0
    %2411 = vmatprep.subr.mxu0 0.0
    %2412 = vmatpush1.msra.mxu0 0.0
    %2413 = vmatprep.subr.mxu0 0.0
    %2414 = vmatpush1.msra.mxu0 0.0
    %2415 = vmatprep.subr.mxu0 0.0
    %2416 = vmatpush1.msra.mxu0 0.0
    %2417 = vmatprep.subr.mxu0 0.0
    %2418 = vmatpush1.msra.mxu0 0.0
    %2419 = vmatprep.subr.mxu0 0.0
    %2420 = vmatpush1.msra.mxu0 0.0
    %2421 = vmatprep.subr.mxu0 0.0
    %2422 = vmatpush1.msra.mxu0 0.0
    %2423 = vmatprep.subr.mxu0 0.0
    %2424 = vmatpush1.msra.mxu0 0.0
    %2425 = vmatprep.subr.mxu0 0.0
    %2426 = vmatpush1.msra.mxu0 0.0
    %2427 = vmatprep.subr.mxu0 0.0
    %2428 = vmatpush1.msra.mxu0 0.0
    %2429 = vmatprep.subr.mxu0 0.0
    %2430 = vmatpush1.msra.mxu0 0.0
    %2431 = vmatprep.subr.mxu0 0.0
    %2432 = vmatpush1.msra.mxu0 0.0
    %2433 = vmatprep.subr.mxu0 0.0
    %2434 = vmatpush1.msra.mxu0 0.0
    %2435 = vmatprep.subr.mxu0 0.0
    %2436 = vmatpush1.msra.mxu0 0.0
    %2437 = vmatprep.subr.mxu0 0.0
    %2438 = vmatpush1.msra.mxu0 0.0
    %2439 = vmatprep.subr.mxu0 0.0
    %2440 = vmatpush1.msra.mxu0 0.0
    %2441 = vmatprep.subr.mxu0 0.0
    %2442 = vmatpush1.msra.mxu0 0.0
    %2443 = vmatprep.subr.mxu0 0.0
    %2444 = vmatpush1.msra.mxu0 0.0
    %2445 = vmatprep.subr.mxu0 0.0
    %2446 = vmatpush1.msra.mxu0 0.0
    %2447 = vmatprep.mubr.f32.mxu0 0.0
    %2448 = vmatmul.mubr.f32.gmra.mrb[0].mxu0 %v2381
    %v2449 = vpop.f32.mrb[0].mxu0
    %v2450 = vadd.f32 0.0, %v2449
    %v2451 = vpop.f32.mrb[0].mxu0
    %2452 = vdwg.mxu0
    %v2453 = vld [vmem:[#allocation10 + $0x1c] sm:$0xf]
    %v2454 = vld [vmem:[#allocation10 + $0x44] sm:$0xf]
    %v2455 = vld [vmem:[#allocation10 + $0x6c] sm:$0xf]
    %v2456 = vld [vmem:[#allocation10 + $0x94] sm:$0xf]
    %v2457 = vld [vmem:[#allocation10 + $0xbc] sm:$0xf]
    %v2458 = vld [vmem:[#allocation10 + $0xe4] sm:$0xf]
    %v2459 = vld [vmem:[#allocation10 + $0x10c] sm:$0xf]
    %v2460 = vld [vmem:[#allocation10 + $0x134] sm:$0xf]
    %v2461 = vld [vmem:[#allocation10 + $0x15c] sm:$0xf]
    %v2462 = vld [vmem:[#allocation10 + $0x184] sm:$0xf]
    %v2463 = vld [vmem:[#allocation10 + $0x1ac] sm:$0xf]
    %v2464 = vld [vmem:[#allocation10 + $0x1d4] sm:$0xf]
    %v2465 = vld [vmem:[#allocation10 + $0x1fc] sm:$0xf]
    %v2466 = vld [vmem:[#allocation10 + $0x224] sm:$0xf]
    %v2467 = vld [vmem:[#allocation10 + $0x24c] sm:$0xf]
    %v2468 = vld [vmem:[#allocation10 + $0x274] sm:$0xf]
    %v2469 = vpack.c.bf16 %v2450, %v2377
    %v2470 = vld [vmem:[#allocation13 + $0x21] ss:$0 sm:$0xff]
    %v2487 = vunpack.c.l.b16 %v2453
    %v2488 = vunpack.c.l.b16 %v2454
    %v2489 = vunpack.c.l.b16 %v2455
    %v2490 = vunpack.c.l.b16 %v2456
    %v2491 = vunpack.c.l.b16 %v2457
    %v2492 = vunpack.c.l.b16 %v2458
    %v2493 = vunpack.c.l.b16 %v2459
    %v2494 = vunpack.c.l.b16 %v2460
    %v2495 = vunpack.c.l.b16 %v2461
    %v2496 = vunpack.c.l.b16 %v2462
    %v2497 = vunpack.c.l.b16 %v2463
    %v2498 = vunpack.c.l.b16 %v2464
    %v2499 = vunpack.c.l.b16 %v2465
    %v2500 = vunpack.c.l.b16 %v2466
    %v2501 = vunpack.c.l.b16 %v2467
    %v2502 = vunpack.c.l.b16 %v2468
    %v2503 = vpack.c.b16 %v2488, %v2487
    %v2504 = vpack.c.b16 %v2490, %v2489
    %v2505 = vpack.c.b16 %v2492, %v2491
    %v2506 = vpack.c.b16 %v2494, %v2493
    %v2507 = vpack.c.b16 %v2496, %v2495
    %v2508 = vpack.c.b16 %v2498, %v2497
    %v2509 = vpack.c.b16 %v2500, %v2499
    %v2510 = vpack.c.b16 %v2502, %v2501
    %2519 = vmatprep.subr.bf16.mxu0 0
    %2520 = vmatpush1.bf16.msra.mxu0 %v2503
    %2521 = vmatprep.subr.bf16.mxu0 0
    %2522 = vmatpush1.bf16.msra.mxu0 %v2504
    %2523 = vmatprep.subr.bf16.mxu0 0
    %2524 = vmatpush1.bf16.msra.mxu0 %v2505
    %2525 = vmatprep.subr.bf16.mxu0 0
    %2526 = vmatpush1.bf16.msra.mxu0 %v2506
    %2527 = vmatprep.subr.bf16.mxu0 0
    %2528 = vmatpush1.bf16.msra.mxu0 %v2507
    %2529 = vmatprep.subr.bf16.mxu0 0
    %2530 = vmatpush1.bf16.msra.mxu0 %v2508
    %2531 = vmatprep.subr.bf16.mxu0 0
    %2532 = vmatpush1.bf16.msra.mxu0 %v2509
    %2533 = vmatprep.subr.bf16.mxu0 0
    %2534 = vmatpush1.bf16.msra.mxu0 %v2510
    %2535 = vmatprep.subr.bf16.mxu0 0
    %2536 = vmatpush1.bf16.msra.mxu0 0
    %2537 = vmatprep.subr.bf16.mxu0 0
    %2538 = vmatpush1.bf16.msra.mxu0 0
    %2539 = vmatprep.subr.bf16.mxu0 0
    %2540 = vmatpush1.bf16.msra.mxu0 0
    %2541 = vmatprep.subr.bf16.mxu0 0
    %2542 = vmatpush1.bf16.msra.mxu0 0
    %2543 = vmatprep.subr.bf16.mxu0 0
    %2544 = vmatpush1.bf16.msra.mxu0 0
    %2545 = vmatprep.subr.bf16.mxu0 0
    %2546 = vmatpush1.bf16.msra.mxu0 0
    %2547 = vmatprep.subr.bf16.mxu0 0
    %2548 = vmatpush1.bf16.msra.mxu0 0
    %2549 = vmatprep.subr.bf16.mxu0 0
    %2550 = vmatpush1.bf16.msra.mxu0 0
    %2551 = vmatprep.mubr.bf16.mxu0 0
    %2552 = vmatmul.mubr.bf16.gmra.mrb[0].mxu0 %v2469
    %v2553 = vpop.f32.mrb[0].mxu0
    %v2554 = vadd.f32 %v2470, %v2553
    %v2555 = vpop.f32.mrb[0].mxu0
    %v2556 = vpop.f32.mrb[0].mxu0
    %v2557 = vadd.f32 %v2470, %v2556
    %v2558 = vpop.f32.mrb[0].mxu0
    %2559 = vdwg.mxu0
    %v2560 = vadd.f32 %v1888, %v2554
    %v2561 = vadd.f32 %v1889, %v2557
    %v2562 = vld [vmem:[#allocation13 + $0x25] ss:$0 sm:$0xff]
    %v2563 = vld [vmem:[#allocation13 + $0x26] ss:$0 sm:$0xff]
    %2564 = vadd.xlane.f32.xlu0 %v2560
    %v2565 = vpop.xlane.xlu0 %2564
    %2566 = vadd.xlane.f32.xlu0 %v2561
    %v2567 = vpop.xlane.xlu0 %2566
    %v2568 = vmul.f32 %v2565, %v805
    %v2569 = vmul.f32 %v2567, %v805
    %v2570 = vsub.f32 %v2560, %v2568
    %v2571 = vsub.f32 %v2561, %v2569
    %v2572 = vmul.f32 %v2570, %v2570
    %v2573 = vmul.f32 %v2571, %v2571
    %2574 = vadd.xlane.f32.xlu0 %v2572
    %v2575 = vpop.xlane.xlu0 %2574
    %2576 = vadd.xlane.f32.xlu0 %v2573
    %v2577 = vpop.xlane.xlu0 %2576
    %v2578 = vmul.f32 %v2575, %v805
    %v2579 = vmul.f32 %v2577, %v805
    %v2580 = vadd.f32 %v2578, 1e-05
    %v2581 = vadd.f32 %v2579, 1e-05
    %v2582 = vrsqrt.pop %v2580
    %v2583 = vrsqrt.pop %v2581
    %v2584 = vmul.f32 %v2570, %v2582
    %v2585 = vmul.f32 %v2571, %v2583
    %v2586 = vmul.f32 %v2584, %v2562
    %v2587 = vmul.f32 %v2585, %v2562
    %v2588 = vadd.f32 %v2586, %v2563
    %v2589 = vadd.f32 %v2587, %v2563
    %v2590 = vld [vmem:[#allocation10 + $0x20] sm:$0xff]
    %v2591 = vld [vmem:[#allocation10 + $0x48] sm:$0xff]
    %v2592 = vld [vmem:[#allocation10 + $0x70] sm:$0xff]
    %v2593 = vld [vmem:[#allocation10 + $0x98] sm:$0xff]
    %v2594 = vld [vmem:[#allocation10 + $0xc0] sm:$0xff]
    %v2595 = vld [vmem:[#allocation10 + $0xe8] sm:$0xff]
    %v2596 = vld [vmem:[#allocation10 + $0x110] sm:$0xff]
    %v2597 = vld [vmem:[#allocation10 + $0x138] sm:$0xff]
    %v2598 = vld [vmem:[#allocation10 + $0x160] sm:$0xff]
    %v2599 = vld [vmem:[#allocation10 + $0x188] sm:$0xff]
    %v2600 = vld [vmem:[#allocation10 + $0x1b0] sm:$0xff]
    %v2601 = vld [vmem:[#allocation10 + $0x1d8] sm:$0xff]
    %v2602 = vld [vmem:[#allocation10 + $0x200] sm:$0xff]
    %v2603 = vld [vmem:[#allocation10 + $0x228] sm:$0xff]
    %v2604 = vld [vmem:[#allocation10 + $0x250] sm:$0xff]
    %v2605 = vld [vmem:[#allocation10 + $0x278] sm:$0xff]
    %v2606 = vpack.c.bf16 %v2589, %v2588
    %s2607 = scalar_lea.vmem [#allocation13], 49
    %v2608 = vld [vmem:[%s2607] ss:$8 sm:$0x3]
    %v2610 = vlaneseq
    %v2611 = vshrl.u32 %v2610, 7
    %v2612 = vsub.s32 0, %v2611
    %v2613 = vrot.slane %v2608, %v2612
    %v2614 = vlaneseq
    %v2615 = vshrl.u32 %v2614, 7
    %v2616 = vsub.s32 1, %v2615
    %v2617 = vrot.slane %v2608, %v2616
    %v2636 = vunpack.c.l.b16 %v2590
    %v2637 = vunpack.c.h.b16 %v2590
    %v2638 = vunpack.c.l.b16 %v2591
    %v2639 = vunpack.c.h.b16 %v2591
    %v2640 = vunpack.c.l.b16 %v2592
    %v2641 = vunpack.c.h.b16 %v2592
    %v2642 = vunpack.c.l.b16 %v2593
    %v2643 = vunpack.c.h.b16 %v2593
    %v2644 = vunpack.c.l.b16 %v2594
    %v2645 = vunpack.c.h.b16 %v2594
    %v2646 = vunpack.c.l.b16 %v2595
    %v2647 = vunpack.c.h.b16 %v2595
    %v2648 = vunpack.c.l.b16 %v2596
    %v2649 = vunpack.c.h.b16 %v2596
    %v2650 = vunpack.c.l.b16 %v2597
    %v2651 = vunpack.c.h.b16 %v2597
    %v2652 = vunpack.c.l.b16 %v2598
    %v2653 = vunpack.c.h.b16 %v2598
    %v2654 = vunpack.c.l.b16 %v2599
    %v2655 = vunpack.c.h.b16 %v2599
    %v2656 = vunpack.c.l.b16 %v2600
    %v2657 = vunpack.c.h.b16 %v2600
    %v2658 = vunpack.c.l.b16 %v2601
    %v2659 = vunpack.c.h.b16 %v2601
    %v2660 = vunpack.c.l.b16 %v2602
    %v2661 = vunpack.c.h.b16 %v2602
    %v2662 = vunpack.c.l.b16 %v2603
    %v2663 = vunpack.c.h.b16 %v2603
    %v2664 = vunpack.c.l.b16 %v2604
    %v2665 = vunpack.c.h.b16 %v2604
    %v2666 = vunpack.c.l.b16 %v2605
    %v2667 = vunpack.c.h.b16 %v2605
    %v2668 = vpack.c.b16 %v2638, %v2636
    %v2669 = vpack.c.b16 %v2639, %v2637
    %v2670 = vpack.c.b16 %v2642, %v2640
    %v2671 = vpack.c.b16 %v2643, %v2641
    %v2672 = vpack.c.b16 %v2646, %v2644
    %v2673 = vpack.c.b16 %v2647, %v2645
    %v2674 = vpack.c.b16 %v2650, %v2648
    %v2675 = vpack.c.b16 %v2651, %v2649
    %v2676 = vpack.c.b16 %v2654, %v2652
    %v2677 = vpack.c.b16 %v2655, %v2653
    %v2678 = vpack.c.b16 %v2658, %v2656
    %v2679 = vpack.c.b16 %v2659, %v2657
    %v2680 = vpack.c.b16 %v2662, %v2660
    %v2681 = vpack.c.b16 %v2663, %v2661
    %v2682 = vpack.c.b16 %v2666, %v2664
    %v2683 = vpack.c.b16 %v2667, %v2665
    %2700 = vmatprep.subr.bf16.mxu0 %v2669
    %2701 = vmatpush1.bf16.msra.mxu0 %v2668
    %2702 = vmatprep.subr.bf16.mxu0 %v2671
    %2703 = vmatpush1.bf16.msra.mxu0 %v2670
    %2704 = vmatprep.subr.bf16.mxu0 %v2673
    %2705 = vmatpush1.bf16.msra.mxu0 %v2672
    %2706 = vmatprep.subr.bf16.mxu0 %v2675
    %2707 = vmatpush1.bf16.msra.mxu0 %v2674
    %2708 = vmatprep.subr.bf16.mxu0 %v2677
    %2709 = vmatpush1.bf16.msra.mxu0 %v2676
    %2710 = vmatprep.subr.bf16.mxu0 %v2679
    %2711 = vmatpush1.bf16.msra.mxu0 %v2678
    %2712 = vmatprep.subr.bf16.mxu0 %v2681
    %2713 = vmatpush1.bf16.msra.mxu0 %v2680
    %2714 = vmatprep.subr.bf16.mxu0 %v2683
    %2715 = vmatpush1.bf16.msra.mxu0 %v2682
    %2716 = vmatprep.subr.bf16.mxu0 0
    %2717 = vmatpush1.bf16.msra.mxu0 0
    %2718 = vmatprep.subr.bf16.mxu0 0
    %2719 = vmatpush1.bf16.msra.mxu0 0
    %2720 = vmatprep.subr.bf16.mxu0 0
    %2721 = vmatpush1.bf16.msra.mxu0 0
    %2722 = vmatprep.subr.bf16.mxu0 0
    %2723 = vmatpush1.bf16.msra.mxu0 0
    %2724 = vmatprep.subr.bf16.mxu0 0
    %2725 = vmatpush1.bf16.msra.mxu0 0
    %2726 = vmatprep.subr.bf16.mxu0 0
    %2727 = vmatpush1.bf16.msra.mxu0 0
    %2728 = vmatprep.subr.bf16.mxu0 0
    %2729 = vmatpush1.bf16.msra.mxu0 0
    %2730 = vmatprep.subr.bf16.mxu0 0
    %2731 = vmatpush1.bf16.msra.mxu0 0
    %2732 = vmatprep.mubr.bf16.mxu0 0
    %2733 = vmatmul.mubr.bf16.gmra.mrb[0].mxu0 %v2606
    %v2734 = vpop.f32.mrb[0].mxu0
    %v2735 = vadd.f32 %v2613, %v2734
    %v2736 = vpop.f32.mrb[0].mxu0
    %v2737 = vadd.f32 %v2617, %v2736
    %v2738 = vpop.f32.mrb[0].mxu0
    %v2739 = vadd.f32 %v2613, %v2738
    %v2740 = vpop.f32.mrb[0].mxu0
    %v2741 = vadd.f32 %v2617, %v2740
    %2742 = vdwg.mxu0
    %v2743 = vmax.f32 %v2735, 0.0
    %v2744 = vmax.f32 %v2737, 0.0
    %v2745 = vmax.f32 %v2739, 0.0
    %v2746 = vmax.f32 %v2741, 0.0
    %v2747 = vld [vmem:[#allocation11] sm:$0xf]
    %v2748 = vld [vmem:[#allocation11 + $0x4] sm:$0xf]
    %v2749 = vld [vmem:[#allocation11 + $0x8] sm:$0xf]
    %v2750 = vld [vmem:[#allocation11 + $0xc] sm:$0xf]
    %v2751 = vld [vmem:[#allocation11 + $0x10] sm:$0xf]
    %v2752 = vld [vmem:[#allocation11 + $0x14] sm:$0xf]
    %v2753 = vld [vmem:[#allocation11 + $0x18] sm:$0xf]
    %v2754 = vld [vmem:[#allocation11 + $0x1c] sm:$0xf]
    %v2755 = vld [vmem:[#allocation11 + $0x20] sm:$0xf]
    %v2756 = vld [vmem:[#allocation11 + $0x24] sm:$0xf]
    %v2757 = vld [vmem:[#allocation11 + $0x28] sm:$0xf]
    %v2758 = vld [vmem:[#allocation11 + $0x2c] sm:$0xf]
    %v2759 = vld [vmem:[#allocation11 + $0x30] sm:$0xf]
    %v2760 = vld [vmem:[#allocation11 + $0x34] sm:$0xf]
    %v2761 = vld [vmem:[#allocation11 + $0x38] sm:$0xf]
    %v2762 = vld [vmem:[#allocation11 + $0x3c] sm:$0xf]
    %v2763 = vld [vmem:[#allocation11 + $0x40] sm:$0xf]
    %v2764 = vld [vmem:[#allocation11 + $0x44] sm:$0xf]
    %v2765 = vld [vmem:[#allocation11 + $0x48] sm:$0xf]
    %v2766 = vld [vmem:[#allocation11 + $0x4c] sm:$0xf]
    %v2767 = vld [vmem:[#allocation11 + $0x50] sm:$0xf]
    %v2768 = vld [vmem:[#allocation11 + $0x54] sm:$0xf]
    %v2769 = vld [vmem:[#allocation11 + $0x58] sm:$0xf]
    %v2770 = vld [vmem:[#allocation11 + $0x5c] sm:$0xf]
    %v2771 = vld [vmem:[#allocation11 + $0x60] sm:$0xf]
    %v2772 = vld [vmem:[#allocation11 + $0x64] sm:$0xf]
    %v2773 = vld [vmem:[#allocation11 + $0x68] sm:$0xf]
    %v2774 = vld [vmem:[#allocation11 + $0x6c] sm:$0xf]
    %v2775 = vld [vmem:[#allocation11 + $0x70] sm:$0xf]
    %v2776 = vld [vmem:[#allocation11 + $0x74] sm:$0xf]
    %v2777 = vld [vmem:[#allocation11 + $0x78] sm:$0xf]
    %v2778 = vld [vmem:[#allocation11 + $0x7c] sm:$0xf]
    %v2779 = vpack.c.bf16 %v2745, %v2743
    %v2780 = vpack.c.bf16 %v2746, %v2744
    %v2781 = vld [vmem:[#allocation13 + $0x22] ss:$0 sm:$0xff]
    %v2814 = vunpack.c.l.b16 %v2747
    %v2815 = vunpack.c.l.b16 %v2748
    %v2816 = vunpack.c.l.b16 %v2749
    %v2817 = vunpack.c.l.b16 %v2750
    %v2818 = vunpack.c.l.b16 %v2751
    %v2819 = vunpack.c.l.b16 %v2752
    %v2820 = vunpack.c.l.b16 %v2753
    %v2821 = vunpack.c.l.b16 %v2754
    %v2822 = vunpack.c.l.b16 %v2755
    %v2823 = vunpack.c.l.b16 %v2756
    %v2824 = vunpack.c.l.b16 %v2757
    %v2825 = vunpack.c.l.b16 %v2758
    %v2826 = vunpack.c.l.b16 %v2759
    %v2827 = vunpack.c.l.b16 %v2760
    %v2828 = vunpack.c.l.b16 %v2761
    %v2829 = vunpack.c.l.b16 %v2762
    %v2830 = vunpack.c.l.b16 %v2763
    %v2831 = vunpack.c.l.b16 %v2764
    %v2832 = vunpack.c.l.b16 %v2765
    %v2833 = vunpack.c.l.b16 %v2766
    %v2834 = vunpack.c.l.b16 %v2767
    %v2835 = vunpack.c.l.b16 %v2768
    %v2836 = vunpack.c.l.b16 %v2769
    %v2837 = vunpack.c.l.b16 %v2770
    %v2838 = vunpack.c.l.b16 %v2771
    %v2839 = vunpack.c.l.b16 %v2772
    %v2840 = vunpack.c.l.b16 %v2773
    %v2841 = vunpack.c.l.b16 %v2774
    %v2842 = vunpack.c.l.b16 %v2775
    %v2843 = vunpack.c.l.b16 %v2776
    %v2844 = vunpack.c.l.b16 %v2777
    %v2845 = vunpack.c.l.b16 %v2778
    %v2846 = vpack.c.b16 %v2815, %v2814
    %v2847 = vpack.c.b16 %v2817, %v2816
    %v2848 = vpack.c.b16 %v2819, %v2818
    %v2849 = vpack.c.b16 %v2821, %v2820
    %v2850 = vpack.c.b16 %v2823, %v2822
    %v2851 = vpack.c.b16 %v2825, %v2824
    %v2852 = vpack.c.b16 %v2827, %v2826
    %v2853 = vpack.c.b16 %v2829, %v2828
    %v2854 = vpack.c.b16 %v2831, %v2830
    %v2855 = vpack.c.b16 %v2833, %v2832
    %v2856 = vpack.c.b16 %v2835, %v2834
    %v2857 = vpack.c.b16 %v2837, %v2836
    %v2858 = vpack.c.b16 %v2839, %v2838
    %v2859 = vpack.c.b16 %v2841, %v2840
    %v2860 = vpack.c.b16 %v2843, %v2842
    %v2861 = vpack.c.b16 %v2845, %v2844
    %2878 = vmatprep.subr.bf16.mxu0 0
    %2879 = vmatpush1.bf16.msra.mxu0 %v2846
    %2880 = vmatprep.subr.bf16.mxu0 0
    %2881 = vmatpush1.bf16.msra.mxu0 %v2847
    %2882 = vmatprep.subr.bf16.mxu0 0
    %2883 = vmatpush1.bf16.msra.mxu0 %v2848
    %2884 = vmatprep.subr.bf16.mxu0 0
    %2885 = vmatpush1.bf16.msra.mxu0 %v2849
    %2886 = vmatprep.subr.bf16.mxu0 0
    %2887 = vmatpush1.bf16.msra.mxu0 %v2850
    %2888 = vmatprep.subr.bf16.mxu0 0
    %2889 = vmatpush1.bf16.msra.mxu0 %v2851
    %2890 = vmatprep.subr.bf16.mxu0 0
    %2891 = vmatpush1.bf16.msra.mxu0 %v2852
    %2892 = vmatprep.subr.bf16.mxu0 0
    %2893 = vmatpush1.bf16.msra.mxu0 %v2853
    %2894 = vmatprep.subr.bf16.mxu0 0
    %2895 = vmatpush1.bf16.msra.mxu0 %v2854
    %2896 = vmatprep.subr.bf16.mxu0 0
    %2897 = vmatpush1.bf16.msra.mxu0 %v2855
    %2898 = vmatprep.subr.bf16.mxu0 0
    %2899 = vmatpush1.bf16.msra.mxu0 %v2856
    %2900 = vmatprep.subr.bf16.mxu0 0
    %2901 = vmatpush1.bf16.msra.mxu0 %v2857
    %2902 = vmatprep.subr.bf16.mxu0 0
    %2903 = vmatpush1.bf16.msra.mxu0 %v2858
    %2904 = vmatprep.subr.bf16.mxu0 0
    %2905 = vmatpush1.bf16.msra.mxu0 %v2859
    %2906 = vmatprep.subr.bf16.mxu0 0
    %2907 = vmatpush1.bf16.msra.mxu0 %v2860
    %2908 = vmatprep.subr.bf16.mxu0 0
    %2909 = vmatpush1.bf16.msra.mxu0 %v2861
    %2910 = vmatprep.mubr.bf16.mxu0 %v2780
    %2911 = vmatmul.mubr.bf16.gmra.mrb[0].mxu0 %v2779
    %v2912 = vpop.f32.mrb[0].mxu0
    %v2913 = vadd.f32 %v2781, %v2912
    %v2914 = vpop.f32.mrb[0].mxu0
    %v2915 = vpop.f32.mrb[0].mxu0
    %v2916 = vadd.f32 %v2781, %v2915
    %v2917 = vpop.f32.mrb[0].mxu0
    %2918 = vdwg.mxu0
    %v2919 = vadd.f32 %v2588, %v2913
    %v2920 = vadd.f32 %v2589, %v2916
    %v2921 = vld [vmem:[#allocation13 + $0x27] ss:$0 sm:$0xff]
    %v2922 = vld [vmem:[#allocation13 + $0x30] ss:$0 sm:$0xff]
    %2923 = vadd.xlane.f32.xlu0 %v2919
    %v2924 = vpop.xlane.xlu0 %2923
    %2925 = vadd.xlane.f32.xlu0 %v2920
    %v2926 = vpop.xlane.xlu0 %2925
    %v2927 = vmul.f32 %v2924, %v805
    %v2928 = vmul.f32 %v2926, %v805
    %v2929 = vsub.f32 %v2919, %v2927
    %v2930 = vsub.f32 %v2920, %v2928
    %v2931 = vmul.f32 %v2929, %v2929
    %v2932 = vmul.f32 %v2930, %v2930
    %2933 = vadd.xlane.f32.xlu0 %v2931
    %v2934 = vpop.xlane.xlu0 %2933
    %2935 = vadd.xlane.f32.xlu0 %v2932
    %v2936 = vpop.xlane.xlu0 %2935
    %v2937 = vmul.f32 %v2934, %v805
    %v2938 = vmul.f32 %v2936, %v805
    %v2939 = vadd.f32 %v2937, 1e-05
    %v2940 = vadd.f32 %v2938, 1e-05
    %v2941 = vrsqrt.pop %v2939
    %v2942 = vrsqrt.pop %v2940
    %v2943 = vmul.f32 %v2929, %v2941
    %v2944 = vmul.f32 %v2930, %v2942
    %v2945 = vmul.f32 %v2943, %v2921
    %v2946 = vmul.f32 %v2944, %v2921
    %v2947 = vadd.f32 %v2945, %v2922
    %v2948 = vadd.f32 %v2946, %v2922
    %2949 = vst [vmem:[#allocation14] sm:$0xff] %v2947
    %2950 = vst [vmem:[#allocation14 + $0x8] sm:$0xff] %v2948
    // Predicated region
    $region58: #{encoder_decoder_model.1} parent=1 // pred_check
      _
    $region59: #{encoder_decoder_model.1} parent=1 // pred_check_branch
      %2952 = sbr.rel (0) target = $region61
    $region60: #{encoder_decoder_model.1} parent=1 // pred_region
      %s2954 = ssub.s32 256, 256
      %2955 = vsyncadd [#allocation4], %s2954
      %s2956 = sshll.u32 [#allocation14], 4
      %s2957 = int_to_ptr.vmem [resolvable:$true] %s2956
      %2962 = dma.vmem_to_hbm [thread:$0]  %s2957, 256, %s7, [#allocation4], 128, 128, 8
    $region61: #{encoder_decoder_model.1} parent=1 // pred_fallthru
      _
    // Predicated region
    $region62: #{encoder_decoder_model.1} parent=1 // pred_check
      _
    $region63: #{encoder_decoder_model.1} parent=1 // pred_check_branch
      %2964 = sbr.rel (0) target = $region65
    $region64: #{encoder_decoder_model.1} parent=1 // pred_region
      %2965 = dma.done [#allocation4], 256
    $region65: #{encoder_decoder_model.1} parent=1 // pred_fallthru
      _
    %2966 = vsyncpa [#allocation3], 1
    %2967 = vsyncpa [#allocation6], 1
    %2968 = vsyncpa [#allocation9], 1
    %2969 = vsyncpa [#allocation12], 1
    %2970 = vsyncpa [#allocation4], 1

</llo_original>
